<compile_context>
chip_gen: v7x
topology: tpu7x:2x2x1
jax: 0.10.0
libtpu: 0.0.40
codegen_flags: <defaults>
</compile_context>

<pallas_src>
import functools

import jax
import jax.numpy as jnp
from jax.experimental import pallas as pl
from jax.experimental.pallas import tpu as pltpu


# --------------------------------------------------------------------------
# Kernels
# --------------------------------------------------------------------------

def _fused_kernel(x_ref, rep_ref, o_ref, *, precision):
    """x_ref: (TM, t*W); rep_ref: (t*W, t*s*W*s) 0/1 map; o_ref: (TM, t*s*W*s).

    One MXU matmul produces the full (already final-layout) output tile, which
    is written with a single dense, lane-aligned store."""
    y = jax.lax.dot_general(
        x_ref[...].astype(rep_ref.dtype), rep_ref[...],
        dimension_numbers=(((1,), (0,)), ((), ())),
        precision=precision,
        preferred_element_type=jnp.float32,
    )
    o_ref[...] = y.astype(o_ref.dtype)


def _split_kernel(x_ref, rep_ref, o_ref, *, scale, width, chunk, precision):
    """x_ref: (TM, W); rep_ref: (chunk, chunk*s) width-repeat 0/1 block;
    o_ref: (TM, s*W*s). Per-chunk width repeat on the MXU, height repeat via s
    contiguous slice stores (no second matmul)."""
    s, w, wc = scale, width, chunk
    ws = w * s
    for c in range(w // wc):
        xc = x_ref[:, c * wc:(c + 1) * wc].astype(rep_ref.dtype)
        y = jax.lax.dot_general(
            xc, rep_ref[...],
            dimension_numbers=(((1,), (0,)), ((), ())),
            precision=precision,
            preferred_element_type=jnp.float32,
        ).astype(o_ref.dtype)
        base = c * wc * s
        for r in range(s):
            o_ref[:, r * ws + base: r * ws + base + wc * s] = y


# --------------------------------------------------------------------------
# Wrapper helpers
# --------------------------------------------------------------------------

def _round_up(a, b):
    return -(-a // b) * b


def _sublane_granularity(dtype):
    itemsize = jnp.dtype(dtype).itemsize
    return max(8, (4 // max(itemsize, 1)) * 8)   # 8 f32, 16 bf16/f16, 32 int8


def _vmem_capacity_bytes():
    try:
        return int(pltpu.get_tpu_info().vmem_capacity_bytes)
    except Exception:
        return 64 * 1024 * 1024   # conservative (v7x-class) default


def _pick_group(m, w, k, max_contraction=128, max_rep_bytes=2 << 20):
    """Smallest t with t | m, t*w <= max_contraction, (t*k) % 128 == 0 and a
    bounded repeat matrix -> lane-dense fused path. None if no such t."""
    upper = max_contraction // w + 1 if w <= max_contraction else 1
    for t in range(1, upper):
        if m % t or (t * k) % 128:
            continue
        if (t * w) * (t * k) * 4 > max_rep_bytes:
            continue
        return t
    return None


def _pick_row_tile(m2, bytes_per_row, gran, block_budget, min_steps=4):
    """Row tile from the VMEM budget (decoupled from divisibility); keep >= 4
    grid steps when possible so both v7x TensorCores stay double-buffered."""
    rows = max(gran, (block_budget // max(bytes_per_row, 1)) // gran * gran)
    rows = min(rows, _round_up(m2, gran))
    if pl.cdiv(m2, rows) < min_steps:
        rows = max(gran, _round_up(pl.cdiv(m2, min_steps), gran))
    return rows


# --------------------------------------------------------------------------
# Public entry point
# --------------------------------------------------------------------------

def upsample_nearest(x, scale_factor=3):
    """Nearest-neighbor upsample of an NCHW tensor by an integer scale factor."""
    if x.ndim != 4:
        raise ValueError("expected an NCHW input")
    s = int(scale_factor)
    n, c, h, w = x.shape
    hs, wo = h * s, w * s

    if not jnp.issubdtype(x.dtype, jnp.floating):
        # TODO(synk): integer dtypes bypass the MXU kernel (v7x MXU has no int
        # mode and f32 accumulation loses bits past 24); served by XLA repeat.
        return jnp.repeat(jnp.repeat(x, s, axis=2), s, axis=3)

    m = n * c * h            # input image rows
    k = s * wo               # flattened output columns per input image row
    itemsize = jnp.dtype(x.dtype).itemsize
    gran = _sublane_granularity(x.dtype)

    compute_dtype = jnp.bfloat16 if x.dtype == jnp.bfloat16 else jnp.float32
    precision = (jax.lax.Precision.HIGHEST if compute_dtype == jnp.float32
                 else jax.lax.Precision.DEFAULT)

    # Generation-aware VMEM sizing.
    vmem_cap = _vmem_capacity_bytes()
    if vmem_cap >= 96 * (1 << 20):       # v5e / v6e class (128 MiB VMEM)
        vmem_limit = 80 * (1 << 20)
        block_budget = 14 * (1 << 20)
    else:                                # v7x class (64 MiB VMEM per TC)
        vmem_limit = 48 * (1 << 20)
        block_budget = 9 * (1 << 20)

    t = _pick_group(m, w, k)
    if t is not None:
        # Fused, lane-dense path: rows of t image rows each.
        cols_in, cols_out = t * w, t * k
        m2 = m // t
        uu = jnp.arange(cols_in)
        vv = jnp.arange(cols_out)
        row_u, col_u = uu // w, uu % w
        row_v = vv // k
        col_v = (vv % wo) // s
        rep = ((row_u[:, None] == row_v[None, :])
               & (col_u[:, None] == col_v[None, :])).astype(compute_dtype)
        kernel = functools.partial(_fused_kernel, precision=precision)
        inter_bytes = cols_out * 4
    else:
        # Split path (large W): chunked width matmul + s slice stores.
        wc = 256 if w % 256 == 0 else (128 if w % 128 == 0 else w)
        cols_in, cols_out = w, k
        m2 = m
        jj = jnp.arange(wc * s)
        rep = (jj[None, :] // s == jnp.arange(wc)[:, None]).astype(compute_dtype)
        kernel = functools.partial(_split_kernel, scale=s, width=w, chunk=wc,
                                   precision=precision)
        inter_bytes = wc * s * 4

    x2 = x.reshape(m2, cols_in)   # free row-major reshape
    bytes_per_row = (cols_in + cols_out) * itemsize + inter_bytes
    tm = _pick_row_tile(m2, bytes_per_row, gran, block_budget)
    grid = (pl.cdiv(m2, tm),)     # ragged last block is masked -> no pad/slice

    out2 = pl.pallas_call(
        kernel,
        out_shape=jax.ShapeDtypeStruct((m2, cols_out), x.dtype),
        grid=grid,
        in_specs=[
            pl.BlockSpec((tm, cols_in), lambda i: (i, 0)),
            pl.BlockSpec(rep.shape, lambda i: (0, 0)),  # constant block: DMA'd once
        ],
        out_specs=pl.BlockSpec((tm, cols_out), lambda i: (i, 0)),
        compiler_params=pltpu.CompilerParams(
            dimension_semantics=("parallel",),
            vmem_limit_bytes=vmem_limit,
        ),
    )(x2, rep)

    # Row-major (m2, cols_out) is exactly (N, C, H*s, W*s): free HBM reshape.
    return out2.reshape(n, c, hs, wo)


class Upsample:
    """Mirror of the PyTorch module: non-learnable nearest upsampling."""

    def __init__(self, scale_factor=3, mode="nearest"):
        # TODO(synk): only mode='nearest' with an integer scale_factor is
        # implemented; other interpolate modes / fractional scales are not.
        if mode != "nearest":
            raise NotImplementedError("only mode='nearest' is supported")
        if int(scale_factor) != scale_factor:
            raise NotImplementedError("only integer scale factors are supported")
        self.scale_factor = int(scale_factor)
        self.mode = mode

    def __call__(self, x):
        return upsample_nearest(x, scale_factor=self.scale_factor)


def upsample_nearest_ref(x, scale_factor=3):
    # Pure-JAX reference matching torch.nn.functional.interpolate(mode='nearest').
    s = int(scale_factor)
    return jnp.repeat(jnp.repeat(x, s, axis=2), s, axis=3)


if __name__ == "__main__":
    key = jax.random.PRNGKey(0)
    k1, k2 = jax.random.split(key)

    model = Upsample(scale_factor=3, mode="nearest")

    # Main check: NCHW image input (fused, lane-dense grouped path).
    x = jax.random.normal(k1, (2, 4, 16, 16), dtype=jnp.float32)
    out = jax.block_until_ready(model(x))
    ref = upsample_nearest_ref(x, 3)
    assert out.shape == (2, 4, 48, 48), out.shape
    assert out.dtype == x.dtype, out.dtype
    assert jnp.allclose(out, ref, rtol=1e-6, atol=1e-6), "f32 mismatch vs reference"

    # bf16 exercises the 16-row sublane granularity + DEFAULT-precision path.
    xb = x.astype(jnp.bfloat16)
    outb = jax.block_until_ready(model(xb))
    assert bool(jnp.array_equal(outb, upsample_nearest_ref(xb, 3))), "bf16 mismatch"

    # Wide-W input exercises the chunked split path (width matmul + s stores).
    xw = jax.random.normal(k2, (1, 2, 4, 384), dtype=jnp.float32)
    outw = jax.block_until_ready(model(xw))
    assert outw.shape == (1, 2, 12, 1152), outw.shape
    assert jnp.allclose(outw, upsample_nearest_ref(xw, 3), rtol=1e-6, atol=1e-6), \
        "wide-W mismatch vs reference"

    print("KERNEL_OK")
</pallas_src>

<mosaic_0001>
module attributes {stable_mosaic.version = 11 : i64} {
  func.func @_fused_kernel(%arg0: i32, %arg1: memref<8x128xf32, #tpu.memory_space<vmem>>, %arg2: memref<128x1152xf32, #tpu.memory_space<vmem>>, %arg3: memref<8x1152xf32, #tpu.memory_space<vmem>>) attributes {dimension_semantics = [#tpu.dimension_semantics<parallel>], iteration_bounds = array<i64: 2>, scalar_prefetch = 0 : i64, scratch_operands = 0 : i64, tpu.core_type = #tpu.core_type<tc>, window_params = [{transform_indices = @transform_0, window_bounds = array<i64: 8, 128>}, {pipeline_mode = #tpu.pipeline_mode<synchronous>, transform_indices = @transform_1, window_bounds = array<i64: 128, 1152>}, {transform_indices = @transform_2, window_bounds = array<i64: 8, 1152>}]} {
    %c0 = arith.constant 0 : index
    %c0_0 = arith.constant 0 : index
    %0 = vector.load %arg1[%c0, %c0_0] : memref<8x128xf32, #tpu.memory_space<vmem>>, vector<8x128xf32>
    %c0_1 = arith.constant 0 : index
    %c0_2 = arith.constant 0 : index
    %1 = vector.load %arg2[%c0_1, %c0_2] : memref<128x1152xf32, #tpu.memory_space<vmem>>, vector<128x1152xf32>
    %cst = arith.constant dense<0.000000e+00> : vector<8x1152xf32>
    %2 = tpu.matmul %0, %1, %cst {dimension_numbers = #tpu.dot_dimension_numbers<[1], [0], [0], [1], [0, 0, 1, 1], [], []>, precision = #tpu.contract_precision<fp32>} : vector<8x128xf32>, vector<128x1152xf32>, vector<8x1152xf32> -> vector<8x1152xf32>
    %c0_3 = arith.constant 0 : index
    %c0_4 = arith.constant 0 : index
    %3 = vector.load %arg3[%c0_3, %c0_4] : memref<8x1152xf32, #tpu.memory_space<vmem>>, vector<8x1152xf32>
    tpu.vector_store %arg3[%c0_3, %c0_4], %2 {strides = array<i32>} : memref<8x1152xf32, #tpu.memory_space<vmem>>, vector<8x1152xf32>,
    return
  }
  func.func @transform_0(%arg0: i32) -> (i32, i32) {
    %c0_i32 = arith.constant 0 : i32
    %c0_i32_0 = arith.constant 0 : i32
    return %arg0, %c0_i32 : i32, i32
  }
  func.func @transform_1(%arg0: i32) -> (i32, i32) {
    %c0_i32 = arith.constant 0 : i32
    %c0_i32_0 = arith.constant 0 : i32
    %c0_i32_1 = arith.constant 0 : i32
    return %c0_i32, %c0_i32_0 : i32, i32
  }
  func.func @transform_2(%arg0: i32) -> (i32, i32) {
    %c0_i32 = arith.constant 0 : i32
    %c0_i32_0 = arith.constant 0 : i32
    return %arg0, %c0_i32 : i32, i32
  }
}

</mosaic_0001>

<llo_original>
// kernel: tpu_custom_call.1
$region0: #{tpu_custom_call.1}
  #allocation0 [shape = 'u32[]', space=smem, size = 0x4, offset = 0x4, fixed_abs, tag = 'smem constant byte address 0x4 - core index']
  #allocation1 [shape = 'u32[144,128]{1,0:T(1,128)}', space=vmem, size = 0x12000, scoped, tag = 'internal scratch']
  %s0 = inlined_call_operand.hbm [shape: f32[16,128], index: 0, kind: input, shape index: {}]
  %s1 = inlined_call_operand.hbm [shape: f32[128,1152], index: 1, kind: input, shape index: {}]
  %s2 = inlined_call_operand.hbm [shape: f32[16,1152], index: 2, kind: output, shape index: {}]
  %s3 = sld [smem:[#allocation0]]
  $region49: #{tpu_custom_call.1} parent=0
    _
  %s5 = ssub.s32 1, %s3
  %s6 = scalar_select 0, %s5, %s3
  $region1: #{tpu_custom_call.1} parent=0
    #allocation2 [shape = 'u8[8192]{0}', space=vmem, size = 0x2000, scoped, tag = 'input window, operand 0']
    #allocation3 [shape = 's32[2]{0}', space=sflag, size = 0x8, scoped, tag = 'scoped memory for tpu_custom_call.1']
    #allocation4 [shape = 's32[2]{0}', space=sflag, size = 0x8, scoped, tag = 'scoped memory for tpu_custom_call.1']
    #allocation5 [shape = 'u8[589824]{0}', space=vmem, size = 0x90000, scoped, tag = 'input window, operand 1, single buffered']
    #allocation6 [shape = 's32[1]{0}', space=sflag, size = 0x4, scoped, tag = 'scoped memory for tpu_custom_call.1']
    #allocation7 [shape = 'u8[73728]{0}', space=vmem, size = 0x12000, scoped, tag = 'output window, operand 0']
    %7 = vsyncpa [#allocation3], 0
    %s8 = scalar_lea.sflag [#allocation3], 1
    %9 = vsyncpa %s8, 0
    %10 = vsyncpa [#allocation6], 0
    %11 = vsyncpa [#allocation4], 0
    %s12 = scalar_lea.sflag [#allocation4], 1
    %13 = vsyncpa %s12, 0
    loop: start=0, step=1, limit=4
    $region2: #{tpu_custom_call.1} parent=1 // loop_pre_header
      _
    $region3: #{tpu_custom_call.1} parent=1 // loop_header
      %s15 = sphi 0, %s19
      %p16 = scmp.ge.s32.totalorder %s15, 4
      %s25 = sphi 0, %s27
      %s28 = sphi 0, %s25
      %s29 = sphi 0, %s28
      %s45 = sphi 0, %s29
      %s49 = sphi 0, %s49
      %s51 = sphi 0, %s49
      %s52 = sphi 0, %s51
      %s66 = sphi 0, %s52
      %s72 = sphi 0, %s74
      %s75 = sphi 0, %s72
      %s76 = sphi 0, %s75
      %s92 = sphi 0, %s76
    $region4: #{tpu_custom_call.1} parent=1 // loop_header_branch
      %18 = sbr.rel (%p16) target = $region8
    $region5: #{tpu_custom_call.1} parent=1 // loop_body
      %s20 = ssub.s32 %s15, 1
      %s21 = ssub.s32 %s15, 2
      %s22 = sadd.s32 %s15, 1
      %s23 = ssub.s32 %s15, %s22
      %p24 = scmp.eq.s32.totalorder %s23, 0
      %s26 = sadd.s32 %s25, 1
      %s27 = scalar_select %p24, %s25, %s26
      %p30 = pneg %p24
      %p31 = scmp.eq.s32.totalorder %s15, 1
      %p32 = por %p30, %p31
      %p33 = scmp.ne.s32.totalorder %s25, %s28
      %p34 = scmp.eq.s32.totalorder %s15, 0
      %p35 = por %p33, %p34
      %p36 = scmp.ne.s32.totalorder %s25, %s28
      %p37 = scmp.eq.s32.totalorder %s20, 1
      %p38 = por %p36, %p37
      %p39 = scmp.ne.s32.totalorder %s28, %s29
      %p40 = scmp.eq.s32.totalorder %s20, 0
      %p41 = por %p39, %p40
      %p42 = scmp.ne.s32.totalorder %s28, %s29
      %p43 = scmp.eq.s32.totalorder %s21, 1
      %p44 = por %p42, %p43
      %p46 = scmp.ne.s32.totalorder %s29, %s45
      %p47 = scmp.eq.s32.totalorder %s21, 0
      %p48 = por %p46, %p47
      %s50 = sadd.s32 %s49, 1
      %p53 = scmp.eq.s32.totalorder %s15, 1
      %p54 = scmp.ne.s32.totalorder %s49, %s51
      %p55 = scmp.eq.s32.totalorder %s15, 0
      %p56 = por %p54, %p55
      %p57 = scmp.ne.s32.totalorder %s49, %s51
      %p58 = scmp.eq.s32.totalorder %s20, 1
      %p59 = por %p57, %p58
      %p60 = scmp.ne.s32.totalorder %s51, %s52
      %p61 = scmp.eq.s32.totalorder %s20, 0
      %p62 = por %p60, %p61
      %p63 = scmp.ne.s32.totalorder %s51, %s52
      %p64 = scmp.eq.s32.totalorder %s21, 1
      %p65 = por %p63, %p64
      %p67 = scmp.ne.s32.totalorder %s52, %s66
      %p68 = scmp.eq.s32.totalorder %s21, 0
      %p69 = por %p67, %p68
      %s70 = ssub.s32 %s15, %s22
      %p71 = scmp.eq.s32.totalorder %s70, 0
      %s73 = sadd.s32 %s72, 1
      %s74 = scalar_select %p71, %s72, %s73
      %p77 = pneg %p71
      %p78 = scmp.eq.s32.totalorder %s15, 1
      %p79 = por %p77, %p78
      %p80 = scmp.ne.s32.totalorder %s72, %s75
      %p81 = scmp.eq.s32.totalorder %s15, 0
      %p82 = por %p80, %p81
      %p83 = scmp.ne.s32.totalorder %s72, %s75
      %p84 = scmp.eq.s32.totalorder %s20, 1
      %p85 = por %p83, %p84
      %p86 = scmp.ne.s32.totalorder %s75, %s76
      %p87 = scmp.eq.s32.totalorder %s20, 0
      %p88 = por %p86, %p87
      %p89 = scmp.ne.s32.totalorder %s75, %s76
      %p90 = scmp.eq.s32.totalorder %s21, 1
      %p91 = por %p89, %p90
      %p93 = scmp.ne.s32.totalorder %s76, %s92
      %p94 = scmp.eq.s32.totalorder %s21, 0
      %p95 = por %p93, %p94
      %p96 = scmp.le.s32.totalorder 1, %s15
      %p97 = scmp.lt.s32.totalorder %s15, 3
      %p98 = pnand %p96, %p97
      %p99 = pneg %p98
      // Predicated region
      $region9: #{tpu_custom_call.1} parent=5 // pred_check
        _
      $region10: #{tpu_custom_call.1} parent=5 // pred_check_branch
        %101 = sbr.rel (%p98) target = $region12
      $region11: #{tpu_custom_call.1} parent=5 // pred_region
        %s102 = ssub.s32 %s15, 1
        // Predicated region
        $region13: #{tpu_custom_call.1} parent=11 // pred_check
          %p103 = pneg %p62
        $region14: #{tpu_custom_call.1} parent=11 // pred_check_branch
          %105 = sbr.rel (%p103) target = $region16
        $region15: #{tpu_custom_call.1} parent=11 // pred_region
          %s107 = ssub.s32 18432, 18432
          %108 = vsyncadd [#allocation6], %s107
          %s109 = sshll.u32 [#allocation5], 4
          %s110 = int_to_ptr.vmem [resolvable:$true] %s109
          %115 = dma.hbm_to_vmem [thread:$0]  %s1, 18432, %s110, [#allocation6], 1152, 1152, 72
        $region16: #{tpu_custom_call.1} parent=11 // pred_fallthru
          _
      $region12: #{tpu_custom_call.1} parent=5 // pred_fallthru
        _
      %p116 = scmp.lt.s32.totalorder %s15, 2
      // Predicated region
      $region17: #{tpu_custom_call.1} parent=5 // pred_check
        %p117 = pneg %p116
      $region18: #{tpu_custom_call.1} parent=5 // pred_check_branch
        %119 = sbr.rel (%p117) target = $region20
      $region19: #{tpu_custom_call.1} parent=5 // pred_region
        // Predicated region
        $region21: #{tpu_custom_call.1} parent=19 // pred_check
          %p120 = pneg %p35
        $region22: #{tpu_custom_call.1} parent=19 // pred_check_branch
          %122 = sbr.rel (%p120) target = $region24
        $region23: #{tpu_custom_call.1} parent=19 // pred_region
          %s123 = sand.u32 %s25, 1
          %s124 = scalar_lea.sflag [#allocation3], %s123
          %s125 = sand.u32 %s25, 1
          %s126 = smul.addr %s125, 8
          %s127 = scalar_lea.vmem [#allocation2], %s126
          %s129 = ssub.s32 128, 128
          %130 = vsyncadd %s124, %s129
          %s131 = smul.addr %s15, 128
          %s132 = scalar_lea.hbm %s0, %s131
          %s134 = sshll.u32 %s127, 4
          %s135 = int_to_ptr.vmem [resolvable:$true] %s134
          %137 = dma.hbm_to_vmem [thread:$0]  %s132, 128, %s135, %s124
        $region24: #{tpu_custom_call.1} parent=19 // pred_fallthru
          _
      $region20: #{tpu_custom_call.1} parent=5 // pred_fallthru
        _
      %p138 = scmp.le.s32.totalorder 1, %s15
      %p139 = scmp.lt.s32.totalorder %s15, 3
      %p140 = pnand %p138, %p139
      %p141 = pneg %p140
      // Predicated region
      $region25: #{tpu_custom_call.1} parent=5 // pred_check
        _
      $region26: #{tpu_custom_call.1} parent=5 // pred_check_branch
        %143 = sbr.rel (%p140) target = $region28
      $region27: #{tpu_custom_call.1} parent=5 // pred_region
        %s144 = ssub.s32 %s15, 1
        %s145 = sand.u32 %s28, 1
        %s146 = scalar_lea.sflag [#allocation3], %s145
        %s147 = sand.u32 %s28, 1
        %s148 = smul.addr %s147, 8
        %s149 = scalar_lea.vmem [#allocation2], %s148
        // Predicated region
        $region29: #{tpu_custom_call.1} parent=27 // pred_check
          %p150 = pneg %p41
        $region30: #{tpu_custom_call.1} parent=27 // pred_check_branch
          %152 = sbr.rel (%p150) target = $region32
        $region31: #{tpu_custom_call.1} parent=27 // pred_region
          %153 = dma.done %s146, 128
        $region32: #{tpu_custom_call.1} parent=27 // pred_fallthru
          _
        // Predicated region
        $region33: #{tpu_custom_call.1} parent=27 // pred_check
          %p154 = pneg %p62
        $region34: #{tpu_custom_call.1} parent=27 // pred_check_branch
          %156 = sbr.rel (%p154) target = $region36
        $region35: #{tpu_custom_call.1} parent=27 // pred_region
          %157 = dma.done [#allocation6], 18432
        $region36: #{tpu_custom_call.1} parent=27 // pred_fallthru
          _
        %s158 = sand.u32 %s28, 1
        %s159 = scalar_lea.sflag [#allocation3], %s158
        %s160 = sand.u32 %s28, 1
        %s161 = smul.addr %s160, 8
        %s162 = scalar_lea.vmem [#allocation2], %s161
        %p163 = pneg %p41
        %p164 = pneg %p38
        %p165 = pneg %p62
        %p166 = pneg %p59
        %p167 = pneg %p88
        %p168 = pneg %p85
        %s169 = sand.u32 %s75, 1
        %s170 = scalar_lea.sflag [#allocation4], %s169
        %s171 = sand.u32 %s75, 1
        %s172 = smul.addr %s171, 72
        %s173 = scalar_lea.vmem [#allocation7], %s172
        %v174 = vld [vmem:[%s149] sm:$0xff]
        %v175 = vld [vmem:[#allocation5] sm:$0xff]
        %v176 = vld [vmem:[#allocation5 + $0x8] sm:$0xff]
        %v177 = vld [vmem:[#allocation5 + $0x10] sm:$0xff]
        %v178 = vld [vmem:[#allocation5 + $0x18] sm:$0xff]
        %v179 = vld [vmem:[#allocation5 + $0x20] sm:$0xff]
        %v180 = vld [vmem:[#allocation5 + $0x28] sm:$0xff]
        %v181 = vld [vmem:[#allocation5 + $0x30] sm:$0xff]
        %v182 = vld [vmem:[#allocation5 + $0x38] sm:$0xff]
        %v183 = vld [vmem:[#allocation5 + $0x40] sm:$0xff]
        %v184 = vld [vmem:[#allocation5 + $0x48] sm:$0xff]
        %v185 = vld [vmem:[#allocation5 + $0x50] sm:$0xff]
        %v186 = vld [vmem:[#allocation5 + $0x58] sm:$0xff]
        %v187 = vld [vmem:[#allocation5 + $0x60] sm:$0xff]
        %v188 = vld [vmem:[#allocation5 + $0x68] sm:$0xff]
        %v189 = vld [vmem:[#allocation5 + $0x70] sm:$0xff]
        %v190 = vld [vmem:[#allocation5 + $0x78] sm:$0xff]
        %v191 = vld [vmem:[#allocation5 + $0x80] sm:$0xff]
        %v192 = vld [vmem:[#allocation5 + $0x88] sm:$0xff]
        %v193 = vld [vmem:[#allocation5 + $0x90] sm:$0xff]
        %v194 = vld [vmem:[#allocation5 + $0x98] sm:$0xff]
        %v195 = vld [vmem:[#allocation5 + $0xa0] sm:$0xff]
        %v196 = vld [vmem:[#allocation5 + $0xa8] sm:$0xff]
        %v197 = vld [vmem:[#allocation5 + $0xb0] sm:$0xff]
        %v198 = vld [vmem:[#allocation5 + $0xb8] sm:$0xff]
        %v199 = vld [vmem:[#allocation5 + $0xc0] sm:$0xff]
        %v200 = vld [vmem:[#allocation5 + $0xc8] sm:$0xff]
        %v201 = vld [vmem:[#allocation5 + $0xd0] sm:$0xff]
        %v202 = vld [vmem:[#allocation5 + $0xd8] sm:$0xff]
        %v203 = vld [vmem:[#allocation5 + $0xe0] sm:$0xff]
        %v204 = vld [vmem:[#allocation5 + $0xe8] sm:$0xff]
        %v205 = vld [vmem:[#allocation5 + $0xf0] sm:$0xff]
        %v206 = vld [vmem:[#allocation5 + $0xf8] sm:$0xff]
        %v207 = vld [vmem:[#allocation5 + $0x100] sm:$0xff]
        %v208 = vld [vmem:[#allocation5 + $0x108] sm:$0xff]
        %v209 = vld [vmem:[#allocation5 + $0x110] sm:$0xff]
        %v210 = vld [vmem:[#allocation5 + $0x118] sm:$0xff]
        %v211 = vld [vmem:[#allocation5 + $0x120] sm:$0xff]
        %v212 = vld [vmem:[#allocation5 + $0x128] sm:$0xff]
        %v213 = vld [vmem:[#allocation5 + $0x130] sm:$0xff]
        %v214 = vld [vmem:[#allocation5 + $0x138] sm:$0xff]
        %v215 = vld [vmem:[#allocation5 + $0x140] sm:$0xff]
        %v216 = vld [vmem:[#allocation5 + $0x148] sm:$0xff]
        %v217 = vld [vmem:[#allocation5 + $0x150] sm:$0xff]
        %v218 = vld [vmem:[#allocation5 + $0x158] sm:$0xff]
        %v219 = vld [vmem:[#allocation5 + $0x160] sm:$0xff]
        %v220 = vld [vmem:[#allocation5 + $0x168] sm:$0xff]
        %v221 = vld [vmem:[#allocation5 + $0x170] sm:$0xff]
        %v222 = vld [vmem:[#allocation5 + $0x178] sm:$0xff]
        %v223 = vld [vmem:[#allocation5 + $0x180] sm:$0xff]
        %v224 = vld [vmem:[#allocation5 + $0x188] sm:$0xff]
        %v225 = vld [vmem:[#allocation5 + $0x190] sm:$0xff]
        %v226 = vld [vmem:[#allocation5 + $0x198] sm:$0xff]
        %v227 = vld [vmem:[#allocation5 + $0x1a0] sm:$0xff]
        %v228 = vld [vmem:[#allocation5 + $0x1a8] sm:$0xff]
        %v229 = vld [vmem:[#allocation5 + $0x1b0] sm:$0xff]
        %v230 = vld [vmem:[#allocation5 + $0x1b8] sm:$0xff]
        %v231 = vld [vmem:[#allocation5 + $0x1c0] sm:$0xff]
        %v232 = vld [vmem:[#allocation5 + $0x1c8] sm:$0xff]
        %v233 = vld [vmem:[#allocation5 + $0x1d0] sm:$0xff]
        %v234 = vld [vmem:[#allocation5 + $0x1d8] sm:$0xff]
        %v235 = vld [vmem:[#allocation5 + $0x1e0] sm:$0xff]
        %v236 = vld [vmem:[#allocation5 + $0x1e8] sm:$0xff]
        %v237 = vld [vmem:[#allocation5 + $0x1f0] sm:$0xff]
        %v238 = vld [vmem:[#allocation5 + $0x1f8] sm:$0xff]
        %v239 = vld [vmem:[#allocation5 + $0x200] sm:$0xff]
        %v240 = vld [vmem:[#allocation5 + $0x208] sm:$0xff]
        %v241 = vld [vmem:[#allocation5 + $0x210] sm:$0xff]
        %v242 = vld [vmem:[#allocation5 + $0x218] sm:$0xff]
        %v243 = vld [vmem:[#allocation5 + $0x220] sm:$0xff]
        %v244 = vld [vmem:[#allocation5 + $0x228] sm:$0xff]
        %v245 = vld [vmem:[#allocation5 + $0x230] sm:$0xff]
        %v246 = vld [vmem:[#allocation5 + $0x238] sm:$0xff]
        %v247 = vld [vmem:[#allocation5 + $0x240] sm:$0xff]
        %v248 = vld [vmem:[#allocation5 + $0x248] sm:$0xff]
        %v249 = vld [vmem:[#allocation5 + $0x250] sm:$0xff]
        %v250 = vld [vmem:[#allocation5 + $0x258] sm:$0xff]
        %v251 = vld [vmem:[#allocation5 + $0x260] sm:$0xff]
        %v252 = vld [vmem:[#allocation5 + $0x268] sm:$0xff]
        %v253 = vld [vmem:[#allocation5 + $0x270] sm:$0xff]
        %v254 = vld [vmem:[#allocation5 + $0x278] sm:$0xff]
        %v255 = vld [vmem:[#allocation5 + $0x280] sm:$0xff]
        %v256 = vld [vmem:[#allocation5 + $0x288] sm:$0xff]
        %v257 = vld [vmem:[#allocation5 + $0x290] sm:$0xff]
        %v258 = vld [vmem:[#allocation5 + $0x298] sm:$0xff]
        %v259 = vld [vmem:[#allocation5 + $0x2a0] sm:$0xff]
        %v260 = vld [vmem:[#allocation5 + $0x2a8] sm:$0xff]
        %v261 = vld [vmem:[#allocation5 + $0x2b0] sm:$0xff]
        %v262 = vld [vmem:[#allocation5 + $0x2b8] sm:$0xff]
        %v263 = vld [vmem:[#allocation5 + $0x2c0] sm:$0xff]
        %v264 = vld [vmem:[#allocation5 + $0x2c8] sm:$0xff]
        %v265 = vld [vmem:[#allocation5 + $0x2d0] sm:$0xff]
        %v266 = vld [vmem:[#allocation5 + $0x2d8] sm:$0xff]
        %v267 = vld [vmem:[#allocation5 + $0x2e0] sm:$0xff]
        %v268 = vld [vmem:[#allocation5 + $0x2e8] sm:$0xff]
        %v269 = vld [vmem:[#allocation5 + $0x2f0] sm:$0xff]
        %v270 = vld [vmem:[#allocation5 + $0x2f8] sm:$0xff]
        %v271 = vld [vmem:[#allocation5 + $0x300] sm:$0xff]
        %v272 = vld [vmem:[#allocation5 + $0x308] sm:$0xff]
        %v273 = vld [vmem:[#allocation5 + $0x310] sm:$0xff]
        %v274 = vld [vmem:[#allocation5 + $0x318] sm:$0xff]
        %v275 = vld [vmem:[#allocation5 + $0x320] sm:$0xff]
        %v276 = vld [vmem:[#allocation5 + $0x328] sm:$0xff]
        %v277 = vld [vmem:[#allocation5 + $0x330] sm:$0xff]
        %v278 = vld [vmem:[#allocation5 + $0x338] sm:$0xff]
        %v279 = vld [vmem:[#allocation5 + $0x340] sm:$0xff]
        %v280 = vld [vmem:[#allocation5 + $0x348] sm:$0xff]
        %v281 = vld [vmem:[#allocation5 + $0x350] sm:$0xff]
        %v282 = vld [vmem:[#allocation5 + $0x358] sm:$0xff]
        %v283 = vld [vmem:[#allocation5 + $0x360] sm:$0xff]
        %v284 = vld [vmem:[#allocation5 + $0x368] sm:$0xff]
        %v285 = vld [vmem:[#allocation5 + $0x370] sm:$0xff]
        %v286 = vld [vmem:[#allocation5 + $0x378] sm:$0xff]
        %v287 = vld [vmem:[#allocation5 + $0x380] sm:$0xff]
        %v288 = vld [vmem:[#allocation5 + $0x388] sm:$0xff]
        %v289 = vld [vmem:[#allocation5 + $0x390] sm:$0xff]
        %v290 = vld [vmem:[#allocation5 + $0x398] sm:$0xff]
        %v291 = vld [vmem:[#allocation5 + $0x3a0] sm:$0xff]
        %v292 = vld [vmem:[#allocation5 + $0x3a8] sm:$0xff]
        %v293 = vld [vmem:[#allocation5 + $0x3b0] sm:$0xff]
        %v294 = vld [vmem:[#allocation5 + $0x3b8] sm:$0xff]
        %v295 = vld [vmem:[#allocation5 + $0x3c0] sm:$0xff]
        %v296 = vld [vmem:[#allocation5 + $0x3c8] sm:$0xff]
        %v297 = vld [vmem:[#allocation5 + $0x3d0] sm:$0xff]
        %v298 = vld [vmem:[#allocation5 + $0x3d8] sm:$0xff]
        %v299 = vld [vmem:[#allocation5 + $0x3e0] sm:$0xff]
        %v300 = vld [vmem:[#allocation5 + $0x3e8] sm:$0xff]
        %v301 = vld [vmem:[#allocation5 + $0x3f0] sm:$0xff]
        %v302 = vld [vmem:[#allocation5 + $0x3f8] sm:$0xff]
        %v303 = vld [vmem:[#allocation5 + $0x400] sm:$0xff]
        %v304 = vld [vmem:[#allocation5 + $0x408] sm:$0xff]
        %v305 = vld [vmem:[#allocation5 + $0x410] sm:$0xff]
        %v306 = vld [vmem:[#allocation5 + $0x418] sm:$0xff]
        %v307 = vld [vmem:[#allocation5 + $0x420] sm:$0xff]
        %v308 = vld [vmem:[#allocation5 + $0x428] sm:$0xff]
        %v309 = vld [vmem:[#allocation5 + $0x430] sm:$0xff]
        %v310 = vld [vmem:[#allocation5 + $0x438] sm:$0xff]
        %v311 = vld [vmem:[#allocation5 + $0x440] sm:$0xff]
        %v312 = vld [vmem:[#allocation5 + $0x448] sm:$0xff]
        %v313 = vld [vmem:[#allocation5 + $0x450] sm:$0xff]
        %v314 = vld [vmem:[#allocation5 + $0x458] sm:$0xff]
        %v315 = vld [vmem:[#allocation5 + $0x460] sm:$0xff]
        %v316 = vld [vmem:[#allocation5 + $0x468] sm:$0xff]
        %v317 = vld [vmem:[#allocation5 + $0x470] sm:$0xff]
        %v318 = vld [vmem:[#allocation5 + $0x478] sm:$0xff]
        %v319 = vand.u32 %v176, 4294901760
        %320 = vmatprep.subr.mxu0 %v319
        %v321 = vand.u32 %v175, 4294901760
        %322 = vmatpush1.msra.mxu0 %v321
        %v323 = vand.u32 %v185, 4294901760
        %324 = vmatprep.subr.mxu0 %v323
        %v325 = vand.u32 %v184, 4294901760
        %326 = vmatpush1.msra.mxu0 %v325
        %v327 = vand.u32 %v194, 4294901760
        %328 = vmatprep.subr.mxu0 %v327
        %v329 = vand.u32 %v193, 4294901760
        %330 = vmatpush1.msra.mxu0 %v329
        %v331 = vand.u32 %v203, 4294901760
        %332 = vmatprep.subr.mxu0 %v331
        %v333 = vand.u32 %v202, 4294901760
        %334 = vmatpush1.msra.mxu0 %v333
        %v335 = vand.u32 %v212, 4294901760
        %336 = vmatprep.subr.mxu0 %v335
        %v337 = vand.u32 %v211, 4294901760
        %338 = vmatpush1.msra.mxu0 %v337
        %v339 = vand.u32 %v221, 4294901760
        %340 = vmatprep.subr.mxu0 %v339
        %v341 = vand.u32 %v220, 4294901760
        %342 = vmatpush1.msra.mxu0 %v341
        %v343 = vand.u32 %v230, 4294901760
        %344 = vmatprep.subr.mxu0 %v343
        %v345 = vand.u32 %v229, 4294901760
        %346 = vmatpush1.msra.mxu0 %v345
        %v347 = vand.u32 %v239, 4294901760
        %348 = vmatprep.subr.mxu0 %v347
        %v349 = vand.u32 %v238, 4294901760
        %350 = vmatpush1.msra.mxu0 %v349
        %v351 = vand.u32 %v248, 4294901760
        %352 = vmatprep.subr.mxu0 %v351
        %v353 = vand.u32 %v247, 4294901760
        %354 = vmatpush1.msra.mxu0 %v353
        %v355 = vand.u32 %v257, 4294901760
        %356 = vmatprep.subr.mxu0 %v355
        %v357 = vand.u32 %v256, 4294901760
        %358 = vmatpush1.msra.mxu0 %v357
        %v359 = vand.u32 %v266, 4294901760
        %360 = vmatprep.subr.mxu0 %v359
        %v361 = vand.u32 %v265, 4294901760
        %362 = vmatpush1.msra.mxu0 %v361
        %v363 = vand.u32 %v275, 4294901760
        %364 = vmatprep.subr.mxu0 %v363
        %v365 = vand.u32 %v274, 4294901760
        %366 = vmatpush1.msra.mxu0 %v365
        %v367 = vand.u32 %v284, 4294901760
        %368 = vmatprep.subr.mxu0 %v367
        %v369 = vand.u32 %v283, 4294901760
        %370 = vmatpush1.msra.mxu0 %v369
        %v371 = vand.u32 %v293, 4294901760
        %372 = vmatprep.subr.mxu0 %v371
        %v373 = vand.u32 %v292, 4294901760
        %374 = vmatpush1.msra.mxu0 %v373
        %v375 = vand.u32 %v302, 4294901760
        %376 = vmatprep.subr.mxu0 %v375
        %v377 = vand.u32 %v301, 4294901760
        %378 = vmatpush1.msra.mxu0 %v377
        %v379 = vand.u32 %v311, 4294901760
        %380 = vmatprep.subr.mxu0 %v379
        %v381 = vand.u32 %v310, 4294901760
        %382 = vmatpush1.msra.mxu0 %v381
        %383 = vmatprep.subr.mxu0 0.0
        %384 = vmatpush1.msra.mxu0 0.0
        %385 = vmatprep.subr.mxu0 0.0
        %386 = vmatpush1.msra.mxu0 0.0
        %387 = vmatprep.subr.mxu0 0.0
        %388 = vmatpush1.msra.mxu0 0.0
        %389 = vmatprep.subr.mxu0 0.0
        %390 = vmatpush1.msra.mxu0 0.0
        %391 = vmatprep.subr.mxu0 0.0
        %392 = vmatpush1.msra.mxu0 0.0
        %393 = vmatprep.subr.mxu0 0.0
        %394 = vmatpush1.msra.mxu0 0.0
        %395 = vmatprep.subr.mxu0 0.0
        %396 = vmatpush1.msra.mxu0 0.0
        %397 = vmatprep.subr.mxu0 0.0
        %398 = vmatpush1.msra.mxu0 0.0
        %399 = vmatprep.subr.mxu0 0.0
        %400 = vmatpush1.msra.mxu0 0.0
        %401 = vmatprep.subr.mxu0 0.0
        %402 = vmatpush1.msra.mxu0 0.0
        %403 = vmatprep.subr.mxu0 0.0
        %404 = vmatpush1.msra.mxu0 0.0
        %405 = vmatprep.subr.mxu0 0.0
        %406 = vmatpush1.msra.mxu0 0.0
        %407 = vmatprep.subr.mxu0 0.0
        %408 = vmatpush1.msra.mxu0 0.0
        %409 = vmatprep.subr.mxu0 0.0
        %410 = vmatpush1.msra.mxu0 0.0
        %411 = vmatprep.subr.mxu0 0.0
        %412 = vmatpush1.msra.mxu0 0.0
        %413 = vmatprep.subr.mxu0 0.0
        %414 = vmatpush1.msra.mxu0 0.0
        %415 = vmatprep.mubr.f32.mxu0 0.0
        %v416 = vand.u32 %v174, 4294901760
        %v417 = vsub.f32 %v174, %v416
        %v418 = vand.u32 %v417, 4294901760
        %v419 = vsub.f32 %v417, %v418
        %v420 = vand.u32 %v419, 4294901760
        %421 = vmatmul.mubr.f32.gmra.mrb[0].mxu0 %v420
        %v422 = vpop.f32.mrb[0].mxu0
        %v423 = vadd.f32 0.0, %v422
        %v424 = vpop.f32.mrb[0].mxu0
        %v425 = vadd.f32 0.0, %v424
        %426 = vdwg.mxu0
        %v427 = vand.u32 %v176, 4294901760
        %v428 = vsub.f32 %v176, %v427
        %v429 = vand.u32 %v428, 4294901760
        %v430 = vsub.f32 %v428, %v429
        %v431 = vand.u32 %v430, 4294901760
        %432 = vmatprep.subr.mxu0 %v431
        %v433 = vand.u32 %v175, 4294901760
        %v434 = vsub.f32 %v175, %v433
        %v435 = vand.u32 %v434, 4294901760
        %v436 = vsub.f32 %v434, %v435
        %v437 = vand.u32 %v436, 4294901760
        %438 = vmatpush1.msra.mxu0 %v437
        %v439 = vand.u32 %v185, 4294901760
        %v440 = vsub.f32 %v185, %v439
        %v441 = vand.u32 %v440, 4294901760
        %v442 = vsub.f32 %v440, %v441
        %v443 = vand.u32 %v442, 4294901760
        %444 = vmatprep.subr.mxu0 %v443
        %v445 = vand.u32 %v184, 4294901760
        %v446 = vsub.f32 %v184, %v445
        %v447 = vand.u32 %v446, 4294901760
        %v448 = vsub.f32 %v446, %v447
        %v449 = vand.u32 %v448, 4294901760
        %450 = vmatpush1.msra.mxu0 %v449
        %v451 = vand.u32 %v194, 4294901760
        %v452 = vsub.f32 %v194, %v451
        %v453 = vand.u32 %v452, 4294901760
        %v454 = vsub.f32 %v452, %v453
        %v455 = vand.u32 %v454, 4294901760
        %456 = vmatprep.subr.mxu0 %v455
        %v457 = vand.u32 %v193, 4294901760
        %v458 = vsub.f32 %v193, %v457
        %v459 = vand.u32 %v458, 4294901760
        %v460 = vsub.f32 %v458, %v459
        %v461 = vand.u32 %v460, 4294901760
        %462 = vmatpush1.msra.mxu0 %v461
        %v463 = vand.u32 %v203, 4294901760
        %v464 = vsub.f32 %v203, %v463
        %v465 = vand.u32 %v464, 4294901760
        %v466 = vsub.f32 %v464, %v465
        %v467 = vand.u32 %v466, 4294901760
        %468 = vmatprep.subr.mxu0 %v467
        %v469 = vand.u32 %v202, 4294901760
        %v470 = vsub.f32 %v202, %v469
        %v471 = vand.u32 %v470, 4294901760
        %v472 = vsub.f32 %v470, %v471
        %v473 = vand.u32 %v472, 4294901760
        %474 = vmatpush1.msra.mxu0 %v473
        %v475 = vand.u32 %v212, 4294901760
        %v476 = vsub.f32 %v212, %v475
        %v477 = vand.u32 %v476, 4294901760
        %v478 = vsub.f32 %v476, %v477
        %v479 = vand.u32 %v478, 4294901760
        %480 = vmatprep.subr.mxu0 %v479
        %v481 = vand.u32 %v211, 4294901760
        %v482 = vsub.f32 %v211, %v481
        %v483 = vand.u32 %v482, 4294901760
        %v484 = vsub.f32 %v482, %v483
        %v485 = vand.u32 %v484, 4294901760
        %486 = vmatpush1.msra.mxu0 %v485
        %v487 = vand.u32 %v221, 4294901760
        %v488 = vsub.f32 %v221, %v487
        %v489 = vand.u32 %v488, 4294901760
        %v490 = vsub.f32 %v488, %v489
        %v491 = vand.u32 %v490, 4294901760
        %492 = vmatprep.subr.mxu0 %v491
        %v493 = vand.u32 %v220, 4294901760
        %v494 = vsub.f32 %v220, %v493
        %v495 = vand.u32 %v494, 4294901760
        %v496 = vsub.f32 %v494, %v495
        %v497 = vand.u32 %v496, 4294901760
        %498 = vmatpush1.msra.mxu0 %v497
        %v499 = vand.u32 %v230, 4294901760
        %v500 = vsub.f32 %v230, %v499
        %v501 = vand.u32 %v500, 4294901760
        %v502 = vsub.f32 %v500, %v501
        %v503 = vand.u32 %v502, 4294901760
        %504 = vmatprep.subr.mxu0 %v503
        %v505 = vand.u32 %v229, 4294901760
        %v506 = vsub.f32 %v229, %v505
        %v507 = vand.u32 %v506, 4294901760
        %v508 = vsub.f32 %v506, %v507
        %v509 = vand.u32 %v508, 4294901760
        %510 = vmatpush1.msra.mxu0 %v509
        %v511 = vand.u32 %v239, 4294901760
        %v512 = vsub.f32 %v239, %v511
        %v513 = vand.u32 %v512, 4294901760
        %v514 = vsub.f32 %v512, %v513
        %v515 = vand.u32 %v514, 4294901760
        %516 = vmatprep.subr.mxu0 %v515
        %v517 = vand.u32 %v238, 4294901760
        %v518 = vsub.f32 %v238, %v517
        %v519 = vand.u32 %v518, 4294901760
        %v520 = vsub.f32 %v518, %v519
        %v521 = vand.u32 %v520, 4294901760
        %522 = vmatpush1.msra.mxu0 %v521
        %v523 = vand.u32 %v248, 4294901760
        %v524 = vsub.f32 %v248, %v523
        %v525 = vand.u32 %v524, 4294901760
        %v526 = vsub.f32 %v524, %v525
        %v527 = vand.u32 %v526, 4294901760
        %528 = vmatprep.subr.mxu0 %v527
        %v529 = vand.u32 %v247, 4294901760
        %v530 = vsub.f32 %v247, %v529
        %v531 = vand.u32 %v530, 4294901760
        %v532 = vsub.f32 %v530, %v531
        %v533 = vand.u32 %v532, 4294901760
        %534 = vmatpush1.msra.mxu0 %v533
        %v535 = vand.u32 %v257, 4294901760
        %v536 = vsub.f32 %v257, %v535
        %v537 = vand.u32 %v536, 4294901760
        %v538 = vsub.f32 %v536, %v537
        %v539 = vand.u32 %v538, 4294901760
        %540 = vmatprep.subr.mxu0 %v539
        %v541 = vand.u32 %v256, 4294901760
        %v542 = vsub.f32 %v256, %v541
        %v543 = vand.u32 %v542, 4294901760
        %v544 = vsub.f32 %v542, %v543
        %v545 = vand.u32 %v544, 4294901760
        %546 = vmatpush1.msra.mxu0 %v545
        %v547 = vand.u32 %v266, 4294901760
        %v548 = vsub.f32 %v266, %v547
        %v549 = vand.u32 %v548, 4294901760
        %v550 = vsub.f32 %v548, %v549
        %v551 = vand.u32 %v550, 4294901760
        %552 = vmatprep.subr.mxu0 %v551
        %v553 = vand.u32 %v265, 4294901760
        %v554 = vsub.f32 %v265, %v553
        %v555 = vand.u32 %v554, 4294901760
        %v556 = vsub.f32 %v554, %v555
        %v557 = vand.u32 %v556, 4294901760
        %558 = vmatpush1.msra.mxu0 %v557
        %v559 = vand.u32 %v275, 4294901760
        %v560 = vsub.f32 %v275, %v559
        %v561 = vand.u32 %v560, 4294901760
        %v562 = vsub.f32 %v560, %v561
        %v563 = vand.u32 %v562, 4294901760
        %564 = vmatprep.subr.mxu0 %v563
        %v565 = vand.u32 %v274, 4294901760
        %v566 = vsub.f32 %v274, %v565
        %v567 = vand.u32 %v566, 4294901760
        %v568 = vsub.f32 %v566, %v567
        %v569 = vand.u32 %v568, 4294901760
        %570 = vmatpush1.msra.mxu0 %v569
        %v571 = vand.u32 %v284, 4294901760
        %v572 = vsub.f32 %v284, %v571
        %v573 = vand.u32 %v572, 4294901760
        %v574 = vsub.f32 %v572, %v573
        %v575 = vand.u32 %v574, 4294901760
        %576 = vmatprep.subr.mxu0 %v575
        %v577 = vand.u32 %v283, 4294901760
        %v578 = vsub.f32 %v283, %v577
        %v579 = vand.u32 %v578, 4294901760
        %v580 = vsub.f32 %v578, %v579
        %v581 = vand.u32 %v580, 4294901760
        %582 = vmatpush1.msra.mxu0 %v581
        %v583 = vand.u32 %v293, 4294901760
        %v584 = vsub.f32 %v293, %v583
        %v585 = vand.u32 %v584, 4294901760
        %v586 = vsub.f32 %v584, %v585
        %v587 = vand.u32 %v586, 4294901760
        %588 = vmatprep.subr.mxu0 %v587
        %v589 = vand.u32 %v292, 4294901760
        %v590 = vsub.f32 %v292, %v589
        %v591 = vand.u32 %v590, 4294901760
        %v592 = vsub.f32 %v590, %v591
        %v593 = vand.u32 %v592, 4294901760
        %594 = vmatpush1.msra.mxu0 %v593
        %v595 = vand.u32 %v302, 4294901760
        %v596 = vsub.f32 %v302, %v595
        %v597 = vand.u32 %v596, 4294901760
        %v598 = vsub.f32 %v596, %v597
        %v599 = vand.u32 %v598, 4294901760
        %600 = vmatprep.subr.mxu0 %v599
        %v601 = vand.u32 %v301, 4294901760
        %v602 = vsub.f32 %v301, %v601
        %v603 = vand.u32 %v602, 4294901760
        %v604 = vsub.f32 %v602, %v603
        %v605 = vand.u32 %v604, 4294901760
        %606 = vmatpush1.msra.mxu0 %v605
        %v607 = vand.u32 %v311, 4294901760
        %v608 = vsub.f32 %v311, %v607
        %v609 = vand.u32 %v608, 4294901760
        %v610 = vsub.f32 %v608, %v609
        %v611 = vand.u32 %v610, 4294901760
        %612 = vmatprep.subr.mxu0 %v611
        %v613 = vand.u32 %v310, 4294901760
        %v614 = vsub.f32 %v310, %v613
        %v615 = vand.u32 %v614, 4294901760
        %v616 = vsub.f32 %v614, %v615
        %v617 = vand.u32 %v616, 4294901760
        %618 = vmatpush1.msra.mxu0 %v617
        %619 = vmatprep.subr.mxu0 0.0
        %620 = vmatpush1.msra.mxu0 0.0
        %621 = vmatprep.subr.mxu0 0.0
        %622 = vmatpush1.msra.mxu0 0.0
        %623 = vmatprep.subr.mxu0 0.0
        %624 = vmatpush1.msra.mxu0 0.0
        %625 = vmatprep.subr.mxu0 0.0
        %626 = vmatpush1.msra.mxu0 0.0
        %627 = vmatprep.subr.mxu0 0.0
        %628 = vmatpush1.msra.mxu0 0.0
        %629 = vmatprep.subr.mxu0 0.0
        %630 = vmatpush1.msra.mxu0 0.0
        %631 = vmatprep.subr.mxu0 0.0
        %632 = vmatpush1.msra.mxu0 0.0
        %633 = vmatprep.subr.mxu0 0.0
        %634 = vmatpush1.msra.mxu0 0.0
        %635 = vmatprep.subr.mxu0 0.0
        %636 = vmatpush1.msra.mxu0 0.0
        %637 = vmatprep.subr.mxu0 0.0
        %638 = vmatpush1.msra.mxu0 0.0
        %639 = vmatprep.subr.mxu0 0.0
        %640 = vmatpush1.msra.mxu0 0.0
        %641 = vmatprep.subr.mxu0 0.0
        %642 = vmatpush1.msra.mxu0 0.0
        %643 = vmatprep.subr.mxu0 0.0
        %644 = vmatpush1.msra.mxu0 0.0
        %645 = vmatprep.subr.mxu0 0.0
        %646 = vmatpush1.msra.mxu0 0.0
        %647 = vmatprep.subr.mxu0 0.0
        %648 = vmatpush1.msra.mxu0 0.0
        %649 = vmatprep.subr.mxu0 0.0
        %650 = vmatpush1.msra.mxu0 0.0
        %651 = vmatprep.mubr.f32.mxu0 0.0
        %v652 = vand.u32 %v174, 4294901760
        %653 = vmatmul.mubr.f32.gmra.mrb[0].mxu0 %v652
        %v654 = vpop.f32.mrb[0].mxu0
        %v655 = vadd.f32 %v423, %v654
        %v656 = vpop.f32.mrb[0].mxu0
        %v657 = vadd.f32 %v425, %v656
        %658 = vdwg.mxu0
        %v659 = vand.u32 %v176, 4294901760
        %v660 = vsub.f32 %v176, %v659
        %661 = vmatprep.subr.mxu0 %v660
        %v662 = vand.u32 %v175, 4294901760
        %v663 = vsub.f32 %v175, %v662
        %664 = vmatpush1.msra.mxu0 %v663
        %v665 = vand.u32 %v185, 4294901760
        %v666 = vsub.f32 %v185, %v665
        %667 = vmatprep.subr.mxu0 %v666
        %v668 = vand.u32 %v184, 4294901760
        %v669 = vsub.f32 %v184, %v668
        %670 = vmatpush1.msra.mxu0 %v669
        %v671 = vand.u32 %v194, 4294901760
        %v672 = vsub.f32 %v194, %v671
        %673 = vmatprep.subr.mxu0 %v672
        %v674 = vand.u32 %v193, 4294901760
        %v675 = vsub.f32 %v193, %v674
        %676 = vmatpush1.msra.mxu0 %v675
        %v677 = vand.u32 %v203, 4294901760
        %v678 = vsub.f32 %v203, %v677
        %679 = vmatprep.subr.mxu0 %v678
        %v680 = vand.u32 %v202, 4294901760
        %v681 = vsub.f32 %v202, %v680
        %682 = vmatpush1.msra.mxu0 %v681
        %v683 = vand.u32 %v212, 4294901760
        %v684 = vsub.f32 %v212, %v683
        %685 = vmatprep.subr.mxu0 %v684
        %v686 = vand.u32 %v211, 4294901760
        %v687 = vsub.f32 %v211, %v686
        %688 = vmatpush1.msra.mxu0 %v687
        %v689 = vand.u32 %v221, 4294901760
        %v690 = vsub.f32 %v221, %v689
        %691 = vmatprep.subr.mxu0 %v690
        %v692 = vand.u32 %v220, 4294901760
        %v693 = vsub.f32 %v220, %v692
        %694 = vmatpush1.msra.mxu0 %v693
        %v695 = vand.u32 %v230, 4294901760
        %v696 = vsub.f32 %v230, %v695
        %697 = vmatprep.subr.mxu0 %v696
        %v698 = vand.u32 %v229, 4294901760
        %v699 = vsub.f32 %v229, %v698
        %700 = vmatpush1.msra.mxu0 %v699
        %v701 = vand.u32 %v239, 4294901760
        %v702 = vsub.f32 %v239, %v701
        %703 = vmatprep.subr.mxu0 %v702
        %v704 = vand.u32 %v238, 4294901760
        %v705 = vsub.f32 %v238, %v704
        %706 = vmatpush1.msra.mxu0 %v705
        %v707 = vand.u32 %v248, 4294901760
        %v708 = vsub.f32 %v248, %v707
        %709 = vmatprep.subr.mxu0 %v708
        %v710 = vand.u32 %v247, 4294901760
        %v711 = vsub.f32 %v247, %v710
        %712 = vmatpush1.msra.mxu0 %v711
        %v713 = vand.u32 %v257, 4294901760
        %v714 = vsub.f32 %v257, %v713
        %715 = vmatprep.subr.mxu0 %v714
        %v716 = vand.u32 %v256, 4294901760
        %v717 = vsub.f32 %v256, %v716
        %718 = vmatpush1.msra.mxu0 %v717
        %v719 = vand.u32 %v266, 4294901760
        %v720 = vsub.f32 %v266, %v719
        %721 = vmatprep.subr.mxu0 %v720
        %v722 = vand.u32 %v265, 4294901760
        %v723 = vsub.f32 %v265, %v722
        %724 = vmatpush1.msra.mxu0 %v723
        %v725 = vand.u32 %v275, 4294901760
        %v726 = vsub.f32 %v275, %v725
        %727 = vmatprep.subr.mxu0 %v726
        %v728 = vand.u32 %v274, 4294901760
        %v729 = vsub.f32 %v274, %v728
        %730 = vmatpush1.msra.mxu0 %v729
        %v731 = vand.u32 %v284, 4294901760
        %v732 = vsub.f32 %v284, %v731
        %733 = vmatprep.subr.mxu0 %v732
        %v734 = vand.u32 %v283, 4294901760
        %v735 = vsub.f32 %v283, %v734
        %736 = vmatpush1.msra.mxu0 %v735
        %v737 = vand.u32 %v293, 4294901760
        %v738 = vsub.f32 %v293, %v737
        %739 = vmatprep.subr.mxu0 %v738
        %v740 = vand.u32 %v292, 4294901760
        %v741 = vsub.f32 %v292, %v740
        %742 = vmatpush1.msra.mxu0 %v741
        %v743 = vand.u32 %v302, 4294901760
        %v744 = vsub.f32 %v302, %v743
        %745 = vmatprep.subr.mxu0 %v744
        %v746 = vand.u32 %v301, 4294901760
        %v747 = vsub.f32 %v301, %v746
        %748 = vmatpush1.msra.mxu0 %v747
        %v749 = vand.u32 %v311, 4294901760
        %v750 = vsub.f32 %v311, %v749
        %751 = vmatprep.subr.mxu0 %v750
        %v752 = vand.u32 %v310, 4294901760
        %v753 = vsub.f32 %v310, %v752
        %754 = vmatpush1.msra.mxu0 %v753
        %755 = vmatprep.subr.mxu0 0.0
        %756 = vmatpush1.msra.mxu0 0.0
        %757 = vmatprep.subr.mxu0 0.0
        %758 = vmatpush1.msra.mxu0 0.0
        %759 = vmatprep.subr.mxu0 0.0
        %760 = vmatpush1.msra.mxu0 0.0
        %761 = vmatprep.subr.mxu0 0.0
        %762 = vmatpush1.msra.mxu0 0.0
        %763 = vmatprep.subr.mxu0 0.0
        %764 = vmatpush1.msra.mxu0 0.0
        %765 = vmatprep.subr.mxu0 0.0
        %766 = vmatpush1.msra.mxu0 0.0
        %767 = vmatprep.subr.mxu0 0.0
        %768 = vmatpush1.msra.mxu0 0.0
        %769 = vmatprep.subr.mxu0 0.0
        %770 = vmatpush1.msra.mxu0 0.0
        %771 = vmatprep.subr.mxu0 0.0
        %772 = vmatpush1.msra.mxu0 0.0
        %773 = vmatprep.subr.mxu0 0.0
        %774 = vmatpush1.msra.mxu0 0.0
        %775 = vmatprep.subr.mxu0 0.0
        %776 = vmatpush1.msra.mxu0 0.0
        %777 = vmatprep.subr.mxu0 0.0
        %778 = vmatpush1.msra.mxu0 0.0
        %779 = vmatprep.subr.mxu0 0.0
        %780 = vmatpush1.msra.mxu0 0.0
        %781 = vmatprep.subr.mxu0 0.0
        %782 = vmatpush1.msra.mxu0 0.0
        %783 = vmatprep.subr.mxu0 0.0
        %784 = vmatpush1.msra.mxu0 0.0
        %785 = vmatprep.subr.mxu0 0.0
        %786 = vmatpush1.msra.mxu0 0.0
        %787 = vmatprep.mubr.f32.mxu0 0.0
        %v788 = vand.u32 %v174, 4294901760
        %v789 = vsub.f32 %v174, %v788
        %790 = vmatmul.mubr.f32.gmra.mrb[0].mxu0 %v789
        %v791 = vpop.f32.mrb[0].mxu0
        %v792 = vadd.f32 %v655, %v791
        %v793 = vpop.f32.mrb[0].mxu0
        %v794 = vadd.f32 %v657, %v793
        %795 = vdwg.mxu0
        %v796 = vand.u32 %v176, 4294901760
        %797 = vmatprep.subr.mxu0 %v796
        %v798 = vand.u32 %v175, 4294901760
        %799 = vmatpush1.msra.mxu0 %v798
        %v800 = vand.u32 %v185, 4294901760
        %801 = vmatprep.subr.mxu0 %v800
        %v802 = vand.u32 %v184, 4294901760
        %803 = vmatpush1.msra.mxu0 %v802
        %v804 = vand.u32 %v194, 4294901760
        %805 = vmatprep.subr.mxu0 %v804
        %v806 = vand.u32 %v193, 4294901760
        %807 = vmatpush1.msra.mxu0 %v806
        %v808 = vand.u32 %v203, 4294901760
        %809 = vmatprep.subr.mxu0 %v808
        %v810 = vand.u32 %v202, 4294901760
        %811 = vmatpush1.msra.mxu0 %v810
        %v812 = vand.u32 %v212, 4294901760
        %813 = vmatprep.subr.mxu0 %v812
        %v814 = vand.u32 %v211, 4294901760
        %815 = vmatpush1.msra.mxu0 %v814
        %v816 = vand.u32 %v221, 4294901760
        %817 = vmatprep.subr.mxu0 %v816
        %v818 = vand.u32 %v220, 4294901760
        %819 = vmatpush1.msra.mxu0 %v818
        %v820 = vand.u32 %v230, 4294901760
        %821 = vmatprep.subr.mxu0 %v820
        %v822 = vand.u32 %v229, 4294901760
        %823 = vmatpush1.msra.mxu0 %v822
        %v824 = vand.u32 %v239, 4294901760
        %825 = vmatprep.subr.mxu0 %v824
        %v826 = vand.u32 %v238, 4294901760
        %827 = vmatpush1.msra.mxu0 %v826
        %v828 = vand.u32 %v248, 4294901760
        %829 = vmatprep.subr.mxu0 %v828
        %v830 = vand.u32 %v247, 4294901760
        %831 = vmatpush1.msra.mxu0 %v830
        %v832 = vand.u32 %v257, 4294901760
        %833 = vmatprep.subr.mxu0 %v832
        %v834 = vand.u32 %v256, 4294901760
        %835 = vmatpush1.msra.mxu0 %v834
        %v836 = vand.u32 %v266, 4294901760
        %837 = vmatprep.subr.mxu0 %v836
        %v838 = vand.u32 %v265, 4294901760
        %839 = vmatpush1.msra.mxu0 %v838
        %v840 = vand.u32 %v275, 4294901760
        %841 = vmatprep.subr.mxu0 %v840
        %v842 = vand.u32 %v274, 4294901760
        %843 = vmatpush1.msra.mxu0 %v842
        %v844 = vand.u32 %v284, 4294901760
        %845 = vmatprep.subr.mxu0 %v844
        %v846 = vand.u32 %v283, 4294901760
        %847 = vmatpush1.msra.mxu0 %v846
        %v848 = vand.u32 %v293, 4294901760
        %849 = vmatprep.subr.mxu0 %v848
        %v850 = vand.u32 %v292, 4294901760
        %851 = vmatpush1.msra.mxu0 %v850
        %v852 = vand.u32 %v302, 4294901760
        %853 = vmatprep.subr.mxu0 %v852
        %v854 = vand.u32 %v301, 4294901760
        %855 = vmatpush1.msra.mxu0 %v854
        %v856 = vand.u32 %v311, 4294901760
        %857 = vmatprep.subr.mxu0 %v856
        %v858 = vand.u32 %v310, 4294901760
        %859 = vmatpush1.msra.mxu0 %v858
        %860 = vmatprep.subr.mxu0 0.0
        %861 = vmatpush1.msra.mxu0 0.0
        %862 = vmatprep.subr.mxu0 0.0
        %863 = vmatpush1.msra.mxu0 0.0
        %864 = vmatprep.subr.mxu0 0.0
        %865 = vmatpush1.msra.mxu0 0.0
        %866 = vmatprep.subr.mxu0 0.0
        %867 = vmatpush1.msra.mxu0 0.0
        %868 = vmatprep.subr.mxu0 0.0
        %869 = vmatpush1.msra.mxu0 0.0
        %870 = vmatprep.subr.mxu0 0.0
        %871 = vmatpush1.msra.mxu0 0.0
        %872 = vmatprep.subr.mxu0 0.0
        %873 = vmatpush1.msra.mxu0 0.0
        %874 = vmatprep.subr.mxu0 0.0
        %875 = vmatpush1.msra.mxu0 0.0
        %876 = vmatprep.subr.mxu0 0.0
        %877 = vmatpush1.msra.mxu0 0.0
        %878 = vmatprep.subr.mxu0 0.0
        %879 = vmatpush1.msra.mxu0 0.0
        %880 = vmatprep.subr.mxu0 0.0
        %881 = vmatpush1.msra.mxu0 0.0
        %882 = vmatprep.subr.mxu0 0.0
        %883 = vmatpush1.msra.mxu0 0.0
        %884 = vmatprep.subr.mxu0 0.0
        %885 = vmatpush1.msra.mxu0 0.0
        %886 = vmatprep.subr.mxu0 0.0
        %887 = vmatpush1.msra.mxu0 0.0
        %888 = vmatprep.subr.mxu0 0.0
        %889 = vmatpush1.msra.mxu0 0.0
        %890 = vmatprep.subr.mxu0 0.0
        %891 = vmatpush1.msra.mxu0 0.0
        %892 = vmatprep.mubr.f32.mxu0 0.0
        %v893 = vand.u32 %v174, 4294901760
        %v894 = vsub.f32 %v174, %v893
        %v895 = vand.u32 %v894, 4294901760
        %896 = vmatmul.mubr.f32.gmra.mrb[0].mxu0 %v895
        %v897 = vpop.f32.mrb[0].mxu0
        %v898 = vadd.f32 %v792, %v897
        %v899 = vpop.f32.mrb[0].mxu0
        %v900 = vadd.f32 %v794, %v899
        %901 = vdwg.mxu0
        %v902 = vand.u32 %v176, 4294901760
        %v903 = vsub.f32 %v176, %v902
        %v904 = vand.u32 %v903, 4294901760
        %905 = vmatprep.subr.mxu0 %v904
        %v906 = vand.u32 %v175, 4294901760
        %v907 = vsub.f32 %v175, %v906
        %v908 = vand.u32 %v907, 4294901760
        %909 = vmatpush1.msra.mxu0 %v908
        %v910 = vand.u32 %v185, 4294901760
        %v911 = vsub.f32 %v185, %v910
        %v912 = vand.u32 %v911, 4294901760
        %913 = vmatprep.subr.mxu0 %v912
        %v914 = vand.u32 %v184, 4294901760
        %v915 = vsub.f32 %v184, %v914
        %v916 = vand.u32 %v915, 4294901760
        %917 = vmatpush1.msra.mxu0 %v916
        %v918 = vand.u32 %v194, 4294901760
        %v919 = vsub.f32 %v194, %v918
        %v920 = vand.u32 %v919, 4294901760
        %921 = vmatprep.subr.mxu0 %v920
        %v922 = vand.u32 %v193, 4294901760
        %v923 = vsub.f32 %v193, %v922
        %v924 = vand.u32 %v923, 4294901760
        %925 = vmatpush1.msra.mxu0 %v924
        %v926 = vand.u32 %v203, 4294901760
        %v927 = vsub.f32 %v203, %v926
        %v928 = vand.u32 %v927, 4294901760
        %929 = vmatprep.subr.mxu0 %v928
        %v930 = vand.u32 %v202, 4294901760
        %v931 = vsub.f32 %v202, %v930
        %v932 = vand.u32 %v931, 4294901760
        %933 = vmatpush1.msra.mxu0 %v932
        %v934 = vand.u32 %v212, 4294901760
        %v935 = vsub.f32 %v212, %v934
        %v936 = vand.u32 %v935, 4294901760
        %937 = vmatprep.subr.mxu0 %v936
        %v938 = vand.u32 %v211, 4294901760
        %v939 = vsub.f32 %v211, %v938
        %v940 = vand.u32 %v939, 4294901760
        %941 = vmatpush1.msra.mxu0 %v940
        %v942 = vand.u32 %v221, 4294901760
        %v943 = vsub.f32 %v221, %v942
        %v944 = vand.u32 %v943, 4294901760
        %945 = vmatprep.subr.mxu0 %v944
        %v946 = vand.u32 %v220, 4294901760
        %v947 = vsub.f32 %v220, %v946
        %v948 = vand.u32 %v947, 4294901760
        %949 = vmatpush1.msra.mxu0 %v948
        %v950 = vand.u32 %v230, 4294901760
        %v951 = vsub.f32 %v230, %v950
        %v952 = vand.u32 %v951, 4294901760
        %953 = vmatprep.subr.mxu0 %v952
        %v954 = vand.u32 %v229, 4294901760
        %v955 = vsub.f32 %v229, %v954
        %v956 = vand.u32 %v955, 4294901760
        %957 = vmatpush1.msra.mxu0 %v956
        %v958 = vand.u32 %v239, 4294901760
        %v959 = vsub.f32 %v239, %v958
        %v960 = vand.u32 %v959, 4294901760
        %961 = vmatprep.subr.mxu0 %v960
        %v962 = vand.u32 %v238, 4294901760
        %v963 = vsub.f32 %v238, %v962
        %v964 = vand.u32 %v963, 4294901760
        %965 = vmatpush1.msra.mxu0 %v964
        %v966 = vand.u32 %v248, 4294901760
        %v967 = vsub.f32 %v248, %v966
        %v968 = vand.u32 %v967, 4294901760
        %969 = vmatprep.subr.mxu0 %v968
        %v970 = vand.u32 %v247, 4294901760
        %v971 = vsub.f32 %v247, %v970
        %v972 = vand.u32 %v971, 4294901760
        %973 = vmatpush1.msra.mxu0 %v972
        %v974 = vand.u32 %v257, 4294901760
        %v975 = vsub.f32 %v257, %v974
        %v976 = vand.u32 %v975, 4294901760
        %977 = vmatprep.subr.mxu0 %v976
        %v978 = vand.u32 %v256, 4294901760
        %v979 = vsub.f32 %v256, %v978
        %v980 = vand.u32 %v979, 4294901760
        %981 = vmatpush1.msra.mxu0 %v980
        %v982 = vand.u32 %v266, 4294901760
        %v983 = vsub.f32 %v266, %v982
        %v984 = vand.u32 %v983, 4294901760
        %985 = vmatprep.subr.mxu0 %v984
        %v986 = vand.u32 %v265, 4294901760
        %v987 = vsub.f32 %v265, %v986
        %v988 = vand.u32 %v987, 4294901760
        %989 = vmatpush1.msra.mxu0 %v988
        %v990 = vand.u32 %v275, 4294901760
        %v991 = vsub.f32 %v275, %v990
        %v992 = vand.u32 %v991, 4294901760
        %993 = vmatprep.subr.mxu0 %v992
        %v994 = vand.u32 %v274, 4294901760
        %v995 = vsub.f32 %v274, %v994
        %v996 = vand.u32 %v995, 4294901760
        %997 = vmatpush1.msra.mxu0 %v996
        %v998 = vand.u32 %v284, 4294901760
        %v999 = vsub.f32 %v284, %v998
        %v1000 = vand.u32 %v999, 4294901760
        %1001 = vmatprep.subr.mxu0 %v1000
        %v1002 = vand.u32 %v283, 4294901760
        %v1003 = vsub.f32 %v283, %v1002
        %v1004 = vand.u32 %v1003, 4294901760
        %1005 = vmatpush1.msra.mxu0 %v1004
        %v1006 = vand.u32 %v293, 4294901760
        %v1007 = vsub.f32 %v293, %v1006
        %v1008 = vand.u32 %v1007, 4294901760
        %1009 = vmatprep.subr.mxu0 %v1008
        %v1010 = vand.u32 %v292, 4294901760
        %v1011 = vsub.f32 %v292, %v1010
        %v1012 = vand.u32 %v1011, 4294901760
        %1013 = vmatpush1.msra.mxu0 %v1012
        %v1014 = vand.u32 %v302, 4294901760
        %v1015 = vsub.f32 %v302, %v1014
        %v1016 = vand.u32 %v1015, 4294901760
        %1017 = vmatprep.subr.mxu0 %v1016
        %v1018 = vand.u32 %v301, 4294901760
        %v1019 = vsub.f32 %v301, %v1018
        %v1020 = vand.u32 %v1019, 4294901760
        %1021 = vmatpush1.msra.mxu0 %v1020
        %v1022 = vand.u32 %v311, 4294901760
        %v1023 = vsub.f32 %v311, %v1022
        %v1024 = vand.u32 %v1023, 4294901760
        %1025 = vmatprep.subr.mxu0 %v1024
        %v1026 = vand.u32 %v310, 4294901760
        %v1027 = vsub.f32 %v310, %v1026
        %v1028 = vand.u32 %v1027, 4294901760
        %1029 = vmatpush1.msra.mxu0 %v1028
        %1030 = vmatprep.subr.mxu0 0.0
        %1031 = vmatpush1.msra.mxu0 0.0
        %1032 = vmatprep.subr.mxu0 0.0
        %1033 = vmatpush1.msra.mxu0 0.0
        %1034 = vmatprep.subr.mxu0 0.0
        %1035 = vmatpush1.msra.mxu0 0.0
        %1036 = vmatprep.subr.mxu0 0.0
        %1037 = vmatpush1.msra.mxu0 0.0
        %1038 = vmatprep.subr.mxu0 0.0
        %1039 = vmatpush1.msra.mxu0 0.0
        %1040 = vmatprep.subr.mxu0 0.0
        %1041 = vmatpush1.msra.mxu0 0.0
        %1042 = vmatprep.subr.mxu0 0.0
        %1043 = vmatpush1.msra.mxu0 0.0
        %1044 = vmatprep.subr.mxu0 0.0
        %1045 = vmatpush1.msra.mxu0 0.0
        %1046 = vmatprep.subr.mxu0 0.0
        %1047 = vmatpush1.msra.mxu0 0.0
        %1048 = vmatprep.subr.mxu0 0.0
        %1049 = vmatpush1.msra.mxu0 0.0
        %1050 = vmatprep.subr.mxu0 0.0
        %1051 = vmatpush1.msra.mxu0 0.0
        %1052 = vmatprep.subr.mxu0 0.0
        %1053 = vmatpush1.msra.mxu0 0.0
        %1054 = vmatprep.subr.mxu0 0.0
        %1055 = vmatpush1.msra.mxu0 0.0
        %1056 = vmatprep.subr.mxu0 0.0
        %1057 = vmatpush1.msra.mxu0 0.0
        %1058 = vmatprep.subr.mxu0 0.0
        %1059 = vmatpush1.msra.mxu0 0.0
        %1060 = vmatprep.subr.mxu0 0.0
        %1061 = vmatpush1.msra.mxu0 0.0
        %1062 = vmatprep.mubr.f32.mxu0 0.0
        %v1063 = vand.u32 %v174, 4294901760
        %1064 = vmatmul.mubr.f32.gmra.mrb[0].mxu0 %v1063
        %v1065 = vpop.f32.mrb[0].mxu0
        %v1066 = vadd.f32 %v898, %v1065
        %v1067 = vpop.f32.mrb[0].mxu0
        %v1068 = vadd.f32 %v900, %v1067
        %1069 = vdwg.mxu0
        %v1070 = vand.u32 %v176, 4294901760
        %1071 = vmatprep.subr.mxu0 %v1070
        %v1072 = vand.u32 %v175, 4294901760
        %1073 = vmatpush1.msra.mxu0 %v1072
        %v1074 = vand.u32 %v185, 4294901760
        %1075 = vmatprep.subr.mxu0 %v1074
        %v1076 = vand.u32 %v184, 4294901760
        %1077 = vmatpush1.msra.mxu0 %v1076
        %v1078 = vand.u32 %v194, 4294901760
        %1079 = vmatprep.subr.mxu0 %v1078
        %v1080 = vand.u32 %v193, 4294901760
        %1081 = vmatpush1.msra.mxu0 %v1080
        %v1082 = vand.u32 %v203, 4294901760
        %1083 = vmatprep.subr.mxu0 %v1082
        %v1084 = vand.u32 %v202, 4294901760
        %1085 = vmatpush1.msra.mxu0 %v1084
        %v1086 = vand.u32 %v212, 4294901760
        %1087 = vmatprep.subr.mxu0 %v1086
        %v1088 = vand.u32 %v211, 4294901760
        %1089 = vmatpush1.msra.mxu0 %v1088
        %v1090 = vand.u32 %v221, 4294901760
        %1091 = vmatprep.subr.mxu0 %v1090
        %v1092 = vand.u32 %v220, 4294901760
        %1093 = vmatpush1.msra.mxu0 %v1092
        %v1094 = vand.u32 %v230, 4294901760
        %1095 = vmatprep.subr.mxu0 %v1094
        %v1096 = vand.u32 %v229, 4294901760
        %1097 = vmatpush1.msra.mxu0 %v1096
        %v1098 = vand.u32 %v239, 4294901760
        %1099 = vmatprep.subr.mxu0 %v1098
        %v1100 = vand.u32 %v238, 4294901760
        %1101 = vmatpush1.msra.mxu0 %v1100
        %v1102 = vand.u32 %v248, 4294901760
        %1103 = vmatprep.subr.mxu0 %v1102
        %v1104 = vand.u32 %v247, 4294901760
        %1105 = vmatpush1.msra.mxu0 %v1104
        %v1106 = vand.u32 %v257, 4294901760
        %1107 = vmatprep.subr.mxu0 %v1106
        %v1108 = vand.u32 %v256, 4294901760
        %1109 = vmatpush1.msra.mxu0 %v1108
        %v1110 = vand.u32 %v266, 4294901760
        %1111 = vmatprep.subr.mxu0 %v1110
        %v1112 = vand.u32 %v265, 4294901760
        %1113 = vmatpush1.msra.mxu0 %v1112
        %v1114 = vand.u32 %v275, 4294901760
        %1115 = vmatprep.subr.mxu0 %v1114
        %v1116 = vand.u32 %v274, 4294901760
        %1117 = vmatpush1.msra.mxu0 %v1116
        %v1118 = vand.u32 %v284, 4294901760
        %1119 = vmatprep.subr.mxu0 %v1118
        %v1120 = vand.u32 %v283, 4294901760
        %1121 = vmatpush1.msra.mxu0 %v1120
        %v1122 = vand.u32 %v293, 4294901760
        %1123 = vmatprep.subr.mxu0 %v1122
        %v1124 = vand.u32 %v292, 4294901760
        %1125 = vmatpush1.msra.mxu0 %v1124
        %v1126 = vand.u32 %v302, 4294901760
        %1127 = vmatprep.subr.mxu0 %v1126
        %v1128 = vand.u32 %v301, 4294901760
        %1129 = vmatpush1.msra.mxu0 %v1128
        %v1130 = vand.u32 %v311, 4294901760
        %1131 = vmatprep.subr.mxu0 %v1130
        %v1132 = vand.u32 %v310, 4294901760
        %1133 = vmatpush1.msra.mxu0 %v1132
        %1134 = vmatprep.subr.mxu0 0.0
        %1135 = vmatpush1.msra.mxu0 0.0
        %1136 = vmatprep.subr.mxu0 0.0
        %1137 = vmatpush1.msra.mxu0 0.0
        %1138 = vmatprep.subr.mxu0 0.0
        %1139 = vmatpush1.msra.mxu0 0.0
        %1140 = vmatprep.subr.mxu0 0.0
        %1141 = vmatpush1.msra.mxu0 0.0
        %1142 = vmatprep.subr.mxu0 0.0
        %1143 = vmatpush1.msra.mxu0 0.0
        %1144 = vmatprep.subr.mxu0 0.0
        %1145 = vmatpush1.msra.mxu0 0.0
        %1146 = vmatprep.subr.mxu0 0.0
        %1147 = vmatpush1.msra.mxu0 0.0
        %1148 = vmatprep.subr.mxu0 0.0
        %1149 = vmatpush1.msra.mxu0 0.0
        %1150 = vmatprep.subr.mxu0 0.0
        %1151 = vmatpush1.msra.mxu0 0.0
        %1152 = vmatprep.subr.mxu0 0.0
        %1153 = vmatpush1.msra.mxu0 0.0
        %1154 = vmatprep.subr.mxu0 0.0
        %1155 = vmatpush1.msra.mxu0 0.0
        %1156 = vmatprep.subr.mxu0 0.0
        %1157 = vmatpush1.msra.mxu0 0.0
        %1158 = vmatprep.subr.mxu0 0.0
        %1159 = vmatpush1.msra.mxu0 0.0
        %1160 = vmatprep.subr.mxu0 0.0
        %1161 = vmatpush1.msra.mxu0 0.0
        %1162 = vmatprep.subr.mxu0 0.0
        %1163 = vmatpush1.msra.mxu0 0.0
        %1164 = vmatprep.subr.mxu0 0.0
        %1165 = vmatpush1.msra.mxu0 0.0
        %1166 = vmatprep.mubr.f32.mxu0 0.0
        %v1167 = vand.u32 %v174, 4294901760
        %1168 = vmatmul.mubr.f32.gmra.mrb[0].mxu0 %v1167
        %v1169 = vpop.f32.mrb[0].mxu0
        %v1170 = vadd.f32 %v1066, %v1169
        %v1171 = vpop.f32.mrb[0].mxu0
        %v1172 = vadd.f32 %v1068, %v1171
        %1173 = vdwg.mxu0
        %v1174 = vand.u32 %v178, 4294901760
        %1175 = vmatprep.subr.mxu0 %v1174
        %v1176 = vand.u32 %v177, 4294901760
        %1177 = vmatpush1.msra.mxu0 %v1176
        %v1178 = vand.u32 %v187, 4294901760
        %1179 = vmatprep.subr.mxu0 %v1178
        %v1180 = vand.u32 %v186, 4294901760
        %1181 = vmatpush1.msra.mxu0 %v1180
        %v1182 = vand.u32 %v196, 4294901760
        %1183 = vmatprep.subr.mxu0 %v1182
        %v1184 = vand.u32 %v195, 4294901760
        %1185 = vmatpush1.msra.mxu0 %v1184
        %v1186 = vand.u32 %v205, 4294901760
        %1187 = vmatprep.subr.mxu0 %v1186
        %v1188 = vand.u32 %v204, 4294901760
        %1189 = vmatpush1.msra.mxu0 %v1188
        %v1190 = vand.u32 %v214, 4294901760
        %1191 = vmatprep.subr.mxu0 %v1190
        %v1192 = vand.u32 %v213, 4294901760
        %1193 = vmatpush1.msra.mxu0 %v1192
        %v1194 = vand.u32 %v223, 4294901760
        %1195 = vmatprep.subr.mxu0 %v1194
        %v1196 = vand.u32 %v222, 4294901760
        %1197 = vmatpush1.msra.mxu0 %v1196
        %v1198 = vand.u32 %v232, 4294901760
        %1199 = vmatprep.subr.mxu0 %v1198
        %v1200 = vand.u32 %v231, 4294901760
        %1201 = vmatpush1.msra.mxu0 %v1200
        %v1202 = vand.u32 %v241, 4294901760
        %1203 = vmatprep.subr.mxu0 %v1202
        %v1204 = vand.u32 %v240, 4294901760
        %1205 = vmatpush1.msra.mxu0 %v1204
        %v1206 = vand.u32 %v250, 4294901760
        %1207 = vmatprep.subr.mxu0 %v1206
        %v1208 = vand.u32 %v249, 4294901760
        %1209 = vmatpush1.msra.mxu0 %v1208
        %v1210 = vand.u32 %v259, 4294901760
        %1211 = vmatprep.subr.mxu0 %v1210
        %v1212 = vand.u32 %v258, 4294901760
        %1213 = vmatpush1.msra.mxu0 %v1212
        %v1214 = vand.u32 %v268, 4294901760
        %1215 = vmatprep.subr.mxu0 %v1214
        %v1216 = vand.u32 %v267, 4294901760
        %1217 = vmatpush1.msra.mxu0 %v1216
        %v1218 = vand.u32 %v277, 4294901760
        %1219 = vmatprep.subr.mxu0 %v1218
        %v1220 = vand.u32 %v276, 4294901760
        %1221 = vmatpush1.msra.mxu0 %v1220
        %v1222 = vand.u32 %v286, 4294901760
        %1223 = vmatprep.subr.mxu0 %v1222
        %v1224 = vand.u32 %v285, 4294901760
        %1225 = vmatpush1.msra.mxu0 %v1224
        %v1226 = vand.u32 %v295, 4294901760
        %1227 = vmatprep.subr.mxu0 %v1226
        %v1228 = vand.u32 %v294, 4294901760
        %1229 = vmatpush1.msra.mxu0 %v1228
        %v1230 = vand.u32 %v304, 4294901760
        %1231 = vmatprep.subr.mxu0 %v1230
        %v1232 = vand.u32 %v303, 4294901760
        %1233 = vmatpush1.msra.mxu0 %v1232
        %v1234 = vand.u32 %v313, 4294901760
        %1235 = vmatprep.subr.mxu0 %v1234
        %v1236 = vand.u32 %v312, 4294901760
        %1237 = vmatpush1.msra.mxu0 %v1236
        %1238 = vmatprep.subr.mxu0 0.0
        %1239 = vmatpush1.msra.mxu0 0.0
        %1240 = vmatprep.subr.mxu0 0.0
        %1241 = vmatpush1.msra.mxu0 0.0
        %1242 = vmatprep.subr.mxu0 0.0
        %1243 = vmatpush1.msra.mxu0 0.0
        %1244 = vmatprep.subr.mxu0 0.0
        %1245 = vmatpush1.msra.mxu0 0.0
        %1246 = vmatprep.subr.mxu0 0.0
        %1247 = vmatpush1.msra.mxu0 0.0
        %1248 = vmatprep.subr.mxu0 0.0
        %1249 = vmatpush1.msra.mxu0 0.0
        %1250 = vmatprep.subr.mxu0 0.0
        %1251 = vmatpush1.msra.mxu0 0.0
        %1252 = vmatprep.subr.mxu0 0.0
        %1253 = vmatpush1.msra.mxu0 0.0
        %1254 = vmatprep.subr.mxu0 0.0
        %1255 = vmatpush1.msra.mxu0 0.0
        %1256 = vmatprep.subr.mxu0 0.0
        %1257 = vmatpush1.msra.mxu0 0.0
        %1258 = vmatprep.subr.mxu0 0.0
        %1259 = vmatpush1.msra.mxu0 0.0
        %1260 = vmatprep.subr.mxu0 0.0
        %1261 = vmatpush1.msra.mxu0 0.0
        %1262 = vmatprep.subr.mxu0 0.0
        %1263 = vmatpush1.msra.mxu0 0.0
        %1264 = vmatprep.subr.mxu0 0.0
        %1265 = vmatpush1.msra.mxu0 0.0
        %1266 = vmatprep.subr.mxu0 0.0
        %1267 = vmatpush1.msra.mxu0 0.0
        %1268 = vmatprep.subr.mxu0 0.0
        %1269 = vmatpush1.msra.mxu0 0.0
        %1270 = vmatprep.mubr.f32.mxu0 0.0
        %v1271 = vand.u32 %v174, 4294901760
        %v1272 = vsub.f32 %v174, %v1271
        %v1273 = vand.u32 %v1272, 4294901760
        %v1274 = vsub.f32 %v1272, %v1273
        %v1275 = vand.u32 %v1274, 4294901760
        %1276 = vmatmul.mubr.f32.gmra.mrb[0].mxu0 %v1275
        %v1277 = vpop.f32.mrb[0].mxu0
        %v1278 = vadd.f32 0.0, %v1277
        %v1279 = vpop.f32.mrb[0].mxu0
        %v1280 = vadd.f32 0.0, %v1279
        %1281 = vdwg.mxu0
        %v1282 = vand.u32 %v178, 4294901760
        %v1283 = vsub.f32 %v178, %v1282
        %v1284 = vand.u32 %v1283, 4294901760
        %v1285 = vsub.f32 %v1283, %v1284
        %v1286 = vand.u32 %v1285, 4294901760
        %1287 = vmatprep.subr.mxu0 %v1286
        %v1288 = vand.u32 %v177, 4294901760
        %v1289 = vsub.f32 %v177, %v1288
        %v1290 = vand.u32 %v1289, 4294901760
        %v1291 = vsub.f32 %v1289, %v1290
        %v1292 = vand.u32 %v1291, 4294901760
        %1293 = vmatpush1.msra.mxu0 %v1292
        %v1294 = vand.u32 %v187, 4294901760
        %v1295 = vsub.f32 %v187, %v1294
        %v1296 = vand.u32 %v1295, 4294901760
        %v1297 = vsub.f32 %v1295, %v1296
        %v1298 = vand.u32 %v1297, 4294901760
        %1299 = vmatprep.subr.mxu0 %v1298
        %v1300 = vand.u32 %v186, 4294901760
        %v1301 = vsub.f32 %v186, %v1300
        %v1302 = vand.u32 %v1301, 4294901760
        %v1303 = vsub.f32 %v1301, %v1302
        %v1304 = vand.u32 %v1303, 4294901760
        %1305 = vmatpush1.msra.mxu0 %v1304
        %v1306 = vand.u32 %v196, 4294901760
        %v1307 = vsub.f32 %v196, %v1306
        %v1308 = vand.u32 %v1307, 4294901760
        %v1309 = vsub.f32 %v1307, %v1308
        %v1310 = vand.u32 %v1309, 4294901760
        %1311 = vmatprep.subr.mxu0 %v1310
        %v1312 = vand.u32 %v195, 4294901760
        %v1313 = vsub.f32 %v195, %v1312
        %v1314 = vand.u32 %v1313, 4294901760
        %v1315 = vsub.f32 %v1313, %v1314
        %v1316 = vand.u32 %v1315, 4294901760
        %1317 = vmatpush1.msra.mxu0 %v1316
        %v1318 = vand.u32 %v205, 4294901760
        %v1319 = vsub.f32 %v205, %v1318
        %v1320 = vand.u32 %v1319, 4294901760
        %v1321 = vsub.f32 %v1319, %v1320
        %v1322 = vand.u32 %v1321, 4294901760
        %1323 = vmatprep.subr.mxu0 %v1322
        %v1324 = vand.u32 %v204, 4294901760
        %v1325 = vsub.f32 %v204, %v1324
        %v1326 = vand.u32 %v1325, 4294901760
        %v1327 = vsub.f32 %v1325, %v1326
        %v1328 = vand.u32 %v1327, 4294901760
        %1329 = vmatpush1.msra.mxu0 %v1328
        %v1330 = vand.u32 %v214, 4294901760
        %v1331 = vsub.f32 %v214, %v1330
        %v1332 = vand.u32 %v1331, 4294901760
        %v1333 = vsub.f32 %v1331, %v1332
        %v1334 = vand.u32 %v1333, 4294901760
        %1335 = vmatprep.subr.mxu0 %v1334
        %v1336 = vand.u32 %v213, 4294901760
        %v1337 = vsub.f32 %v213, %v1336
        %v1338 = vand.u32 %v1337, 4294901760
        %v1339 = vsub.f32 %v1337, %v1338
        %v1340 = vand.u32 %v1339, 4294901760
        %1341 = vmatpush1.msra.mxu0 %v1340
        %v1342 = vand.u32 %v223, 4294901760
        %v1343 = vsub.f32 %v223, %v1342
        %v1344 = vand.u32 %v1343, 4294901760
        %v1345 = vsub.f32 %v1343, %v1344
        %v1346 = vand.u32 %v1345, 4294901760
        %1347 = vmatprep.subr.mxu0 %v1346
        %v1348 = vand.u32 %v222, 4294901760
        %v1349 = vsub.f32 %v222, %v1348
        %v1350 = vand.u32 %v1349, 4294901760
        %v1351 = vsub.f32 %v1349, %v1350
        %v1352 = vand.u32 %v1351, 4294901760
        %1353 = vmatpush1.msra.mxu0 %v1352
        %v1354 = vand.u32 %v232, 4294901760
        %v1355 = vsub.f32 %v232, %v1354
        %v1356 = vand.u32 %v1355, 4294901760
        %v1357 = vsub.f32 %v1355, %v1356
        %v1358 = vand.u32 %v1357, 4294901760
        %1359 = vmatprep.subr.mxu0 %v1358
        %v1360 = vand.u32 %v231, 4294901760
        %v1361 = vsub.f32 %v231, %v1360
        %v1362 = vand.u32 %v1361, 4294901760
        %v1363 = vsub.f32 %v1361, %v1362
        %v1364 = vand.u32 %v1363, 4294901760
        %1365 = vmatpush1.msra.mxu0 %v1364
        %v1366 = vand.u32 %v241, 4294901760
        %v1367 = vsub.f32 %v241, %v1366
        %v1368 = vand.u32 %v1367, 4294901760
        %v1369 = vsub.f32 %v1367, %v1368
        %v1370 = vand.u32 %v1369, 4294901760
        %1371 = vmatprep.subr.mxu0 %v1370
        %v1372 = vand.u32 %v240, 4294901760
        %v1373 = vsub.f32 %v240, %v1372
        %v1374 = vand.u32 %v1373, 4294901760
        %v1375 = vsub.f32 %v1373, %v1374
        %v1376 = vand.u32 %v1375, 4294901760
        %1377 = vmatpush1.msra.mxu0 %v1376
        %v1378 = vand.u32 %v250, 4294901760
        %v1379 = vsub.f32 %v250, %v1378
        %v1380 = vand.u32 %v1379, 4294901760
        %v1381 = vsub.f32 %v1379, %v1380
        %v1382 = vand.u32 %v1381, 4294901760
        %1383 = vmatprep.subr.mxu0 %v1382
        %v1384 = vand.u32 %v249, 4294901760
        %v1385 = vsub.f32 %v249, %v1384
        %v1386 = vand.u32 %v1385, 4294901760
        %v1387 = vsub.f32 %v1385, %v1386
        %v1388 = vand.u32 %v1387, 4294901760
        %1389 = vmatpush1.msra.mxu0 %v1388
        %v1390 = vand.u32 %v259, 4294901760
        %v1391 = vsub.f32 %v259, %v1390
        %v1392 = vand.u32 %v1391, 4294901760
        %v1393 = vsub.f32 %v1391, %v1392
        %v1394 = vand.u32 %v1393, 4294901760
        %1395 = vmatprep.subr.mxu0 %v1394
        %v1396 = vand.u32 %v258, 4294901760
        %v1397 = vsub.f32 %v258, %v1396
        %v1398 = vand.u32 %v1397, 4294901760
        %v1399 = vsub.f32 %v1397, %v1398
        %v1400 = vand.u32 %v1399, 4294901760
        %1401 = vmatpush1.msra.mxu0 %v1400
        %v1402 = vand.u32 %v268, 4294901760
        %v1403 = vsub.f32 %v268, %v1402
        %v1404 = vand.u32 %v1403, 4294901760
        %v1405 = vsub.f32 %v1403, %v1404
        %v1406 = vand.u32 %v1405, 4294901760
        %1407 = vmatprep.subr.mxu0 %v1406
        %v1408 = vand.u32 %v267, 4294901760
        %v1409 = vsub.f32 %v267, %v1408
        %v1410 = vand.u32 %v1409, 4294901760
        %v1411 = vsub.f32 %v1409, %v1410
        %v1412 = vand.u32 %v1411, 4294901760
        %1413 = vmatpush1.msra.mxu0 %v1412
        %v1414 = vand.u32 %v277, 4294901760
        %v1415 = vsub.f32 %v277, %v1414
        %v1416 = vand.u32 %v1415, 4294901760
        %v1417 = vsub.f32 %v1415, %v1416
        %v1418 = vand.u32 %v1417, 4294901760
        %1419 = vmatprep.subr.mxu0 %v1418
        %v1420 = vand.u32 %v276, 4294901760
        %v1421 = vsub.f32 %v276, %v1420
        %v1422 = vand.u32 %v1421, 4294901760
        %v1423 = vsub.f32 %v1421, %v1422
        %v1424 = vand.u32 %v1423, 4294901760
        %1425 = vmatpush1.msra.mxu0 %v1424
        %v1426 = vand.u32 %v286, 4294901760
        %v1427 = vsub.f32 %v286, %v1426
        %v1428 = vand.u32 %v1427, 4294901760
        %v1429 = vsub.f32 %v1427, %v1428
        %v1430 = vand.u32 %v1429, 4294901760
        %1431 = vmatprep.subr.mxu0 %v1430
        %v1432 = vand.u32 %v285, 4294901760
        %v1433 = vsub.f32 %v285, %v1432
        %v1434 = vand.u32 %v1433, 4294901760
        %v1435 = vsub.f32 %v1433, %v1434
        %v1436 = vand.u32 %v1435, 4294901760
        %1437 = vmatpush1.msra.mxu0 %v1436
        %v1438 = vand.u32 %v295, 4294901760
        %v1439 = vsub.f32 %v295, %v1438
        %v1440 = vand.u32 %v1439, 4294901760
        %v1441 = vsub.f32 %v1439, %v1440
        %v1442 = vand.u32 %v1441, 4294901760
        %1443 = vmatprep.subr.mxu0 %v1442
        %v1444 = vand.u32 %v294, 4294901760
        %v1445 = vsub.f32 %v294, %v1444
        %v1446 = vand.u32 %v1445, 4294901760
        %v1447 = vsub.f32 %v1445, %v1446
        %v1448 = vand.u32 %v1447, 4294901760
        %1449 = vmatpush1.msra.mxu0 %v1448
        %v1450 = vand.u32 %v304, 4294901760
        %v1451 = vsub.f32 %v304, %v1450
        %v1452 = vand.u32 %v1451, 4294901760
        %v1453 = vsub.f32 %v1451, %v1452
        %v1454 = vand.u32 %v1453, 4294901760
        %1455 = vmatprep.subr.mxu0 %v1454
        %v1456 = vand.u32 %v303, 4294901760
        %v1457 = vsub.f32 %v303, %v1456
        %v1458 = vand.u32 %v1457, 4294901760
        %v1459 = vsub.f32 %v1457, %v1458
        %v1460 = vand.u32 %v1459, 4294901760
        %1461 = vmatpush1.msra.mxu0 %v1460
        %v1462 = vand.u32 %v313, 4294901760
        %v1463 = vsub.f32 %v313, %v1462
        %v1464 = vand.u32 %v1463, 4294901760
        %v1465 = vsub.f32 %v1463, %v1464
        %v1466 = vand.u32 %v1465, 4294901760
        %1467 = vmatprep.subr.mxu0 %v1466
        %v1468 = vand.u32 %v312, 4294901760
        %v1469 = vsub.f32 %v312, %v1468
        %v1470 = vand.u32 %v1469, 4294901760
        %v1471 = vsub.f32 %v1469, %v1470
        %v1472 = vand.u32 %v1471, 4294901760
        %1473 = vmatpush1.msra.mxu0 %v1472
        %1474 = vmatprep.subr.mxu0 0.0
        %1475 = vmatpush1.msra.mxu0 0.0
        %1476 = vmatprep.subr.mxu0 0.0
        %1477 = vmatpush1.msra.mxu0 0.0
        %1478 = vmatprep.subr.mxu0 0.0
        %1479 = vmatpush1.msra.mxu0 0.0
        %1480 = vmatprep.subr.mxu0 0.0
        %1481 = vmatpush1.msra.mxu0 0.0
        %1482 = vmatprep.subr.mxu0 0.0
        %1483 = vmatpush1.msra.mxu0 0.0
        %1484 = vmatprep.subr.mxu0 0.0
        %1485 = vmatpush1.msra.mxu0 0.0
        %1486 = vmatprep.subr.mxu0 0.0
        %1487 = vmatpush1.msra.mxu0 0.0
        %1488 = vmatprep.subr.mxu0 0.0
        %1489 = vmatpush1.msra.mxu0 0.0
        %1490 = vmatprep.subr.mxu0 0.0
        %1491 = vmatpush1.msra.mxu0 0.0
        %1492 = vmatprep.subr.mxu0 0.0
        %1493 = vmatpush1.msra.mxu0 0.0
        %1494 = vmatprep.subr.mxu0 0.0
        %1495 = vmatpush1.msra.mxu0 0.0
        %1496 = vmatprep.subr.mxu0 0.0
        %1497 = vmatpush1.msra.mxu0 0.0
        %1498 = vmatprep.subr.mxu0 0.0
        %1499 = vmatpush1.msra.mxu0 0.0
        %1500 = vmatprep.subr.mxu0 0.0
        %1501 = vmatpush1.msra.mxu0 0.0
        %1502 = vmatprep.subr.mxu0 0.0
        %1503 = vmatpush1.msra.mxu0 0.0
        %1504 = vmatprep.subr.mxu0 0.0
        %1505 = vmatpush1.msra.mxu0 0.0
        %1506 = vmatprep.mubr.f32.mxu0 0.0
        %v1507 = vand.u32 %v174, 4294901760
        %1508 = vmatmul.mubr.f32.gmra.mrb[0].mxu0 %v1507
        %v1509 = vpop.f32.mrb[0].mxu0
        %v1510 = vadd.f32 %v1278, %v1509
        %v1511 = vpop.f32.mrb[0].mxu0
        %v1512 = vadd.f32 %v1280, %v1511
        %1513 = vdwg.mxu0
        %v1514 = vand.u32 %v178, 4294901760
        %v1515 = vsub.f32 %v178, %v1514
        %1516 = vmatprep.subr.mxu0 %v1515
        %v1517 = vand.u32 %v177, 4294901760
        %v1518 = vsub.f32 %v177, %v1517
        %1519 = vmatpush1.msra.mxu0 %v1518
        %v1520 = vand.u32 %v187, 4294901760
        %v1521 = vsub.f32 %v187, %v1520
        %1522 = vmatprep.subr.mxu0 %v1521
        %v1523 = vand.u32 %v186, 4294901760
        %v1524 = vsub.f32 %v186, %v1523
        %1525 = vmatpush1.msra.mxu0 %v1524
        %v1526 = vand.u32 %v196, 4294901760
        %v1527 = vsub.f32 %v196, %v1526
        %1528 = vmatprep.subr.mxu0 %v1527
        %v1529 = vand.u32 %v195, 4294901760
        %v1530 = vsub.f32 %v195, %v1529
        %1531 = vmatpush1.msra.mxu0 %v1530
        %v1532 = vand.u32 %v205, 4294901760
        %v1533 = vsub.f32 %v205, %v1532
        %1534 = vmatprep.subr.mxu0 %v1533
        %v1535 = vand.u32 %v204, 4294901760
        %v1536 = vsub.f32 %v204, %v1535
        %1537 = vmatpush1.msra.mxu0 %v1536
        %v1538 = vand.u32 %v214, 4294901760
        %v1539 = vsub.f32 %v214, %v1538
        %1540 = vmatprep.subr.mxu0 %v1539
        %v1541 = vand.u32 %v213, 4294901760
        %v1542 = vsub.f32 %v213, %v1541
        %1543 = vmatpush1.msra.mxu0 %v1542
        %v1544 = vand.u32 %v223, 4294901760
        %v1545 = vsub.f32 %v223, %v1544
        %1546 = vmatprep.subr.mxu0 %v1545
        %v1547 = vand.u32 %v222, 4294901760
        %v1548 = vsub.f32 %v222, %v1547
        %1549 = vmatpush1.msra.mxu0 %v1548
        %v1550 = vand.u32 %v232, 4294901760
        %v1551 = vsub.f32 %v232, %v1550
        %1552 = vmatprep.subr.mxu0 %v1551
        %v1553 = vand.u32 %v231, 4294901760
        %v1554 = vsub.f32 %v231, %v1553
        %1555 = vmatpush1.msra.mxu0 %v1554
        %v1556 = vand.u32 %v241, 4294901760
        %v1557 = vsub.f32 %v241, %v1556
        %1558 = vmatprep.subr.mxu0 %v1557
        %v1559 = vand.u32 %v240, 4294901760
        %v1560 = vsub.f32 %v240, %v1559
        %1561 = vmatpush1.msra.mxu0 %v1560
        %v1562 = vand.u32 %v250, 4294901760
        %v1563 = vsub.f32 %v250, %v1562
        %1564 = vmatprep.subr.mxu0 %v1563
        %v1565 = vand.u32 %v249, 4294901760
        %v1566 = vsub.f32 %v249, %v1565
        %1567 = vmatpush1.msra.mxu0 %v1566
        %v1568 = vand.u32 %v259, 4294901760
        %v1569 = vsub.f32 %v259, %v1568
        %1570 = vmatprep.subr.mxu0 %v1569
        %v1571 = vand.u32 %v258, 4294901760
        %v1572 = vsub.f32 %v258, %v1571
        %1573 = vmatpush1.msra.mxu0 %v1572
        %v1574 = vand.u32 %v268, 4294901760
        %v1575 = vsub.f32 %v268, %v1574
        %1576 = vmatprep.subr.mxu0 %v1575
        %v1577 = vand.u32 %v267, 4294901760
        %v1578 = vsub.f32 %v267, %v1577
        %1579 = vmatpush1.msra.mxu0 %v1578
        %v1580 = vand.u32 %v277, 4294901760
        %v1581 = vsub.f32 %v277, %v1580
        %1582 = vmatprep.subr.mxu0 %v1581
        %v1583 = vand.u32 %v276, 4294901760
        %v1584 = vsub.f32 %v276, %v1583
        %1585 = vmatpush1.msra.mxu0 %v1584
        %v1586 = vand.u32 %v286, 4294901760
        %v1587 = vsub.f32 %v286, %v1586
        %1588 = vmatprep.subr.mxu0 %v1587
        %v1589 = vand.u32 %v285, 4294901760
        %v1590 = vsub.f32 %v285, %v1589
        %1591 = vmatpush1.msra.mxu0 %v1590
        %v1592 = vand.u32 %v295, 4294901760
        %v1593 = vsub.f32 %v295, %v1592
        %1594 = vmatprep.subr.mxu0 %v1593
        %v1595 = vand.u32 %v294, 4294901760
        %v1596 = vsub.f32 %v294, %v1595
        %1597 = vmatpush1.msra.mxu0 %v1596
        %v1598 = vand.u32 %v304, 4294901760
        %v1599 = vsub.f32 %v304, %v1598
        %1600 = vmatprep.subr.mxu0 %v1599
        %v1601 = vand.u32 %v303, 4294901760
        %v1602 = vsub.f32 %v303, %v1601
        %1603 = vmatpush1.msra.mxu0 %v1602
        %v1604 = vand.u32 %v313, 4294901760
        %v1605 = vsub.f32 %v313, %v1604
        %1606 = vmatprep.subr.mxu0 %v1605
        %v1607 = vand.u32 %v312, 4294901760
        %v1608 = vsub.f32 %v312, %v1607
        %1609 = vmatpush1.msra.mxu0 %v1608
        %1610 = vmatprep.subr.mxu0 0.0
        %1611 = vmatpush1.msra.mxu0 0.0
        %1612 = vmatprep.subr.mxu0 0.0
        %1613 = vmatpush1.msra.mxu0 0.0
        %1614 = vmatprep.subr.mxu0 0.0
        %1615 = vmatpush1.msra.mxu0 0.0
        %1616 = vmatprep.subr.mxu0 0.0
        %1617 = vmatpush1.msra.mxu0 0.0
        %1618 = vmatprep.subr.mxu0 0.0
        %1619 = vmatpush1.msra.mxu0 0.0
        %1620 = vmatprep.subr.mxu0 0.0
        %1621 = vmatpush1.msra.mxu0 0.0
        %1622 = vmatprep.subr.mxu0 0.0
        %1623 = vmatpush1.msra.mxu0 0.0
        %1624 = vmatprep.subr.mxu0 0.0
        %1625 = vmatpush1.msra.mxu0 0.0
        %1626 = vmatprep.subr.mxu0 0.0
        %1627 = vmatpush1.msra.mxu0 0.0
        %1628 = vmatprep.subr.mxu0 0.0
        %1629 = vmatpush1.msra.mxu0 0.0
        %1630 = vmatprep.subr.mxu0 0.0
        %1631 = vmatpush1.msra.mxu0 0.0
        %1632 = vmatprep.subr.mxu0 0.0
        %1633 = vmatpush1.msra.mxu0 0.0
        %1634 = vmatprep.subr.mxu0 0.0
        %1635 = vmatpush1.msra.mxu0 0.0
        %1636 = vmatprep.subr.mxu0 0.0
        %1637 = vmatpush1.msra.mxu0 0.0
        %1638 = vmatprep.subr.mxu0 0.0
        %1639 = vmatpush1.msra.mxu0 0.0
        %1640 = vmatprep.subr.mxu0 0.0
        %1641 = vmatpush1.msra.mxu0 0.0
        %1642 = vmatprep.mubr.f32.mxu0 0.0
        %v1643 = vand.u32 %v174, 4294901760
        %v1644 = vsub.f32 %v174, %v1643
        %1645 = vmatmul.mubr.f32.gmra.mrb[0].mxu0 %v1644
        %v1646 = vpop.f32.mrb[0].mxu0
        %v1647 = vadd.f32 %v1510, %v1646
        %v1648 = vpop.f32.mrb[0].mxu0
        %v1649 = vadd.f32 %v1512, %v1648
        %1650 = vdwg.mxu0
        %v1651 = vand.u32 %v178, 4294901760
        %1652 = vmatprep.subr.mxu0 %v1651
        %v1653 = vand.u32 %v177, 4294901760
        %1654 = vmatpush1.msra.mxu0 %v1653
        %v1655 = vand.u32 %v187, 4294901760
        %1656 = vmatprep.subr.mxu0 %v1655
        %v1657 = vand.u32 %v186, 4294901760
        %1658 = vmatpush1.msra.mxu0 %v1657
        %v1659 = vand.u32 %v196, 4294901760
        %1660 = vmatprep.subr.mxu0 %v1659
        %v1661 = vand.u32 %v195, 4294901760
        %1662 = vmatpush1.msra.mxu0 %v1661
        %v1663 = vand.u32 %v205, 4294901760
        %1664 = vmatprep.subr.mxu0 %v1663
        %v1665 = vand.u32 %v204, 4294901760
        %1666 = vmatpush1.msra.mxu0 %v1665
        %v1667 = vand.u32 %v214, 4294901760
        %1668 = vmatprep.subr.mxu0 %v1667
        %v1669 = vand.u32 %v213, 4294901760
        %1670 = vmatpush1.msra.mxu0 %v1669
        %v1671 = vand.u32 %v223, 4294901760
        %1672 = vmatprep.subr.mxu0 %v1671
        %v1673 = vand.u32 %v222, 4294901760
        %1674 = vmatpush1.msra.mxu0 %v1673
        %v1675 = vand.u32 %v232, 4294901760
        %1676 = vmatprep.subr.mxu0 %v1675
        %v1677 = vand.u32 %v231, 4294901760
        %1678 = vmatpush1.msra.mxu0 %v1677
        %v1679 = vand.u32 %v241, 4294901760
        %1680 = vmatprep.subr.mxu0 %v1679
        %v1681 = vand.u32 %v240, 4294901760
        %1682 = vmatpush1.msra.mxu0 %v1681
        %v1683 = vand.u32 %v250, 4294901760
        %1684 = vmatprep.subr.mxu0 %v1683
        %v1685 = vand.u32 %v249, 4294901760
        %1686 = vmatpush1.msra.mxu0 %v1685
        %v1687 = vand.u32 %v259, 4294901760
        %1688 = vmatprep.subr.mxu0 %v1687
        %v1689 = vand.u32 %v258, 4294901760
        %1690 = vmatpush1.msra.mxu0 %v1689
        %v1691 = vand.u32 %v268, 4294901760
        %1692 = vmatprep.subr.mxu0 %v1691
        %v1693 = vand.u32 %v267, 4294901760
        %1694 = vmatpush1.msra.mxu0 %v1693
        %v1695 = vand.u32 %v277, 4294901760
        %1696 = vmatprep.subr.mxu0 %v1695
        %v1697 = vand.u32 %v276, 4294901760
        %1698 = vmatpush1.msra.mxu0 %v1697
        %v1699 = vand.u32 %v286, 4294901760
        %1700 = vmatprep.subr.mxu0 %v1699
        %v1701 = vand.u32 %v285, 4294901760
        %1702 = vmatpush1.msra.mxu0 %v1701
        %v1703 = vand.u32 %v295, 4294901760
        %1704 = vmatprep.subr.mxu0 %v1703
        %v1705 = vand.u32 %v294, 4294901760
        %1706 = vmatpush1.msra.mxu0 %v1705
        %v1707 = vand.u32 %v304, 4294901760
        %1708 = vmatprep.subr.mxu0 %v1707
        %v1709 = vand.u32 %v303, 4294901760
        %1710 = vmatpush1.msra.mxu0 %v1709
        %v1711 = vand.u32 %v313, 4294901760
        %1712 = vmatprep.subr.mxu0 %v1711
        %v1713 = vand.u32 %v312, 4294901760
        %1714 = vmatpush1.msra.mxu0 %v1713
        %1715 = vmatprep.subr.mxu0 0.0
        %1716 = vmatpush1.msra.mxu0 0.0
        %1717 = vmatprep.subr.mxu0 0.0
        %1718 = vmatpush1.msra.mxu0 0.0
        %1719 = vmatprep.subr.mxu0 0.0
        %1720 = vmatpush1.msra.mxu0 0.0
        %1721 = vmatprep.subr.mxu0 0.0
        %1722 = vmatpush1.msra.mxu0 0.0
        %1723 = vmatprep.subr.mxu0 0.0
        %1724 = vmatpush1.msra.mxu0 0.0
        %1725 = vmatprep.subr.mxu0 0.0
        %1726 = vmatpush1.msra.mxu0 0.0
        %1727 = vmatprep.subr.mxu0 0.0
        %1728 = vmatpush1.msra.mxu0 0.0
        %1729 = vmatprep.subr.mxu0 0.0
        %1730 = vmatpush1.msra.mxu0 0.0
        %1731 = vmatprep.subr.mxu0 0.0
        %1732 = vmatpush1.msra.mxu0 0.0
        %1733 = vmatprep.subr.mxu0 0.0
        %1734 = vmatpush1.msra.mxu0 0.0
        %1735 = vmatprep.subr.mxu0 0.0
        %1736 = vmatpush1.msra.mxu0 0.0
        %1737 = vmatprep.subr.mxu0 0.0
        %1738 = vmatpush1.msra.mxu0 0.0
        %1739 = vmatprep.subr.mxu0 0.0
        %1740 = vmatpush1.msra.mxu0 0.0
        %1741 = vmatprep.subr.mxu0 0.0
        %1742 = vmatpush1.msra.mxu0 0.0
        %1743 = vmatprep.subr.mxu0 0.0
        %1744 = vmatpush1.msra.mxu0 0.0
        %1745 = vmatprep.subr.mxu0 0.0
        %1746 = vmatpush1.msra.mxu0 0.0
        %1747 = vmatprep.mubr.f32.mxu0 0.0
        %v1748 = vand.u32 %v174, 4294901760
        %v1749 = vsub.f32 %v174, %v1748
        %v1750 = vand.u32 %v1749, 4294901760
        %1751 = vmatmul.mubr.f32.gmra.mrb[0].mxu0 %v1750
        %v1752 = vpop.f32.mrb[0].mxu0
        %v1753 = vadd.f32 %v1647, %v1752
        %v1754 = vpop.f32.mrb[0].mxu0
        %v1755 = vadd.f32 %v1649, %v1754
        %1756 = vdwg.mxu0
        %v1757 = vand.u32 %v178, 4294901760
        %v1758 = vsub.f32 %v178, %v1757
        %v1759 = vand.u32 %v1758, 4294901760
        %1760 = vmatprep.subr.mxu0 %v1759
        %v1761 = vand.u32 %v177, 4294901760
        %v1762 = vsub.f32 %v177, %v1761
        %v1763 = vand.u32 %v1762, 4294901760
        %1764 = vmatpush1.msra.mxu0 %v1763
        %v1765 = vand.u32 %v187, 4294901760
        %v1766 = vsub.f32 %v187, %v1765
        %v1767 = vand.u32 %v1766, 4294901760
        %1768 = vmatprep.subr.mxu0 %v1767
        %v1769 = vand.u32 %v186, 4294901760
        %v1770 = vsub.f32 %v186, %v1769
        %v1771 = vand.u32 %v1770, 4294901760
        %1772 = vmatpush1.msra.mxu0 %v1771
        %v1773 = vand.u32 %v196, 4294901760
        %v1774 = vsub.f32 %v196, %v1773
        %v1775 = vand.u32 %v1774, 4294901760
        %1776 = vmatprep.subr.mxu0 %v1775
        %v1777 = vand.u32 %v195, 4294901760
        %v1778 = vsub.f32 %v195, %v1777
        %v1779 = vand.u32 %v1778, 4294901760
        %1780 = vmatpush1.msra.mxu0 %v1779
        %v1781 = vand.u32 %v205, 4294901760
        %v1782 = vsub.f32 %v205, %v1781
        %v1783 = vand.u32 %v1782, 4294901760
        %1784 = vmatprep.subr.mxu0 %v1783
        %v1785 = vand.u32 %v204, 4294901760
        %v1786 = vsub.f32 %v204, %v1785
        %v1787 = vand.u32 %v1786, 4294901760
        %1788 = vmatpush1.msra.mxu0 %v1787
        %v1789 = vand.u32 %v214, 4294901760
        %v1790 = vsub.f32 %v214, %v1789
        %v1791 = vand.u32 %v1790, 4294901760
        %1792 = vmatprep.subr.mxu0 %v1791
        %v1793 = vand.u32 %v213, 4294901760
        %v1794 = vsub.f32 %v213, %v1793
        %v1795 = vand.u32 %v1794, 4294901760
        %1796 = vmatpush1.msra.mxu0 %v1795
        %v1797 = vand.u32 %v223, 4294901760
        %v1798 = vsub.f32 %v223, %v1797
        %v1799 = vand.u32 %v1798, 4294901760
        %1800 = vmatprep.subr.mxu0 %v1799
        %v1801 = vand.u32 %v222, 4294901760
        %v1802 = vsub.f32 %v222, %v1801
        %v1803 = vand.u32 %v1802, 4294901760
        %1804 = vmatpush1.msra.mxu0 %v1803
        %v1805 = vand.u32 %v232, 4294901760
        %v1806 = vsub.f32 %v232, %v1805
        %v1807 = vand.u32 %v1806, 4294901760
        %1808 = vmatprep.subr.mxu0 %v1807
        %v1809 = vand.u32 %v231, 4294901760
        %v1810 = vsub.f32 %v231, %v1809
        %v1811 = vand.u32 %v1810, 4294901760
        %1812 = vmatpush1.msra.mxu0 %v1811
        %v1813 = vand.u32 %v241, 4294901760
        %v1814 = vsub.f32 %v241, %v1813
        %v1815 = vand.u32 %v1814, 4294901760
        %1816 = vmatprep.subr.mxu0 %v1815
        %v1817 = vand.u32 %v240, 4294901760
        %v1818 = vsub.f32 %v240, %v1817
        %v1819 = vand.u32 %v1818, 4294901760
        %1820 = vmatpush1.msra.mxu0 %v1819
        %v1821 = vand.u32 %v250, 4294901760
        %v1822 = vsub.f32 %v250, %v1821
        %v1823 = vand.u32 %v1822, 4294901760
        %1824 = vmatprep.subr.mxu0 %v1823
        %v1825 = vand.u32 %v249, 4294901760
        %v1826 = vsub.f32 %v249, %v1825
        %v1827 = vand.u32 %v1826, 4294901760
        %1828 = vmatpush1.msra.mxu0 %v1827
        %v1829 = vand.u32 %v259, 4294901760
        %v1830 = vsub.f32 %v259, %v1829
        %v1831 = vand.u32 %v1830, 4294901760
        %1832 = vmatprep.subr.mxu0 %v1831
        %v1833 = vand.u32 %v258, 4294901760
        %v1834 = vsub.f32 %v258, %v1833
        %v1835 = vand.u32 %v1834, 4294901760
        %1836 = vmatpush1.msra.mxu0 %v1835
        %v1837 = vand.u32 %v268, 4294901760
        %v1838 = vsub.f32 %v268, %v1837
        %v1839 = vand.u32 %v1838, 4294901760
        %1840 = vmatprep.subr.mxu0 %v1839
        %v1841 = vand.u32 %v267, 4294901760
        %v1842 = vsub.f32 %v267, %v1841
        %v1843 = vand.u32 %v1842, 4294901760
        %1844 = vmatpush1.msra.mxu0 %v1843
        %v1845 = vand.u32 %v277, 4294901760
        %v1846 = vsub.f32 %v277, %v1845
        %v1847 = vand.u32 %v1846, 4294901760
        %1848 = vmatprep.subr.mxu0 %v1847
        %v1849 = vand.u32 %v276, 4294901760
        %v1850 = vsub.f32 %v276, %v1849
        %v1851 = vand.u32 %v1850, 4294901760
        %1852 = vmatpush1.msra.mxu0 %v1851
        %v1853 = vand.u32 %v286, 4294901760
        %v1854 = vsub.f32 %v286, %v1853
        %v1855 = vand.u32 %v1854, 4294901760
        %1856 = vmatprep.subr.mxu0 %v1855
        %v1857 = vand.u32 %v285, 4294901760
        %v1858 = vsub.f32 %v285, %v1857
        %v1859 = vand.u32 %v1858, 4294901760
        %1860 = vmatpush1.msra.mxu0 %v1859
        %v1861 = vand.u32 %v295, 4294901760
        %v1862 = vsub.f32 %v295, %v1861
        %v1863 = vand.u32 %v1862, 4294901760
        %1864 = vmatprep.subr.mxu0 %v1863
        %v1865 = vand.u32 %v294, 4294901760
        %v1866 = vsub.f32 %v294, %v1865
        %v1867 = vand.u32 %v1866, 4294901760
        %1868 = vmatpush1.msra.mxu0 %v1867
        %v1869 = vand.u32 %v304, 4294901760
        %v1870 = vsub.f32 %v304, %v1869
        %v1871 = vand.u32 %v1870, 4294901760
        %1872 = vmatprep.subr.mxu0 %v1871
        %v1873 = vand.u32 %v303, 4294901760
        %v1874 = vsub.f32 %v303, %v1873
        %v1875 = vand.u32 %v1874, 4294901760
        %1876 = vmatpush1.msra.mxu0 %v1875
        %v1877 = vand.u32 %v313, 4294901760
        %v1878 = vsub.f32 %v313, %v1877
        %v1879 = vand.u32 %v1878, 4294901760
        %1880 = vmatprep.subr.mxu0 %v1879
        %v1881 = vand.u32 %v312, 4294901760
        %v1882 = vsub.f32 %v312, %v1881
        %v1883 = vand.u32 %v1882, 4294901760
        %1884 = vmatpush1.msra.mxu0 %v1883
        %1885 = vmatprep.subr.mxu0 0.0
        %1886 = vmatpush1.msra.mxu0 0.0
        %1887 = vmatprep.subr.mxu0 0.0
        %1888 = vmatpush1.msra.mxu0 0.0
        %1889 = vmatprep.subr.mxu0 0.0
        %1890 = vmatpush1.msra.mxu0 0.0
        %1891 = vmatprep.subr.mxu0 0.0
        %1892 = vmatpush1.msra.mxu0 0.0
        %1893 = vmatprep.subr.mxu0 0.0
        %1894 = vmatpush1.msra.mxu0 0.0
        %1895 = vmatprep.subr.mxu0 0.0
        %1896 = vmatpush1.msra.mxu0 0.0
        %1897 = vmatprep.subr.mxu0 0.0
        %1898 = vmatpush1.msra.mxu0 0.0
        %1899 = vmatprep.subr.mxu0 0.0
        %1900 = vmatpush1.msra.mxu0 0.0
        %1901 = vmatprep.subr.mxu0 0.0
        %1902 = vmatpush1.msra.mxu0 0.0
        %1903 = vmatprep.subr.mxu0 0.0
        %1904 = vmatpush1.msra.mxu0 0.0
        %1905 = vmatprep.subr.mxu0 0.0
        %1906 = vmatpush1.msra.mxu0 0.0
        %1907 = vmatprep.subr.mxu0 0.0
        %1908 = vmatpush1.msra.mxu0 0.0
        %1909 = vmatprep.subr.mxu0 0.0
        %1910 = vmatpush1.msra.mxu0 0.0
        %1911 = vmatprep.subr.mxu0 0.0
        %1912 = vmatpush1.msra.mxu0 0.0
        %1913 = vmatprep.subr.mxu0 0.0
        %1914 = vmatpush1.msra.mxu0 0.0
        %1915 = vmatprep.subr.mxu0 0.0
        %1916 = vmatpush1.msra.mxu0 0.0
        %1917 = vmatprep.mubr.f32.mxu0 0.0
        %v1918 = vand.u32 %v174, 4294901760
        %1919 = vmatmul.mubr.f32.gmra.mrb[0].mxu0 %v1918
        %v1920 = vpop.f32.mrb[0].mxu0
        %v1921 = vadd.f32 %v1753, %v1920
        %v1922 = vpop.f32.mrb[0].mxu0
        %v1923 = vadd.f32 %v1755, %v1922
        %1924 = vdwg.mxu0
        %v1925 = vand.u32 %v178, 4294901760
        %1926 = vmatprep.subr.mxu0 %v1925
        %v1927 = vand.u32 %v177, 4294901760
        %1928 = vmatpush1.msra.mxu0 %v1927
        %v1929 = vand.u32 %v187, 4294901760
        %1930 = vmatprep.subr.mxu0 %v1929
        %v1931 = vand.u32 %v186, 4294901760
        %1932 = vmatpush1.msra.mxu0 %v1931
        %v1933 = vand.u32 %v196, 4294901760
        %1934 = vmatprep.subr.mxu0 %v1933
        %v1935 = vand.u32 %v195, 4294901760
        %1936 = vmatpush1.msra.mxu0 %v1935
        %v1937 = vand.u32 %v205, 4294901760
        %1938 = vmatprep.subr.mxu0 %v1937
        %v1939 = vand.u32 %v204, 4294901760
        %1940 = vmatpush1.msra.mxu0 %v1939
        %v1941 = vand.u32 %v214, 4294901760
        %1942 = vmatprep.subr.mxu0 %v1941
        %v1943 = vand.u32 %v213, 4294901760
        %1944 = vmatpush1.msra.mxu0 %v1943
        %v1945 = vand.u32 %v223, 4294901760
        %1946 = vmatprep.subr.mxu0 %v1945
        %v1947 = vand.u32 %v222, 4294901760
        %1948 = vmatpush1.msra.mxu0 %v1947
        %v1949 = vand.u32 %v232, 4294901760
        %1950 = vmatprep.subr.mxu0 %v1949
        %v1951 = vand.u32 %v231, 4294901760
        %1952 = vmatpush1.msra.mxu0 %v1951
        %v1953 = vand.u32 %v241, 4294901760
        %1954 = vmatprep.subr.mxu0 %v1953
        %v1955 = vand.u32 %v240, 4294901760
        %1956 = vmatpush1.msra.mxu0 %v1955
        %v1957 = vand.u32 %v250, 4294901760
        %1958 = vmatprep.subr.mxu0 %v1957
        %v1959 = vand.u32 %v249, 4294901760
        %1960 = vmatpush1.msra.mxu0 %v1959
        %v1961 = vand.u32 %v259, 4294901760
        %1962 = vmatprep.subr.mxu0 %v1961
        %v1963 = vand.u32 %v258, 4294901760
        %1964 = vmatpush1.msra.mxu0 %v1963
        %v1965 = vand.u32 %v268, 4294901760
        %1966 = vmatprep.subr.mxu0 %v1965
        %v1967 = vand.u32 %v267, 4294901760
        %1968 = vmatpush1.msra.mxu0 %v1967
        %v1969 = vand.u32 %v277, 4294901760
        %1970 = vmatprep.subr.mxu0 %v1969
        %v1971 = vand.u32 %v276, 4294901760
        %1972 = vmatpush1.msra.mxu0 %v1971
        %v1973 = vand.u32 %v286, 4294901760
        %1974 = vmatprep.subr.mxu0 %v1973
        %v1975 = vand.u32 %v285, 4294901760
        %1976 = vmatpush1.msra.mxu0 %v1975
        %v1977 = vand.u32 %v295, 4294901760
        %1978 = vmatprep.subr.mxu0 %v1977
        %v1979 = vand.u32 %v294, 4294901760
        %1980 = vmatpush1.msra.mxu0 %v1979
        %v1981 = vand.u32 %v304, 4294901760
        %1982 = vmatprep.subr.mxu0 %v1981
        %v1983 = vand.u32 %v303, 4294901760
        %1984 = vmatpush1.msra.mxu0 %v1983
        %v1985 = vand.u32 %v313, 4294901760
        %1986 = vmatprep.subr.mxu0 %v1985
        %v1987 = vand.u32 %v312, 4294901760
        %1988 = vmatpush1.msra.mxu0 %v1987
        %1989 = vmatprep.subr.mxu0 0.0
        %1990 = vmatpush1.msra.mxu0 0.0
        %1991 = vmatprep.subr.mxu0 0.0
        %1992 = vmatpush1.msra.mxu0 0.0
        %1993 = vmatprep.subr.mxu0 0.0
        %1994 = vmatpush1.msra.mxu0 0.0
        %1995 = vmatprep.subr.mxu0 0.0
        %1996 = vmatpush1.msra.mxu0 0.0
        %1997 = vmatprep.subr.mxu0 0.0
        %1998 = vmatpush1.msra.mxu0 0.0
        %1999 = vmatprep.subr.mxu0 0.0
        %2000 = vmatpush1.msra.mxu0 0.0
        %2001 = vmatprep.subr.mxu0 0.0
        %2002 = vmatpush1.msra.mxu0 0.0
        %2003 = vmatprep.subr.mxu0 0.0
        %2004 = vmatpush1.msra.mxu0 0.0
        %2005 = vmatprep.subr.mxu0 0.0
        %2006 = vmatpush1.msra.mxu0 0.0
        %2007 = vmatprep.subr.mxu0 0.0
        %2008 = vmatpush1.msra.mxu0 0.0
        %2009 = vmatprep.subr.mxu0 0.0
        %2010 = vmatpush1.msra.mxu0 0.0
        %2011 = vmatprep.subr.mxu0 0.0
        %2012 = vmatpush1.msra.mxu0 0.0
        %2013 = vmatprep.subr.mxu0 0.0
        %2014 = vmatpush1.msra.mxu0 0.0
        %2015 = vmatprep.subr.mxu0 0.0
        %2016 = vmatpush1.msra.mxu0 0.0
        %2017 = vmatprep.subr.mxu0 0.0
        %2018 = vmatpush1.msra.mxu0 0.0
        %2019 = vmatprep.subr.mxu0 0.0
        %2020 = vmatpush1.msra.mxu0 0.0
        %2021 = vmatprep.mubr.f32.mxu0 0.0
        %v2022 = vand.u32 %v174, 4294901760
        %2023 = vmatmul.mubr.f32.gmra.mrb[0].mxu0 %v2022
        %v2024 = vpop.f32.mrb[0].mxu0
        %v2025 = vadd.f32 %v1921, %v2024
        %v2026 = vpop.f32.mrb[0].mxu0
        %v2027 = vadd.f32 %v1923, %v2026
        %2028 = vdwg.mxu0
        %v2029 = vand.u32 %v180, 4294901760
        %2030 = vmatprep.subr.mxu0 %v2029
        %v2031 = vand.u32 %v179, 4294901760
        %2032 = vmatpush1.msra.mxu0 %v2031
        %v2033 = vand.u32 %v189, 4294901760
        %2034 = vmatprep.subr.mxu0 %v2033
        %v2035 = vand.u32 %v188, 4294901760
        %2036 = vmatpush1.msra.mxu0 %v2035
        %v2037 = vand.u32 %v198, 4294901760
        %2038 = vmatprep.subr.mxu0 %v2037
        %v2039 = vand.u32 %v197, 4294901760
        %2040 = vmatpush1.msra.mxu0 %v2039
        %v2041 = vand.u32 %v207, 4294901760
        %2042 = vmatprep.subr.mxu0 %v2041
        %v2043 = vand.u32 %v206, 4294901760
        %2044 = vmatpush1.msra.mxu0 %v2043
        %v2045 = vand.u32 %v216, 4294901760
        %2046 = vmatprep.subr.mxu0 %v2045
        %v2047 = vand.u32 %v215, 4294901760
        %2048 = vmatpush1.msra.mxu0 %v2047
        %v2049 = vand.u32 %v225, 4294901760
        %2050 = vmatprep.subr.mxu0 %v2049
        %v2051 = vand.u32 %v224, 4294901760
        %2052 = vmatpush1.msra.mxu0 %v2051
        %v2053 = vand.u32 %v234, 4294901760
        %2054 = vmatprep.subr.mxu0 %v2053
        %v2055 = vand.u32 %v233, 4294901760
        %2056 = vmatpush1.msra.mxu0 %v2055
        %v2057 = vand.u32 %v243, 4294901760
        %2058 = vmatprep.subr.mxu0 %v2057
        %v2059 = vand.u32 %v242, 4294901760
        %2060 = vmatpush1.msra.mxu0 %v2059
        %v2061 = vand.u32 %v252, 4294901760
        %2062 = vmatprep.subr.mxu0 %v2061
        %v2063 = vand.u32 %v251, 4294901760
        %2064 = vmatpush1.msra.mxu0 %v2063
        %v2065 = vand.u32 %v261, 4294901760
        %2066 = vmatprep.subr.mxu0 %v2065
        %v2067 = vand.u32 %v260, 4294901760
        %2068 = vmatpush1.msra.mxu0 %v2067
        %v2069 = vand.u32 %v270, 4294901760
        %2070 = vmatprep.subr.mxu0 %v2069
        %v2071 = vand.u32 %v269, 4294901760
        %2072 = vmatpush1.msra.mxu0 %v2071
        %v2073 = vand.u32 %v279, 4294901760
        %2074 = vmatprep.subr.mxu0 %v2073
        %v2075 = vand.u32 %v278, 4294901760
        %2076 = vmatpush1.msra.mxu0 %v2075
        %v2077 = vand.u32 %v288, 4294901760
        %2078 = vmatprep.subr.mxu0 %v2077
        %v2079 = vand.u32 %v287, 4294901760
        %2080 = vmatpush1.msra.mxu0 %v2079
        %v2081 = vand.u32 %v297, 4294901760
        %2082 = vmatprep.subr.mxu0 %v2081
        %v2083 = vand.u32 %v296, 4294901760
        %2084 = vmatpush1.msra.mxu0 %v2083
        %v2085 = vand.u32 %v306, 4294901760
        %2086 = vmatprep.subr.mxu0 %v2085
        %v2087 = vand.u32 %v305, 4294901760
        %2088 = vmatpush1.msra.mxu0 %v2087
        %v2089 = vand.u32 %v315, 4294901760
        %2090 = vmatprep.subr.mxu0 %v2089
        %v2091 = vand.u32 %v314, 4294901760
        %2092 = vmatpush1.msra.mxu0 %v2091
        %2093 = vmatprep.subr.mxu0 0.0
        %2094 = vmatpush1.msra.mxu0 0.0
        %2095 = vmatprep.subr.mxu0 0.0
        %2096 = vmatpush1.msra.mxu0 0.0
        %2097 = vmatprep.subr.mxu0 0.0
        %2098 = vmatpush1.msra.mxu0 0.0
        %2099 = vmatprep.subr.mxu0 0.0
        %2100 = vmatpush1.msra.mxu0 0.0
        %2101 = vmatprep.subr.mxu0 0.0
        %2102 = vmatpush1.msra.mxu0 0.0
        %2103 = vmatprep.subr.mxu0 0.0
        %2104 = vmatpush1.msra.mxu0 0.0
        %2105 = vmatprep.subr.mxu0 0.0
        %2106 = vmatpush1.msra.mxu0 0.0
        %2107 = vmatprep.subr.mxu0 0.0
        %2108 = vmatpush1.msra.mxu0 0.0
        %2109 = vmatprep.subr.mxu0 0.0
        %2110 = vmatpush1.msra.mxu0 0.0
        %2111 = vmatprep.subr.mxu0 0.0
        %2112 = vmatpush1.msra.mxu0 0.0
        %2113 = vmatprep.subr.mxu0 0.0
        %2114 = vmatpush1.msra.mxu0 0.0
        %2115 = vmatprep.subr.mxu0 0.0
        %2116 = vmatpush1.msra.mxu0 0.0
        %2117 = vmatprep.subr.mxu0 0.0
        %2118 = vmatpush1.msra.mxu0 0.0
        %2119 = vmatprep.subr.mxu0 0.0
        %2120 = vmatpush1.msra.mxu0 0.0
        %2121 = vmatprep.subr.mxu0 0.0
        %2122 = vmatpush1.msra.mxu0 0.0
        %2123 = vmatprep.subr.mxu0 0.0
        %2124 = vmatpush1.msra.mxu0 0.0
        %2125 = vmatprep.mubr.f32.mxu0 0.0
        %v2126 = vand.u32 %v174, 4294901760
        %v2127 = vsub.f32 %v174, %v2126
        %v2128 = vand.u32 %v2127, 4294901760
        %v2129 = vsub.f32 %v2127, %v2128
        %v2130 = vand.u32 %v2129, 4294901760
        %2131 = vmatmul.mubr.f32.gmra.mrb[0].mxu0 %v2130
        %v2132 = vpop.f32.mrb[0].mxu0
        %v2133 = vadd.f32 0.0, %v2132
        %v2134 = vpop.f32.mrb[0].mxu0
        %v2135 = vadd.f32 0.0, %v2134
        %2136 = vdwg.mxu0
        %v2137 = vand.u32 %v180, 4294901760
        %v2138 = vsub.f32 %v180, %v2137
        %v2139 = vand.u32 %v2138, 4294901760
        %v2140 = vsub.f32 %v2138, %v2139
        %v2141 = vand.u32 %v2140, 4294901760
        %2142 = vmatprep.subr.mxu0 %v2141
        %v2143 = vand.u32 %v179, 4294901760
        %v2144 = vsub.f32 %v179, %v2143
        %v2145 = vand.u32 %v2144, 4294901760
        %v2146 = vsub.f32 %v2144, %v2145
        %v2147 = vand.u32 %v2146, 4294901760
        %2148 = vmatpush1.msra.mxu0 %v2147
        %v2149 = vand.u32 %v189, 4294901760
        %v2150 = vsub.f32 %v189, %v2149
        %v2151 = vand.u32 %v2150, 4294901760
        %v2152 = vsub.f32 %v2150, %v2151
        %v2153 = vand.u32 %v2152, 4294901760
        %2154 = vmatprep.subr.mxu0 %v2153
        %v2155 = vand.u32 %v188, 4294901760
        %v2156 = vsub.f32 %v188, %v2155
        %v2157 = vand.u32 %v2156, 4294901760
        %v2158 = vsub.f32 %v2156, %v2157
        %v2159 = vand.u32 %v2158, 4294901760
        %2160 = vmatpush1.msra.mxu0 %v2159
        %v2161 = vand.u32 %v198, 4294901760
        %v2162 = vsub.f32 %v198, %v2161
        %v2163 = vand.u32 %v2162, 4294901760
        %v2164 = vsub.f32 %v2162, %v2163
        %v2165 = vand.u32 %v2164, 4294901760
        %2166 = vmatprep.subr.mxu0 %v2165
        %v2167 = vand.u32 %v197, 4294901760
        %v2168 = vsub.f32 %v197, %v2167
        %v2169 = vand.u32 %v2168, 4294901760
        %v2170 = vsub.f32 %v2168, %v2169
        %v2171 = vand.u32 %v2170, 4294901760
        %2172 = vmatpush1.msra.mxu0 %v2171
        %v2173 = vand.u32 %v207, 4294901760
        %v2174 = vsub.f32 %v207, %v2173
        %v2175 = vand.u32 %v2174, 4294901760
        %v2176 = vsub.f32 %v2174, %v2175
        %v2177 = vand.u32 %v2176, 4294901760
        %2178 = vmatprep.subr.mxu0 %v2177
        %v2179 = vand.u32 %v206, 4294901760
        %v2180 = vsub.f32 %v206, %v2179
        %v2181 = vand.u32 %v2180, 4294901760
        %v2182 = vsub.f32 %v2180, %v2181
        %v2183 = vand.u32 %v2182, 4294901760
        %2184 = vmatpush1.msra.mxu0 %v2183
        %v2185 = vand.u32 %v216, 4294901760
        %v2186 = vsub.f32 %v216, %v2185
        %v2187 = vand.u32 %v2186, 4294901760
        %v2188 = vsub.f32 %v2186, %v2187
        %v2189 = vand.u32 %v2188, 4294901760
        %2190 = vmatprep.subr.mxu0 %v2189
        %v2191 = vand.u32 %v215, 4294901760
        %v2192 = vsub.f32 %v215, %v2191
        %v2193 = vand.u32 %v2192, 4294901760
        %v2194 = vsub.f32 %v2192, %v2193
        %v2195 = vand.u32 %v2194, 4294901760
        %2196 = vmatpush1.msra.mxu0 %v2195
        %v2197 = vand.u32 %v225, 4294901760
        %v2198 = vsub.f32 %v225, %v2197
        %v2199 = vand.u32 %v2198, 4294901760
        %v2200 = vsub.f32 %v2198, %v2199
        %v2201 = vand.u32 %v2200, 4294901760
        %2202 = vmatprep.subr.mxu0 %v2201
        %v2203 = vand.u32 %v224, 4294901760
        %v2204 = vsub.f32 %v224, %v2203
        %v2205 = vand.u32 %v2204, 4294901760
        %v2206 = vsub.f32 %v2204, %v2205
        %v2207 = vand.u32 %v2206, 4294901760
        %2208 = vmatpush1.msra.mxu0 %v2207
        %v2209 = vand.u32 %v234, 4294901760
        %v2210 = vsub.f32 %v234, %v2209
        %v2211 = vand.u32 %v2210, 4294901760
        %v2212 = vsub.f32 %v2210, %v2211
        %v2213 = vand.u32 %v2212, 4294901760
        %2214 = vmatprep.subr.mxu0 %v2213
        %v2215 = vand.u32 %v233, 4294901760
        %v2216 = vsub.f32 %v233, %v2215
        %v2217 = vand.u32 %v2216, 4294901760
        %v2218 = vsub.f32 %v2216, %v2217
        %v2219 = vand.u32 %v2218, 4294901760
        %2220 = vmatpush1.msra.mxu0 %v2219
        %v2221 = vand.u32 %v243, 4294901760
        %v2222 = vsub.f32 %v243, %v2221
        %v2223 = vand.u32 %v2222, 4294901760
        %v2224 = vsub.f32 %v2222, %v2223
        %v2225 = vand.u32 %v2224, 4294901760
        %2226 = vmatprep.subr.mxu0 %v2225
        %v2227 = vand.u32 %v242, 4294901760
        %v2228 = vsub.f32 %v242, %v2227
        %v2229 = vand.u32 %v2228, 4294901760
        %v2230 = vsub.f32 %v2228, %v2229
        %v2231 = vand.u32 %v2230, 4294901760
        %2232 = vmatpush1.msra.mxu0 %v2231
        %v2233 = vand.u32 %v252, 4294901760
        %v2234 = vsub.f32 %v252, %v2233
        %v2235 = vand.u32 %v2234, 4294901760
        %v2236 = vsub.f32 %v2234, %v2235
        %v2237 = vand.u32 %v2236, 4294901760
        %2238 = vmatprep.subr.mxu0 %v2237
        %v2239 = vand.u32 %v251, 4294901760
        %v2240 = vsub.f32 %v251, %v2239
        %v2241 = vand.u32 %v2240, 4294901760
        %v2242 = vsub.f32 %v2240, %v2241
        %v2243 = vand.u32 %v2242, 4294901760
        %2244 = vmatpush1.msra.mxu0 %v2243
        %v2245 = vand.u32 %v261, 4294901760
        %v2246 = vsub.f32 %v261, %v2245
        %v2247 = vand.u32 %v2246, 4294901760
        %v2248 = vsub.f32 %v2246, %v2247
        %v2249 = vand.u32 %v2248, 4294901760
        %2250 = vmatprep.subr.mxu0 %v2249
        %v2251 = vand.u32 %v260, 4294901760
        %v2252 = vsub.f32 %v260, %v2251
        %v2253 = vand.u32 %v2252, 4294901760
        %v2254 = vsub.f32 %v2252, %v2253
        %v2255 = vand.u32 %v2254, 4294901760
        %2256 = vmatpush1.msra.mxu0 %v2255
        %v2257 = vand.u32 %v270, 4294901760
        %v2258 = vsub.f32 %v270, %v2257
        %v2259 = vand.u32 %v2258, 4294901760
        %v2260 = vsub.f32 %v2258, %v2259
        %v2261 = vand.u32 %v2260, 4294901760
        %2262 = vmatprep.subr.mxu0 %v2261
        %v2263 = vand.u32 %v269, 4294901760
        %v2264 = vsub.f32 %v269, %v2263
        %v2265 = vand.u32 %v2264, 4294901760
        %v2266 = vsub.f32 %v2264, %v2265
        %v2267 = vand.u32 %v2266, 4294901760
        %2268 = vmatpush1.msra.mxu0 %v2267
        %v2269 = vand.u32 %v279, 4294901760
        %v2270 = vsub.f32 %v279, %v2269
        %v2271 = vand.u32 %v2270, 4294901760
        %v2272 = vsub.f32 %v2270, %v2271
        %v2273 = vand.u32 %v2272, 4294901760
        %2274 = vmatprep.subr.mxu0 %v2273
        %v2275 = vand.u32 %v278, 4294901760
        %v2276 = vsub.f32 %v278, %v2275
        %v2277 = vand.u32 %v2276, 4294901760
        %v2278 = vsub.f32 %v2276, %v2277
        %v2279 = vand.u32 %v2278, 4294901760
        %2280 = vmatpush1.msra.mxu0 %v2279
        %v2281 = vand.u32 %v288, 4294901760
        %v2282 = vsub.f32 %v288, %v2281
        %v2283 = vand.u32 %v2282, 4294901760
        %v2284 = vsub.f32 %v2282, %v2283
        %v2285 = vand.u32 %v2284, 4294901760
        %2286 = vmatprep.subr.mxu0 %v2285
        %v2287 = vand.u32 %v287, 4294901760
        %v2288 = vsub.f32 %v287, %v2287
        %v2289 = vand.u32 %v2288, 4294901760
        %v2290 = vsub.f32 %v2288, %v2289
        %v2291 = vand.u32 %v2290, 4294901760
        %2292 = vmatpush1.msra.mxu0 %v2291
        %v2293 = vand.u32 %v297, 4294901760
        %v2294 = vsub.f32 %v297, %v2293
        %v2295 = vand.u32 %v2294, 4294901760
        %v2296 = vsub.f32 %v2294, %v2295
        %v2297 = vand.u32 %v2296, 4294901760
        %2298 = vmatprep.subr.mxu0 %v2297
        %v2299 = vand.u32 %v296, 4294901760
        %v2300 = vsub.f32 %v296, %v2299
        %v2301 = vand.u32 %v2300, 4294901760
        %v2302 = vsub.f32 %v2300, %v2301
        %v2303 = vand.u32 %v2302, 4294901760
        %2304 = vmatpush1.msra.mxu0 %v2303
        %v2305 = vand.u32 %v306, 4294901760
        %v2306 = vsub.f32 %v306, %v2305
        %v2307 = vand.u32 %v2306, 4294901760
        %v2308 = vsub.f32 %v2306, %v2307
        %v2309 = vand.u32 %v2308, 4294901760
        %2310 = vmatprep.subr.mxu0 %v2309
        %v2311 = vand.u32 %v305, 4294901760
        %v2312 = vsub.f32 %v305, %v2311
        %v2313 = vand.u32 %v2312, 4294901760
        %v2314 = vsub.f32 %v2312, %v2313
        %v2315 = vand.u32 %v2314, 4294901760
        %2316 = vmatpush1.msra.mxu0 %v2315
        %v2317 = vand.u32 %v315, 4294901760
        %v2318 = vsub.f32 %v315, %v2317
        %v2319 = vand.u32 %v2318, 4294901760
        %v2320 = vsub.f32 %v2318, %v2319
        %v2321 = vand.u32 %v2320, 4294901760
        %2322 = vmatprep.subr.mxu0 %v2321
        %v2323 = vand.u32 %v314, 4294901760
        %v2324 = vsub.f32 %v314, %v2323
        %v2325 = vand.u32 %v2324, 4294901760
        %v2326 = vsub.f32 %v2324, %v2325
        %v2327 = vand.u32 %v2326, 4294901760
        %2328 = vmatpush1.msra.mxu0 %v2327
        %2329 = vmatprep.subr.mxu0 0.0
        %2330 = vmatpush1.msra.mxu0 0.0
        %2331 = vmatprep.subr.mxu0 0.0
        %2332 = vmatpush1.msra.mxu0 0.0
        %2333 = vmatprep.subr.mxu0 0.0
        %2334 = vmatpush1.msra.mxu0 0.0
        %2335 = vmatprep.subr.mxu0 0.0
        %2336 = vmatpush1.msra.mxu0 0.0
        %2337 = vmatprep.subr.mxu0 0.0
        %2338 = vmatpush1.msra.mxu0 0.0
        %2339 = vmatprep.subr.mxu0 0.0
        %2340 = vmatpush1.msra.mxu0 0.0
        %2341 = vmatprep.subr.mxu0 0.0
        %2342 = vmatpush1.msra.mxu0 0.0
        %2343 = vmatprep.subr.mxu0 0.0
        %2344 = vmatpush1.msra.mxu0 0.0
        %2345 = vmatprep.subr.mxu0 0.0
        %2346 = vmatpush1.msra.mxu0 0.0
        %2347 = vmatprep.subr.mxu0 0.0
        %2348 = vmatpush1.msra.mxu0 0.0
        %2349 = vmatprep.subr.mxu0 0.0
        %2350 = vmatpush1.msra.mxu0 0.0
        %2351 = vmatprep.subr.mxu0 0.0
        %2352 = vmatpush1.msra.mxu0 0.0
        %2353 = vmatprep.subr.mxu0 0.0
        %2354 = vmatpush1.msra.mxu0 0.0
        %2355 = vmatprep.subr.mxu0 0.0
        %2356 = vmatpush1.msra.mxu0 0.0
        %2357 = vmatprep.subr.mxu0 0.0
        %2358 = vmatpush1.msra.mxu0 0.0
        %2359 = vmatprep.subr.mxu0 0.0
        %2360 = vmatpush1.msra.mxu0 0.0
        %2361 = vmatprep.mubr.f32.mxu0 0.0
        %v2362 = vand.u32 %v174, 4294901760
        %2363 = vmatmul.mubr.f32.gmra.mrb[0].mxu0 %v2362
        %v2364 = vpop.f32.mrb[0].mxu0
        %v2365 = vadd.f32 %v2133, %v2364
        %v2366 = vpop.f32.mrb[0].mxu0
        %v2367 = vadd.f32 %v2135, %v2366
        %2368 = vdwg.mxu0
        %v2369 = vand.u32 %v180, 4294901760
        %v2370 = vsub.f32 %v180, %v2369
        %2371 = vmatprep.subr.mxu0 %v2370
        %v2372 = vand.u32 %v179, 4294901760
        %v2373 = vsub.f32 %v179, %v2372
        %2374 = vmatpush1.msra.mxu0 %v2373
        %v2375 = vand.u32 %v189, 4294901760
        %v2376 = vsub.f32 %v189, %v2375
        %2377 = vmatprep.subr.mxu0 %v2376
        %v2378 = vand.u32 %v188, 4294901760
        %v2379 = vsub.f32 %v188, %v2378
        %2380 = vmatpush1.msra.mxu0 %v2379
        %v2381 = vand.u32 %v198, 4294901760
        %v2382 = vsub.f32 %v198, %v2381
        %2383 = vmatprep.subr.mxu0 %v2382
        %v2384 = vand.u32 %v197, 4294901760
        %v2385 = vsub.f32 %v197, %v2384
        %2386 = vmatpush1.msra.mxu0 %v2385
        %v2387 = vand.u32 %v207, 4294901760
        %v2388 = vsub.f32 %v207, %v2387
        %2389 = vmatprep.subr.mxu0 %v2388
        %v2390 = vand.u32 %v206, 4294901760
        %v2391 = vsub.f32 %v206, %v2390
        %2392 = vmatpush1.msra.mxu0 %v2391
        %v2393 = vand.u32 %v216, 4294901760
        %v2394 = vsub.f32 %v216, %v2393
        %2395 = vmatprep.subr.mxu0 %v2394
        %v2396 = vand.u32 %v215, 4294901760
        %v2397 = vsub.f32 %v215, %v2396
        %2398 = vmatpush1.msra.mxu0 %v2397
        %v2399 = vand.u32 %v225, 4294901760
        %v2400 = vsub.f32 %v225, %v2399
        %2401 = vmatprep.subr.mxu0 %v2400
        %v2402 = vand.u32 %v224, 4294901760
        %v2403 = vsub.f32 %v224, %v2402
        %2404 = vmatpush1.msra.mxu0 %v2403
        %v2405 = vand.u32 %v234, 4294901760
        %v2406 = vsub.f32 %v234, %v2405
        %2407 = vmatprep.subr.mxu0 %v2406
        %v2408 = vand.u32 %v233, 4294901760
        %v2409 = vsub.f32 %v233, %v2408
        %2410 = vmatpush1.msra.mxu0 %v2409
        %v2411 = vand.u32 %v243, 4294901760
        %v2412 = vsub.f32 %v243, %v2411
        %2413 = vmatprep.subr.mxu0 %v2412
        %v2414 = vand.u32 %v242, 4294901760
        %v2415 = vsub.f32 %v242, %v2414
        %2416 = vmatpush1.msra.mxu0 %v2415
        %v2417 = vand.u32 %v252, 4294901760
        %v2418 = vsub.f32 %v252, %v2417
        %2419 = vmatprep.subr.mxu0 %v2418
        %v2420 = vand.u32 %v251, 4294901760
        %v2421 = vsub.f32 %v251, %v2420
        %2422 = vmatpush1.msra.mxu0 %v2421
        %v2423 = vand.u32 %v261, 4294901760
        %v2424 = vsub.f32 %v261, %v2423
        %2425 = vmatprep.subr.mxu0 %v2424
        %v2426 = vand.u32 %v260, 4294901760
        %v2427 = vsub.f32 %v260, %v2426
        %2428 = vmatpush1.msra.mxu0 %v2427
        %v2429 = vand.u32 %v270, 4294901760
        %v2430 = vsub.f32 %v270, %v2429
        %2431 = vmatprep.subr.mxu0 %v2430
        %v2432 = vand.u32 %v269, 4294901760
        %v2433 = vsub.f32 %v269, %v2432
        %2434 = vmatpush1.msra.mxu0 %v2433
        %v2435 = vand.u32 %v279, 4294901760
        %v2436 = vsub.f32 %v279, %v2435
        %2437 = vmatprep.subr.mxu0 %v2436
        %v2438 = vand.u32 %v278, 4294901760
        %v2439 = vsub.f32 %v278, %v2438
        %2440 = vmatpush1.msra.mxu0 %v2439
        %v2441 = vand.u32 %v288, 4294901760
        %v2442 = vsub.f32 %v288, %v2441
        %2443 = vmatprep.subr.mxu0 %v2442
        %v2444 = vand.u32 %v287, 4294901760
        %v2445 = vsub.f32 %v287, %v2444
        %2446 = vmatpush1.msra.mxu0 %v2445
        %v2447 = vand.u32 %v297, 4294901760
        %v2448 = vsub.f32 %v297, %v2447
        %2449 = vmatprep.subr.mxu0 %v2448
        %v2450 = vand.u32 %v296, 4294901760
        %v2451 = vsub.f32 %v296, %v2450
        %2452 = vmatpush1.msra.mxu0 %v2451
        %v2453 = vand.u32 %v306, 4294901760
        %v2454 = vsub.f32 %v306, %v2453
        %2455 = vmatprep.subr.mxu0 %v2454
        %v2456 = vand.u32 %v305, 4294901760
        %v2457 = vsub.f32 %v305, %v2456
        %2458 = vmatpush1.msra.mxu0 %v2457
        %v2459 = vand.u32 %v315, 4294901760
        %v2460 = vsub.f32 %v315, %v2459
        %2461 = vmatprep.subr.mxu0 %v2460
        %v2462 = vand.u32 %v314, 4294901760
        %v2463 = vsub.f32 %v314, %v2462
        %2464 = vmatpush1.msra.mxu0 %v2463
        %2465 = vmatprep.subr.mxu0 0.0
        %2466 = vmatpush1.msra.mxu0 0.0
        %2467 = vmatprep.subr.mxu0 0.0
        %2468 = vmatpush1.msra.mxu0 0.0
        %2469 = vmatprep.subr.mxu0 0.0
        %2470 = vmatpush1.msra.mxu0 0.0
        %2471 = vmatprep.subr.mxu0 0.0
        %2472 = vmatpush1.msra.mxu0 0.0
        %2473 = vmatprep.subr.mxu0 0.0
        %2474 = vmatpush1.msra.mxu0 0.0
        %2475 = vmatprep.subr.mxu0 0.0
        %2476 = vmatpush1.msra.mxu0 0.0
        %2477 = vmatprep.subr.mxu0 0.0
        %2478 = vmatpush1.msra.mxu0 0.0
        %2479 = vmatprep.subr.mxu0 0.0
        %2480 = vmatpush1.msra.mxu0 0.0
        %2481 = vmatprep.subr.mxu0 0.0
        %2482 = vmatpush1.msra.mxu0 0.0
        %2483 = vmatprep.subr.mxu0 0.0
        %2484 = vmatpush1.msra.mxu0 0.0
        %2485 = vmatprep.subr.mxu0 0.0
        %2486 = vmatpush1.msra.mxu0 0.0
        %2487 = vmatprep.subr.mxu0 0.0
        %2488 = vmatpush1.msra.mxu0 0.0
        %2489 = vmatprep.subr.mxu0 0.0
        %2490 = vmatpush1.msra.mxu0 0.0
        %2491 = vmatprep.subr.mxu0 0.0
        %2492 = vmatpush1.msra.mxu0 0.0
        %2493 = vmatprep.subr.mxu0 0.0
        %2494 = vmatpush1.msra.mxu0 0.0
        %2495 = vmatprep.subr.mxu0 0.0
        %2496 = vmatpush1.msra.mxu0 0.0
        %2497 = vmatprep.mubr.f32.mxu0 0.0
        %v2498 = vand.u32 %v174, 4294901760
        %v2499 = vsub.f32 %v174, %v2498
        %2500 = vmatmul.mubr.f32.gmra.mrb[0].mxu0 %v2499
        %v2501 = vpop.f32.mrb[0].mxu0
        %v2502 = vadd.f32 %v2365, %v2501
        %v2503 = vpop.f32.mrb[0].mxu0
        %v2504 = vadd.f32 %v2367, %v2503
        %2505 = vdwg.mxu0
        %v2506 = vand.u32 %v180, 4294901760
        %2507 = vmatprep.subr.mxu0 %v2506
        %v2508 = vand.u32 %v179, 4294901760
        %2509 = vmatpush1.msra.mxu0 %v2508
        %v2510 = vand.u32 %v189, 4294901760
        %2511 = vmatprep.subr.mxu0 %v2510
        %v2512 = vand.u32 %v188, 4294901760
        %2513 = vmatpush1.msra.mxu0 %v2512
        %v2514 = vand.u32 %v198, 4294901760
        %2515 = vmatprep.subr.mxu0 %v2514
        %v2516 = vand.u32 %v197, 4294901760
        %2517 = vmatpush1.msra.mxu0 %v2516
        %v2518 = vand.u32 %v207, 4294901760
        %2519 = vmatprep.subr.mxu0 %v2518
        %v2520 = vand.u32 %v206, 4294901760
        %2521 = vmatpush1.msra.mxu0 %v2520
        %v2522 = vand.u32 %v216, 4294901760
        %2523 = vmatprep.subr.mxu0 %v2522
        %v2524 = vand.u32 %v215, 4294901760
        %2525 = vmatpush1.msra.mxu0 %v2524
        %v2526 = vand.u32 %v225, 4294901760
        %2527 = vmatprep.subr.mxu0 %v2526
        %v2528 = vand.u32 %v224, 4294901760
        %2529 = vmatpush1.msra.mxu0 %v2528
        %v2530 = vand.u32 %v234, 4294901760
        %2531 = vmatprep.subr.mxu0 %v2530
        %v2532 = vand.u32 %v233, 4294901760
        %2533 = vmatpush1.msra.mxu0 %v2532
        %v2534 = vand.u32 %v243, 4294901760
        %2535 = vmatprep.subr.mxu0 %v2534
        %v2536 = vand.u32 %v242, 4294901760
        %2537 = vmatpush1.msra.mxu0 %v2536
        %v2538 = vand.u32 %v252, 4294901760
        %2539 = vmatprep.subr.mxu0 %v2538
        %v2540 = vand.u32 %v251, 4294901760
        %2541 = vmatpush1.msra.mxu0 %v2540
        %v2542 = vand.u32 %v261, 4294901760
        %2543 = vmatprep.subr.mxu0 %v2542
        %v2544 = vand.u32 %v260, 4294901760
        %2545 = vmatpush1.msra.mxu0 %v2544
        %v2546 = vand.u32 %v270, 4294901760
        %2547 = vmatprep.subr.mxu0 %v2546
        %v2548 = vand.u32 %v269, 4294901760
        %2549 = vmatpush1.msra.mxu0 %v2548
        %v2550 = vand.u32 %v279, 4294901760
        %2551 = vmatprep.subr.mxu0 %v2550
        %v2552 = vand.u32 %v278, 4294901760
        %2553 = vmatpush1.msra.mxu0 %v2552
        %v2554 = vand.u32 %v288, 4294901760
        %2555 = vmatprep.subr.mxu0 %v2554
        %v2556 = vand.u32 %v287, 4294901760
        %2557 = vmatpush1.msra.mxu0 %v2556
        %v2558 = vand.u32 %v297, 4294901760
        %2559 = vmatprep.subr.mxu0 %v2558
        %v2560 = vand.u32 %v296, 4294901760
        %2561 = vmatpush1.msra.mxu0 %v2560
        %v2562 = vand.u32 %v306, 4294901760
        %2563 = vmatprep.subr.mxu0 %v2562
        %v2564 = vand.u32 %v305, 4294901760
        %2565 = vmatpush1.msra.mxu0 %v2564
        %v2566 = vand.u32 %v315, 4294901760
        %2567 = vmatprep.subr.mxu0 %v2566
        %v2568 = vand.u32 %v314, 4294901760
        %2569 = vmatpush1.msra.mxu0 %v2568
        %2570 = vmatprep.subr.mxu0 0.0
        %2571 = vmatpush1.msra.mxu0 0.0
        %2572 = vmatprep.subr.mxu0 0.0
        %2573 = vmatpush1.msra.mxu0 0.0
        %2574 = vmatprep.subr.mxu0 0.0
        %2575 = vmatpush1.msra.mxu0 0.0
        %2576 = vmatprep.subr.mxu0 0.0
        %2577 = vmatpush1.msra.mxu0 0.0
        %2578 = vmatprep.subr.mxu0 0.0
        %2579 = vmatpush1.msra.mxu0 0.0
        %2580 = vmatprep.subr.mxu0 0.0
        %2581 = vmatpush1.msra.mxu0 0.0
        %2582 = vmatprep.subr.mxu0 0.0
        %2583 = vmatpush1.msra.mxu0 0.0
        %2584 = vmatprep.subr.mxu0 0.0
        %2585 = vmatpush1.msra.mxu0 0.0
        %2586 = vmatprep.subr.mxu0 0.0
        %2587 = vmatpush1.msra.mxu0 0.0
        %2588 = vmatprep.subr.mxu0 0.0
        %2589 = vmatpush1.msra.mxu0 0.0
        %2590 = vmatprep.subr.mxu0 0.0
        %2591 = vmatpush1.msra.mxu0 0.0
        %2592 = vmatprep.subr.mxu0 0.0
        %2593 = vmatpush1.msra.mxu0 0.0
        %2594 = vmatprep.subr.mxu0 0.0
        %2595 = vmatpush1.msra.mxu0 0.0
        %2596 = vmatprep.subr.mxu0 0.0
        %2597 = vmatpush1.msra.mxu0 0.0
        %2598 = vmatprep.subr.mxu0 0.0
        %2599 = vmatpush1.msra.mxu0 0.0
        %2600 = vmatprep.subr.mxu0 0.0
        %2601 = vmatpush1.msra.mxu0 0.0
        %2602 = vmatprep.mubr.f32.mxu0 0.0
        %v2603 = vand.u32 %v174, 4294901760
        %v2604 = vsub.f32 %v174, %v2603
        %v2605 = vand.u32 %v2604, 4294901760
        %2606 = vmatmul.mubr.f32.gmra.mrb[0].mxu0 %v2605
        %v2607 = vpop.f32.mrb[0].mxu0
        %v2608 = vadd.f32 %v2502, %v2607
        %v2609 = vpop.f32.mrb[0].mxu0
        %v2610 = vadd.f32 %v2504, %v2609
        %2611 = vdwg.mxu0
        %v2612 = vand.u32 %v180, 4294901760
        %v2613 = vsub.f32 %v180, %v2612
        %v2614 = vand.u32 %v2613, 4294901760
        %2615 = vmatprep.subr.mxu0 %v2614
        %v2616 = vand.u32 %v179, 4294901760
        %v2617 = vsub.f32 %v179, %v2616
        %v2618 = vand.u32 %v2617, 4294901760
        %2619 = vmatpush1.msra.mxu0 %v2618
        %v2620 = vand.u32 %v189, 4294901760
        %v2621 = vsub.f32 %v189, %v2620
        %v2622 = vand.u32 %v2621, 4294901760
        %2623 = vmatprep.subr.mxu0 %v2622
        %v2624 = vand.u32 %v188, 4294901760
        %v2625 = vsub.f32 %v188, %v2624
        %v2626 = vand.u32 %v2625, 4294901760
        %2627 = vmatpush1.msra.mxu0 %v2626
        %v2628 = vand.u32 %v198, 4294901760
        %v2629 = vsub.f32 %v198, %v2628
        %v2630 = vand.u32 %v2629, 4294901760
        %2631 = vmatprep.subr.mxu0 %v2630
        %v2632 = vand.u32 %v197, 4294901760
        %v2633 = vsub.f32 %v197, %v2632
        %v2634 = vand.u32 %v2633, 4294901760
        %2635 = vmatpush1.msra.mxu0 %v2634
        %v2636 = vand.u32 %v207, 4294901760
        %v2637 = vsub.f32 %v207, %v2636
        %v2638 = vand.u32 %v2637, 4294901760
        %2639 = vmatprep.subr.mxu0 %v2638
        %v2640 = vand.u32 %v206, 4294901760
        %v2641 = vsub.f32 %v206, %v2640
        %v2642 = vand.u32 %v2641, 4294901760
        %2643 = vmatpush1.msra.mxu0 %v2642
        %v2644 = vand.u32 %v216, 4294901760
        %v2645 = vsub.f32 %v216, %v2644
        %v2646 = vand.u32 %v2645, 4294901760
        %2647 = vmatprep.subr.mxu0 %v2646
        %v2648 = vand.u32 %v215, 4294901760
        %v2649 = vsub.f32 %v215, %v2648
        %v2650 = vand.u32 %v2649, 4294901760
        %2651 = vmatpush1.msra.mxu0 %v2650
        %v2652 = vand.u32 %v225, 4294901760
        %v2653 = vsub.f32 %v225, %v2652
        %v2654 = vand.u32 %v2653, 4294901760
        %2655 = vmatprep.subr.mxu0 %v2654
        %v2656 = vand.u32 %v224, 4294901760
        %v2657 = vsub.f32 %v224, %v2656
        %v2658 = vand.u32 %v2657, 4294901760
        %2659 = vmatpush1.msra.mxu0 %v2658
        %v2660 = vand.u32 %v234, 4294901760
        %v2661 = vsub.f32 %v234, %v2660
        %v2662 = vand.u32 %v2661, 4294901760
        %2663 = vmatprep.subr.mxu0 %v2662
        %v2664 = vand.u32 %v233, 4294901760
        %v2665 = vsub.f32 %v233, %v2664
        %v2666 = vand.u32 %v2665, 4294901760
        %2667 = vmatpush1.msra.mxu0 %v2666
        %v2668 = vand.u32 %v243, 4294901760
        %v2669 = vsub.f32 %v243, %v2668
        %v2670 = vand.u32 %v2669, 4294901760
        %2671 = vmatprep.subr.mxu0 %v2670
        %v2672 = vand.u32 %v242, 4294901760
        %v2673 = vsub.f32 %v242, %v2672
        %v2674 = vand.u32 %v2673, 4294901760
        %2675 = vmatpush1.msra.mxu0 %v2674
        %v2676 = vand.u32 %v252, 4294901760
        %v2677 = vsub.f32 %v252, %v2676
        %v2678 = vand.u32 %v2677, 4294901760
        %2679 = vmatprep.subr.mxu0 %v2678
        %v2680 = vand.u32 %v251, 4294901760
        %v2681 = vsub.f32 %v251, %v2680
        %v2682 = vand.u32 %v2681, 4294901760
        %2683 = vmatpush1.msra.mxu0 %v2682
        %v2684 = vand.u32 %v261, 4294901760
        %v2685 = vsub.f32 %v261, %v2684
        %v2686 = vand.u32 %v2685, 4294901760
        %2687 = vmatprep.subr.mxu0 %v2686
        %v2688 = vand.u32 %v260, 4294901760
        %v2689 = vsub.f32 %v260, %v2688
        %v2690 = vand.u32 %v2689, 4294901760
        %2691 = vmatpush1.msra.mxu0 %v2690
        %v2692 = vand.u32 %v270, 4294901760
        %v2693 = vsub.f32 %v270, %v2692
        %v2694 = vand.u32 %v2693, 4294901760
        %2695 = vmatprep.subr.mxu0 %v2694
        %v2696 = vand.u32 %v269, 4294901760
        %v2697 = vsub.f32 %v269, %v2696
        %v2698 = vand.u32 %v2697, 4294901760
        %2699 = vmatpush1.msra.mxu0 %v2698
        %v2700 = vand.u32 %v279, 4294901760
        %v2701 = vsub.f32 %v279, %v2700
        %v2702 = vand.u32 %v2701, 4294901760
        %2703 = vmatprep.subr.mxu0 %v2702
        %v2704 = vand.u32 %v278, 4294901760
        %v2705 = vsub.f32 %v278, %v2704
        %v2706 = vand.u32 %v2705, 4294901760
        %2707 = vmatpush1.msra.mxu0 %v2706
        %v2708 = vand.u32 %v288, 4294901760
        %v2709 = vsub.f32 %v288, %v2708
        %v2710 = vand.u32 %v2709, 4294901760
        %2711 = vmatprep.subr.mxu0 %v2710
        %v2712 = vand.u32 %v287, 4294901760
        %v2713 = vsub.f32 %v287, %v2712
        %v2714 = vand.u32 %v2713, 4294901760
        %2715 = vmatpush1.msra.mxu0 %v2714
        %v2716 = vand.u32 %v297, 4294901760
        %v2717 = vsub.f32 %v297, %v2716
        %v2718 = vand.u32 %v2717, 4294901760
        %2719 = vmatprep.subr.mxu0 %v2718
        %v2720 = vand.u32 %v296, 4294901760
        %v2721 = vsub.f32 %v296, %v2720
        %v2722 = vand.u32 %v2721, 4294901760
        %2723 = vmatpush1.msra.mxu0 %v2722
        %v2724 = vand.u32 %v306, 4294901760
        %v2725 = vsub.f32 %v306, %v2724
        %v2726 = vand.u32 %v2725, 4294901760
        %2727 = vmatprep.subr.mxu0 %v2726
        %v2728 = vand.u32 %v305, 4294901760
        %v2729 = vsub.f32 %v305, %v2728
        %v2730 = vand.u32 %v2729, 4294901760
        %2731 = vmatpush1.msra.mxu0 %v2730
        %v2732 = vand.u32 %v315, 4294901760
        %v2733 = vsub.f32 %v315, %v2732
        %v2734 = vand.u32 %v2733, 4294901760
        %2735 = vmatprep.subr.mxu0 %v2734
        %v2736 = vand.u32 %v314, 4294901760
        %v2737 = vsub.f32 %v314, %v2736
        %v2738 = vand.u32 %v2737, 4294901760
        %2739 = vmatpush1.msra.mxu0 %v2738
        %2740 = vmatprep.subr.mxu0 0.0
        %2741 = vmatpush1.msra.mxu0 0.0
        %2742 = vmatprep.subr.mxu0 0.0
        %2743 = vmatpush1.msra.mxu0 0.0
        %2744 = vmatprep.subr.mxu0 0.0
        %2745 = vmatpush1.msra.mxu0 0.0
        %2746 = vmatprep.subr.mxu0 0.0
        %2747 = vmatpush1.msra.mxu0 0.0
        %2748 = vmatprep.subr.mxu0 0.0
        %2749 = vmatpush1.msra.mxu0 0.0
        %2750 = vmatprep.subr.mxu0 0.0
        %2751 = vmatpush1.msra.mxu0 0.0
        %2752 = vmatprep.subr.mxu0 0.0
        %2753 = vmatpush1.msra.mxu0 0.0
        %2754 = vmatprep.subr.mxu0 0.0
        %2755 = vmatpush1.msra.mxu0 0.0
        %2756 = vmatprep.subr.mxu0 0.0
        %2757 = vmatpush1.msra.mxu0 0.0
        %2758 = vmatprep.subr.mxu0 0.0
        %2759 = vmatpush1.msra.mxu0 0.0
        %2760 = vmatprep.subr.mxu0 0.0
        %2761 = vmatpush1.msra.mxu0 0.0
        %2762 = vmatprep.subr.mxu0 0.0
        %2763 = vmatpush1.msra.mxu0 0.0
        %2764 = vmatprep.subr.mxu0 0.0
        %2765 = vmatpush1.msra.mxu0 0.0
        %2766 = vmatprep.subr.mxu0 0.0
        %2767 = vmatpush1.msra.mxu0 0.0
        %2768 = vmatprep.subr.mxu0 0.0
        %2769 = vmatpush1.msra.mxu0 0.0
        %2770 = vmatprep.subr.mxu0 0.0
        %2771 = vmatpush1.msra.mxu0 0.0
        %2772 = vmatprep.mubr.f32.mxu0 0.0
        %v2773 = vand.u32 %v174, 4294901760
        %2774 = vmatmul.mubr.f32.gmra.mrb[0].mxu0 %v2773
        %v2775 = vpop.f32.mrb[0].mxu0
        %v2776 = vadd.f32 %v2608, %v2775
        %v2777 = vpop.f32.mrb[0].mxu0
        %v2778 = vadd.f32 %v2610, %v2777
        %2779 = vdwg.mxu0
        %v2780 = vand.u32 %v180, 4294901760
        %2781 = vmatprep.subr.mxu0 %v2780
        %v2782 = vand.u32 %v179, 4294901760
        %2783 = vmatpush1.msra.mxu0 %v2782
        %v2784 = vand.u32 %v189, 4294901760
        %2785 = vmatprep.subr.mxu0 %v2784
        %v2786 = vand.u32 %v188, 4294901760
        %2787 = vmatpush1.msra.mxu0 %v2786
        %v2788 = vand.u32 %v198, 4294901760
        %2789 = vmatprep.subr.mxu0 %v2788
        %v2790 = vand.u32 %v197, 4294901760
        %2791 = vmatpush1.msra.mxu0 %v2790
        %v2792 = vand.u32 %v207, 4294901760
        %2793 = vmatprep.subr.mxu0 %v2792
        %v2794 = vand.u32 %v206, 4294901760
        %2795 = vmatpush1.msra.mxu0 %v2794
        %v2796 = vand.u32 %v216, 4294901760
        %2797 = vmatprep.subr.mxu0 %v2796
        %v2798 = vand.u32 %v215, 4294901760
        %2799 = vmatpush1.msra.mxu0 %v2798
        %v2800 = vand.u32 %v225, 4294901760
        %2801 = vmatprep.subr.mxu0 %v2800
        %v2802 = vand.u32 %v224, 4294901760
        %2803 = vmatpush1.msra.mxu0 %v2802
        %v2804 = vand.u32 %v234, 4294901760
        %2805 = vmatprep.subr.mxu0 %v2804
        %v2806 = vand.u32 %v233, 4294901760
        %2807 = vmatpush1.msra.mxu0 %v2806
        %v2808 = vand.u32 %v243, 4294901760
        %2809 = vmatprep.subr.mxu0 %v2808
        %v2810 = vand.u32 %v242, 4294901760
        %2811 = vmatpush1.msra.mxu0 %v2810
        %v2812 = vand.u32 %v252, 4294901760
        %2813 = vmatprep.subr.mxu0 %v2812
        %v2814 = vand.u32 %v251, 4294901760
        %2815 = vmatpush1.msra.mxu0 %v2814
        %v2816 = vand.u32 %v261, 4294901760
        %2817 = vmatprep.subr.mxu0 %v2816
        %v2818 = vand.u32 %v260, 4294901760
        %2819 = vmatpush1.msra.mxu0 %v2818
        %v2820 = vand.u32 %v270, 4294901760
        %2821 = vmatprep.subr.mxu0 %v2820
        %v2822 = vand.u32 %v269, 4294901760
        %2823 = vmatpush1.msra.mxu0 %v2822
        %v2824 = vand.u32 %v279, 4294901760
        %2825 = vmatprep.subr.mxu0 %v2824
        %v2826 = vand.u32 %v278, 4294901760
        %2827 = vmatpush1.msra.mxu0 %v2826
        %v2828 = vand.u32 %v288, 4294901760
        %2829 = vmatprep.subr.mxu0 %v2828
        %v2830 = vand.u32 %v287, 4294901760
        %2831 = vmatpush1.msra.mxu0 %v2830
        %v2832 = vand.u32 %v297, 4294901760
        %2833 = vmatprep.subr.mxu0 %v2832
        %v2834 = vand.u32 %v296, 4294901760
        %2835 = vmatpush1.msra.mxu0 %v2834
        %v2836 = vand.u32 %v306, 4294901760
        %2837 = vmatprep.subr.mxu0 %v2836
        %v2838 = vand.u32 %v305, 4294901760
        %2839 = vmatpush1.msra.mxu0 %v2838
        %v2840 = vand.u32 %v315, 4294901760
        %2841 = vmatprep.subr.mxu0 %v2840
        %v2842 = vand.u32 %v314, 4294901760
        %2843 = vmatpush1.msra.mxu0 %v2842
        %2844 = vmatprep.subr.mxu0 0.0
        %2845 = vmatpush1.msra.mxu0 0.0
        %2846 = vmatprep.subr.mxu0 0.0
        %2847 = vmatpush1.msra.mxu0 0.0
        %2848 = vmatprep.subr.mxu0 0.0
        %2849 = vmatpush1.msra.mxu0 0.0
        %2850 = vmatprep.subr.mxu0 0.0
        %2851 = vmatpush1.msra.mxu0 0.0
        %2852 = vmatprep.subr.mxu0 0.0
        %2853 = vmatpush1.msra.mxu0 0.0
        %2854 = vmatprep.subr.mxu0 0.0
        %2855 = vmatpush1.msra.mxu0 0.0
        %2856 = vmatprep.subr.mxu0 0.0
        %2857 = vmatpush1.msra.mxu0 0.0
        %2858 = vmatprep.subr.mxu0 0.0
        %2859 = vmatpush1.msra.mxu0 0.0
        %2860 = vmatprep.subr.mxu0 0.0
        %2861 = vmatpush1.msra.mxu0 0.0
        %2862 = vmatprep.subr.mxu0 0.0
        %2863 = vmatpush1.msra.mxu0 0.0
        %2864 = vmatprep.subr.mxu0 0.0
        %2865 = vmatpush1.msra.mxu0 0.0
        %2866 = vmatprep.subr.mxu0 0.0
        %2867 = vmatpush1.msra.mxu0 0.0
        %2868 = vmatprep.subr.mxu0 0.0
        %2869 = vmatpush1.msra.mxu0 0.0
        %2870 = vmatprep.subr.mxu0 0.0
        %2871 = vmatpush1.msra.mxu0 0.0
        %2872 = vmatprep.subr.mxu0 0.0
        %2873 = vmatpush1.msra.mxu0 0.0
        %2874 = vmatprep.subr.mxu0 0.0
        %2875 = vmatpush1.msra.mxu0 0.0
        %2876 = vmatprep.mubr.f32.mxu0 0.0
        %v2877 = vand.u32 %v174, 4294901760
        %2878 = vmatmul.mubr.f32.gmra.mrb[0].mxu0 %v2877
        %v2879 = vpop.f32.mrb[0].mxu0
        %v2880 = vadd.f32 %v2776, %v2879
        %v2881 = vpop.f32.mrb[0].mxu0
        %v2882 = vadd.f32 %v2778, %v2881
        %2883 = vdwg.mxu0
        %v2884 = vand.u32 %v182, 4294901760
        %2885 = vmatprep.subr.mxu0 %v2884
        %v2886 = vand.u32 %v181, 4294901760
        %2887 = vmatpush1.msra.mxu0 %v2886
        %v2888 = vand.u32 %v191, 4294901760
        %2889 = vmatprep.subr.mxu0 %v2888
        %v2890 = vand.u32 %v190, 4294901760
        %2891 = vmatpush1.msra.mxu0 %v2890
        %v2892 = vand.u32 %v200, 4294901760
        %2893 = vmatprep.subr.mxu0 %v2892
        %v2894 = vand.u32 %v199, 4294901760
        %2895 = vmatpush1.msra.mxu0 %v2894
        %v2896 = vand.u32 %v209, 4294901760
        %2897 = vmatprep.subr.mxu0 %v2896
        %v2898 = vand.u32 %v208, 4294901760
        %2899 = vmatpush1.msra.mxu0 %v2898
        %v2900 = vand.u32 %v218, 4294901760
        %2901 = vmatprep.subr.mxu0 %v2900
        %v2902 = vand.u32 %v217, 4294901760
        %2903 = vmatpush1.msra.mxu0 %v2902
        %v2904 = vand.u32 %v227, 4294901760
        %2905 = vmatprep.subr.mxu0 %v2904
        %v2906 = vand.u32 %v226, 4294901760
        %2907 = vmatpush1.msra.mxu0 %v2906
        %v2908 = vand.u32 %v236, 4294901760
        %2909 = vmatprep.subr.mxu0 %v2908
        %v2910 = vand.u32 %v235, 4294901760
        %2911 = vmatpush1.msra.mxu0 %v2910
        %v2912 = vand.u32 %v245, 4294901760
        %2913 = vmatprep.subr.mxu0 %v2912
        %v2914 = vand.u32 %v244, 4294901760
        %2915 = vmatpush1.msra.mxu0 %v2914
        %v2916 = vand.u32 %v254, 4294901760
        %2917 = vmatprep.subr.mxu0 %v2916
        %v2918 = vand.u32 %v253, 4294901760
        %2919 = vmatpush1.msra.mxu0 %v2918
        %v2920 = vand.u32 %v263, 4294901760
        %2921 = vmatprep.subr.mxu0 %v2920
        %v2922 = vand.u32 %v262, 4294901760
        %2923 = vmatpush1.msra.mxu0 %v2922
        %v2924 = vand.u32 %v272, 4294901760
        %2925 = vmatprep.subr.mxu0 %v2924
        %v2926 = vand.u32 %v271, 4294901760
        %2927 = vmatpush1.msra.mxu0 %v2926
        %v2928 = vand.u32 %v281, 4294901760
        %2929 = vmatprep.subr.mxu0 %v2928
        %v2930 = vand.u32 %v280, 4294901760
        %2931 = vmatpush1.msra.mxu0 %v2930
        %v2932 = vand.u32 %v290, 4294901760
        %2933 = vmatprep.subr.mxu0 %v2932
        %v2934 = vand.u32 %v289, 4294901760
        %2935 = vmatpush1.msra.mxu0 %v2934
        %v2936 = vand.u32 %v299, 4294901760
        %2937 = vmatprep.subr.mxu0 %v2936
        %v2938 = vand.u32 %v298, 4294901760
        %2939 = vmatpush1.msra.mxu0 %v2938
        %v2940 = vand.u32 %v308, 4294901760
        %2941 = vmatprep.subr.mxu0 %v2940
        %v2942 = vand.u32 %v307, 4294901760
        %2943 = vmatpush1.msra.mxu0 %v2942
        %v2944 = vand.u32 %v317, 4294901760
        %2945 = vmatprep.subr.mxu0 %v2944
        %v2946 = vand.u32 %v316, 4294901760
        %2947 = vmatpush1.msra.mxu0 %v2946
        %2948 = vmatprep.subr.mxu0 0.0
        %2949 = vmatpush1.msra.mxu0 0.0
        %2950 = vmatprep.subr.mxu0 0.0
        %2951 = vmatpush1.msra.mxu0 0.0
        %2952 = vmatprep.subr.mxu0 0.0
        %2953 = vmatpush1.msra.mxu0 0.0
        %2954 = vmatprep.subr.mxu0 0.0
        %2955 = vmatpush1.msra.mxu0 0.0
        %2956 = vmatprep.subr.mxu0 0.0
        %2957 = vmatpush1.msra.mxu0 0.0
        %2958 = vmatprep.subr.mxu0 0.0
        %2959 = vmatpush1.msra.mxu0 0.0
        %2960 = vmatprep.subr.mxu0 0.0
        %2961 = vmatpush1.msra.mxu0 0.0
        %2962 = vmatprep.subr.mxu0 0.0
        %2963 = vmatpush1.msra.mxu0 0.0
        %2964 = vmatprep.subr.mxu0 0.0
        %2965 = vmatpush1.msra.mxu0 0.0
        %2966 = vmatprep.subr.mxu0 0.0
        %2967 = vmatpush1.msra.mxu0 0.0
        %2968 = vmatprep.subr.mxu0 0.0
        %2969 = vmatpush1.msra.mxu0 0.0
        %2970 = vmatprep.subr.mxu0 0.0
        %2971 = vmatpush1.msra.mxu0 0.0
        %2972 = vmatprep.subr.mxu0 0.0
        %2973 = vmatpush1.msra.mxu0 0.0
        %2974 = vmatprep.subr.mxu0 0.0
        %2975 = vmatpush1.msra.mxu0 0.0
        %2976 = vmatprep.subr.mxu0 0.0
        %2977 = vmatpush1.msra.mxu0 0.0
        %2978 = vmatprep.subr.mxu0 0.0
        %2979 = vmatpush1.msra.mxu0 0.0
        %2980 = vmatprep.mubr.f32.mxu0 0.0
        %v2981 = vand.u32 %v174, 4294901760
        %v2982 = vsub.f32 %v174, %v2981
        %v2983 = vand.u32 %v2982, 4294901760
        %v2984 = vsub.f32 %v2982, %v2983
        %v2985 = vand.u32 %v2984, 4294901760
        %2986 = vmatmul.mubr.f32.gmra.mrb[0].mxu0 %v2985
        %v2987 = vpop.f32.mrb[0].mxu0
        %v2988 = vadd.f32 0.0, %v2987
        %v2989 = vpop.f32.mrb[0].mxu0
        %v2990 = vadd.f32 0.0, %v2989
        %2991 = vdwg.mxu0
        %v2992 = vand.u32 %v182, 4294901760
        %v2993 = vsub.f32 %v182, %v2992
        %v2994 = vand.u32 %v2993, 4294901760
        %v2995 = vsub.f32 %v2993, %v2994
        %v2996 = vand.u32 %v2995, 4294901760
        %2997 = vmatprep.subr.mxu0 %v2996
        %v2998 = vand.u32 %v181, 4294901760
        %v2999 = vsub.f32 %v181, %v2998
        %v3000 = vand.u32 %v2999, 4294901760
        %v3001 = vsub.f32 %v2999, %v3000
        %v3002 = vand.u32 %v3001, 4294901760
        %3003 = vmatpush1.msra.mxu0 %v3002
        %v3004 = vand.u32 %v191, 4294901760
        %v3005 = vsub.f32 %v191, %v3004
        %v3006 = vand.u32 %v3005, 4294901760
        %v3007 = vsub.f32 %v3005, %v3006
        %v3008 = vand.u32 %v3007, 4294901760
        %3009 = vmatprep.subr.mxu0 %v3008
        %v3010 = vand.u32 %v190, 4294901760
        %v3011 = vsub.f32 %v190, %v3010
        %v3012 = vand.u32 %v3011, 4294901760
        %v3013 = vsub.f32 %v3011, %v3012
        %v3014 = vand.u32 %v3013, 4294901760
        %3015 = vmatpush1.msra.mxu0 %v3014
        %v3016 = vand.u32 %v200, 4294901760
        %v3017 = vsub.f32 %v200, %v3016
        %v3018 = vand.u32 %v3017, 4294901760
        %v3019 = vsub.f32 %v3017, %v3018
        %v3020 = vand.u32 %v3019, 4294901760
        %3021 = vmatprep.subr.mxu0 %v3020
        %v3022 = vand.u32 %v199, 4294901760
        %v3023 = vsub.f32 %v199, %v3022
        %v3024 = vand.u32 %v3023, 4294901760
        %v3025 = vsub.f32 %v3023, %v3024
        %v3026 = vand.u32 %v3025, 4294901760
        %3027 = vmatpush1.msra.mxu0 %v3026
        %v3028 = vand.u32 %v209, 4294901760
        %v3029 = vsub.f32 %v209, %v3028
        %v3030 = vand.u32 %v3029, 4294901760
        %v3031 = vsub.f32 %v3029, %v3030
        %v3032 = vand.u32 %v3031, 4294901760
        %3033 = vmatprep.subr.mxu0 %v3032
        %v3034 = vand.u32 %v208, 4294901760
        %v3035 = vsub.f32 %v208, %v3034
        %v3036 = vand.u32 %v3035, 4294901760
        %v3037 = vsub.f32 %v3035, %v3036
        %v3038 = vand.u32 %v3037, 4294901760
        %3039 = vmatpush1.msra.mxu0 %v3038
        %v3040 = vand.u32 %v218, 4294901760
        %v3041 = vsub.f32 %v218, %v3040
        %v3042 = vand.u32 %v3041, 4294901760
        %v3043 = vsub.f32 %v3041, %v3042
        %v3044 = vand.u32 %v3043, 4294901760
        %3045 = vmatprep.subr.mxu0 %v3044
        %v3046 = vand.u32 %v217, 4294901760
        %v3047 = vsub.f32 %v217, %v3046
        %v3048 = vand.u32 %v3047, 4294901760
        %v3049 = vsub.f32 %v3047, %v3048
        %v3050 = vand.u32 %v3049, 4294901760
        %3051 = vmatpush1.msra.mxu0 %v3050
        %v3052 = vand.u32 %v227, 4294901760
        %v3053 = vsub.f32 %v227, %v3052
        %v3054 = vand.u32 %v3053, 4294901760
        %v3055 = vsub.f32 %v3053, %v3054
        %v3056 = vand.u32 %v3055, 4294901760
        %3057 = vmatprep.subr.mxu0 %v3056
        %v3058 = vand.u32 %v226, 4294901760
        %v3059 = vsub.f32 %v226, %v3058
        %v3060 = vand.u32 %v3059, 4294901760
        %v3061 = vsub.f32 %v3059, %v3060
        %v3062 = vand.u32 %v3061, 4294901760
        %3063 = vmatpush1.msra.mxu0 %v3062
        %v3064 = vand.u32 %v236, 4294901760
        %v3065 = vsub.f32 %v236, %v3064
        %v3066 = vand.u32 %v3065, 4294901760
        %v3067 = vsub.f32 %v3065, %v3066
        %v3068 = vand.u32 %v3067, 4294901760
        %3069 = vmatprep.subr.mxu0 %v3068
        %v3070 = vand.u32 %v235, 4294901760
        %v3071 = vsub.f32 %v235, %v3070
        %v3072 = vand.u32 %v3071, 4294901760
        %v3073 = vsub.f32 %v3071, %v3072
        %v3074 = vand.u32 %v3073, 4294901760
        %3075 = vmatpush1.msra.mxu0 %v3074
        %v3076 = vand.u32 %v245, 4294901760
        %v3077 = vsub.f32 %v245, %v3076
        %v3078 = vand.u32 %v3077, 4294901760
        %v3079 = vsub.f32 %v3077, %v3078
        %v3080 = vand.u32 %v3079, 4294901760
        %3081 = vmatprep.subr.mxu0 %v3080
        %v3082 = vand.u32 %v244, 4294901760
        %v3083 = vsub.f32 %v244, %v3082
        %v3084 = vand.u32 %v3083, 4294901760
        %v3085 = vsub.f32 %v3083, %v3084
        %v3086 = vand.u32 %v3085, 4294901760
        %3087 = vmatpush1.msra.mxu0 %v3086
        %v3088 = vand.u32 %v254, 4294901760
        %v3089 = vsub.f32 %v254, %v3088
        %v3090 = vand.u32 %v3089, 4294901760
        %v3091 = vsub.f32 %v3089, %v3090
        %v3092 = vand.u32 %v3091, 4294901760
        %3093 = vmatprep.subr.mxu0 %v3092
        %v3094 = vand.u32 %v253, 4294901760
        %v3095 = vsub.f32 %v253, %v3094
        %v3096 = vand.u32 %v3095, 4294901760
        %v3097 = vsub.f32 %v3095, %v3096
        %v3098 = vand.u32 %v3097, 4294901760
        %3099 = vmatpush1.msra.mxu0 %v3098
        %v3100 = vand.u32 %v263, 4294901760
        %v3101 = vsub.f32 %v263, %v3100
        %v3102 = vand.u32 %v3101, 4294901760
        %v3103 = vsub.f32 %v3101, %v3102
        %v3104 = vand.u32 %v3103, 4294901760
        %3105 = vmatprep.subr.mxu0 %v3104
        %v3106 = vand.u32 %v262, 4294901760
        %v3107 = vsub.f32 %v262, %v3106
        %v3108 = vand.u32 %v3107, 4294901760
        %v3109 = vsub.f32 %v3107, %v3108
        %v3110 = vand.u32 %v3109, 4294901760
        %3111 = vmatpush1.msra.mxu0 %v3110
        %v3112 = vand.u32 %v272, 4294901760
        %v3113 = vsub.f32 %v272, %v3112
        %v3114 = vand.u32 %v3113, 4294901760
        %v3115 = vsub.f32 %v3113, %v3114
        %v3116 = vand.u32 %v3115, 4294901760
        %3117 = vmatprep.subr.mxu0 %v3116
        %v3118 = vand.u32 %v271, 4294901760
        %v3119 = vsub.f32 %v271, %v3118
        %v3120 = vand.u32 %v3119, 4294901760
        %v3121 = vsub.f32 %v3119, %v3120
        %v3122 = vand.u32 %v3121, 4294901760
        %3123 = vmatpush1.msra.mxu0 %v3122
        %v3124 = vand.u32 %v281, 4294901760
        %v3125 = vsub.f32 %v281, %v3124
        %v3126 = vand.u32 %v3125, 4294901760
        %v3127 = vsub.f32 %v3125, %v3126
        %v3128 = vand.u32 %v3127, 4294901760
        %3129 = vmatprep.subr.mxu0 %v3128
        %v3130 = vand.u32 %v280, 4294901760
        %v3131 = vsub.f32 %v280, %v3130
        %v3132 = vand.u32 %v3131, 4294901760
        %v3133 = vsub.f32 %v3131, %v3132
        %v3134 = vand.u32 %v3133, 4294901760
        %3135 = vmatpush1.msra.mxu0 %v3134
        %v3136 = vand.u32 %v290, 4294901760
        %v3137 = vsub.f32 %v290, %v3136
        %v3138 = vand.u32 %v3137, 4294901760
        %v3139 = vsub.f32 %v3137, %v3138
        %v3140 = vand.u32 %v3139, 4294901760
        %3141 = vmatprep.subr.mxu0 %v3140
        %v3142 = vand.u32 %v289, 4294901760
        %v3143 = vsub.f32 %v289, %v3142
        %v3144 = vand.u32 %v3143, 4294901760
        %v3145 = vsub.f32 %v3143, %v3144
        %v3146 = vand.u32 %v3145, 4294901760
        %3147 = vmatpush1.msra.mxu0 %v3146
        %v3148 = vand.u32 %v299, 4294901760
        %v3149 = vsub.f32 %v299, %v3148
        %v3150 = vand.u32 %v3149, 4294901760
        %v3151 = vsub.f32 %v3149, %v3150
        %v3152 = vand.u32 %v3151, 4294901760
        %3153 = vmatprep.subr.mxu0 %v3152
        %v3154 = vand.u32 %v298, 4294901760
        %v3155 = vsub.f32 %v298, %v3154
        %v3156 = vand.u32 %v3155, 4294901760
        %v3157 = vsub.f32 %v3155, %v3156
        %v3158 = vand.u32 %v3157, 4294901760
        %3159 = vmatpush1.msra.mxu0 %v3158
        %v3160 = vand.u32 %v308, 4294901760
        %v3161 = vsub.f32 %v308, %v3160
        %v3162 = vand.u32 %v3161, 4294901760
        %v3163 = vsub.f32 %v3161, %v3162
        %v3164 = vand.u32 %v3163, 4294901760
        %3165 = vmatprep.subr.mxu0 %v3164
        %v3166 = vand.u32 %v307, 4294901760
        %v3167 = vsub.f32 %v307, %v3166
        %v3168 = vand.u32 %v3167, 4294901760
        %v3169 = vsub.f32 %v3167, %v3168
        %v3170 = vand.u32 %v3169, 4294901760
        %3171 = vmatpush1.msra.mxu0 %v3170
        %v3172 = vand.u32 %v317, 4294901760
        %v3173 = vsub.f32 %v317, %v3172
        %v3174 = vand.u32 %v3173, 4294901760
        %v3175 = vsub.f32 %v3173, %v3174
        %v3176 = vand.u32 %v3175, 4294901760
        %3177 = vmatprep.subr.mxu0 %v3176
        %v3178 = vand.u32 %v316, 4294901760
        %v3179 = vsub.f32 %v316, %v3178
        %v3180 = vand.u32 %v3179, 4294901760
        %v3181 = vsub.f32 %v3179, %v3180
        %v3182 = vand.u32 %v3181, 4294901760
        %3183 = vmatpush1.msra.mxu0 %v3182
        %3184 = vmatprep.subr.mxu0 0.0
        %3185 = vmatpush1.msra.mxu0 0.0
        %3186 = vmatprep.subr.mxu0 0.0
        %3187 = vmatpush1.msra.mxu0 0.0
        %3188 = vmatprep.subr.mxu0 0.0
        %3189 = vmatpush1.msra.mxu0 0.0
        %3190 = vmatprep.subr.mxu0 0.0
        %3191 = vmatpush1.msra.mxu0 0.0
        %3192 = vmatprep.subr.mxu0 0.0
        %3193 = vmatpush1.msra.mxu0 0.0
        %3194 = vmatprep.subr.mxu0 0.0
        %3195 = vmatpush1.msra.mxu0 0.0
        %3196 = vmatprep.subr.mxu0 0.0
        %3197 = vmatpush1.msra.mxu0 0.0
        %3198 = vmatprep.subr.mxu0 0.0
        %3199 = vmatpush1.msra.mxu0 0.0
        %3200 = vmatprep.subr.mxu0 0.0
        %3201 = vmatpush1.msra.mxu0 0.0
        %3202 = vmatprep.subr.mxu0 0.0
        %3203 = vmatpush1.msra.mxu0 0.0
        %3204 = vmatprep.subr.mxu0 0.0
        %3205 = vmatpush1.msra.mxu0 0.0
        %3206 = vmatprep.subr.mxu0 0.0
        %3207 = vmatpush1.msra.mxu0 0.0
        %3208 = vmatprep.subr.mxu0 0.0
        %3209 = vmatpush1.msra.mxu0 0.0
        %3210 = vmatprep.subr.mxu0 0.0
        %3211 = vmatpush1.msra.mxu0 0.0
        %3212 = vmatprep.subr.mxu0 0.0
        %3213 = vmatpush1.msra.mxu0 0.0
        %3214 = vmatprep.subr.mxu0 0.0
        %3215 = vmatpush1.msra.mxu0 0.0
        %3216 = vmatprep.mubr.f32.mxu0 0.0
        %v3217 = vand.u32 %v174, 4294901760
        %3218 = vmatmul.mubr.f32.gmra.mrb[0].mxu0 %v3217
        %v3219 = vpop.f32.mrb[0].mxu0
        %v3220 = vadd.f32 %v2988, %v3219
        %v3221 = vpop.f32.mrb[0].mxu0
        %v3222 = vadd.f32 %v2990, %v3221
        %3223 = vdwg.mxu0
        %v3224 = vand.u32 %v182, 4294901760
        %v3225 = vsub.f32 %v182, %v3224
        %3226 = vmatprep.subr.mxu0 %v3225
        %v3227 = vand.u32 %v181, 4294901760
        %v3228 = vsub.f32 %v181, %v3227
        %3229 = vmatpush1.msra.mxu0 %v3228
        %v3230 = vand.u32 %v191, 4294901760
        %v3231 = vsub.f32 %v191, %v3230
        %3232 = vmatprep.subr.mxu0 %v3231
        %v3233 = vand.u32 %v190, 4294901760
        %v3234 = vsub.f32 %v190, %v3233
        %3235 = vmatpush1.msra.mxu0 %v3234
        %v3236 = vand.u32 %v200, 4294901760
        %v3237 = vsub.f32 %v200, %v3236
        %3238 = vmatprep.subr.mxu0 %v3237
        %v3239 = vand.u32 %v199, 4294901760
        %v3240 = vsub.f32 %v199, %v3239
        %3241 = vmatpush1.msra.mxu0 %v3240
        %v3242 = vand.u32 %v209, 4294901760
        %v3243 = vsub.f32 %v209, %v3242
        %3244 = vmatprep.subr.mxu0 %v3243
        %v3245 = vand.u32 %v208, 4294901760
        %v3246 = vsub.f32 %v208, %v3245
        %3247 = vmatpush1.msra.mxu0 %v3246
        %v3248 = vand.u32 %v218, 4294901760
        %v3249 = vsub.f32 %v218, %v3248
        %3250 = vmatprep.subr.mxu0 %v3249
        %v3251 = vand.u32 %v217, 4294901760
        %v3252 = vsub.f32 %v217, %v3251
        %3253 = vmatpush1.msra.mxu0 %v3252
        %v3254 = vand.u32 %v227, 4294901760
        %v3255 = vsub.f32 %v227, %v3254
        %3256 = vmatprep.subr.mxu0 %v3255
        %v3257 = vand.u32 %v226, 4294901760
        %v3258 = vsub.f32 %v226, %v3257
        %3259 = vmatpush1.msra.mxu0 %v3258
        %v3260 = vand.u32 %v236, 4294901760
        %v3261 = vsub.f32 %v236, %v3260
        %3262 = vmatprep.subr.mxu0 %v3261
        %v3263 = vand.u32 %v235, 4294901760
        %v3264 = vsub.f32 %v235, %v3263
        %3265 = vmatpush1.msra.mxu0 %v3264
        %v3266 = vand.u32 %v245, 4294901760
        %v3267 = vsub.f32 %v245, %v3266
        %3268 = vmatprep.subr.mxu0 %v3267
        %v3269 = vand.u32 %v244, 4294901760
        %v3270 = vsub.f32 %v244, %v3269
        %3271 = vmatpush1.msra.mxu0 %v3270
        %v3272 = vand.u32 %v254, 4294901760
        %v3273 = vsub.f32 %v254, %v3272
        %3274 = vmatprep.subr.mxu0 %v3273
        %v3275 = vand.u32 %v253, 4294901760
        %v3276 = vsub.f32 %v253, %v3275
        %3277 = vmatpush1.msra.mxu0 %v3276
        %v3278 = vand.u32 %v263, 4294901760
        %v3279 = vsub.f32 %v263, %v3278
        %3280 = vmatprep.subr.mxu0 %v3279
        %v3281 = vand.u32 %v262, 4294901760
        %v3282 = vsub.f32 %v262, %v3281
        %3283 = vmatpush1.msra.mxu0 %v3282
        %v3284 = vand.u32 %v272, 4294901760
        %v3285 = vsub.f32 %v272, %v3284
        %3286 = vmatprep.subr.mxu0 %v3285
        %v3287 = vand.u32 %v271, 4294901760
        %v3288 = vsub.f32 %v271, %v3287
        %3289 = vmatpush1.msra.mxu0 %v3288
        %v3290 = vand.u32 %v281, 4294901760
        %v3291 = vsub.f32 %v281, %v3290
        %3292 = vmatprep.subr.mxu0 %v3291
        %v3293 = vand.u32 %v280, 4294901760
        %v3294 = vsub.f32 %v280, %v3293
        %3295 = vmatpush1.msra.mxu0 %v3294
        %v3296 = vand.u32 %v290, 4294901760
        %v3297 = vsub.f32 %v290, %v3296
        %3298 = vmatprep.subr.mxu0 %v3297
        %v3299 = vand.u32 %v289, 4294901760
        %v3300 = vsub.f32 %v289, %v3299
        %3301 = vmatpush1.msra.mxu0 %v3300
        %v3302 = vand.u32 %v299, 4294901760
        %v3303 = vsub.f32 %v299, %v3302
        %3304 = vmatprep.subr.mxu0 %v3303
        %v3305 = vand.u32 %v298, 4294901760
        %v3306 = vsub.f32 %v298, %v3305
        %3307 = vmatpush1.msra.mxu0 %v3306
        %v3308 = vand.u32 %v308, 4294901760
        %v3309 = vsub.f32 %v308, %v3308
        %3310 = vmatprep.subr.mxu0 %v3309
        %v3311 = vand.u32 %v307, 4294901760
        %v3312 = vsub.f32 %v307, %v3311
        %3313 = vmatpush1.msra.mxu0 %v3312
        %v3314 = vand.u32 %v317, 4294901760
        %v3315 = vsub.f32 %v317, %v3314
        %3316 = vmatprep.subr.mxu0 %v3315
        %v3317 = vand.u32 %v316, 4294901760
        %v3318 = vsub.f32 %v316, %v3317
        %3319 = vmatpush1.msra.mxu0 %v3318
        %3320 = vmatprep.subr.mxu0 0.0
        %3321 = vmatpush1.msra.mxu0 0.0
        %3322 = vmatprep.subr.mxu0 0.0
        %3323 = vmatpush1.msra.mxu0 0.0
        %3324 = vmatprep.subr.mxu0 0.0
        %3325 = vmatpush1.msra.mxu0 0.0
        %3326 = vmatprep.subr.mxu0 0.0
        %3327 = vmatpush1.msra.mxu0 0.0
        %3328 = vmatprep.subr.mxu0 0.0
        %3329 = vmatpush1.msra.mxu0 0.0
        %3330 = vmatprep.subr.mxu0 0.0
        %3331 = vmatpush1.msra.mxu0 0.0
        %3332 = vmatprep.subr.mxu0 0.0
        %3333 = vmatpush1.msra.mxu0 0.0
        %3334 = vmatprep.subr.mxu0 0.0
        %3335 = vmatpush1.msra.mxu0 0.0
        %3336 = vmatprep.subr.mxu0 0.0
        %3337 = vmatpush1.msra.mxu0 0.0
        %3338 = vmatprep.subr.mxu0 0.0
        %3339 = vmatpush1.msra.mxu0 0.0
        %3340 = vmatprep.subr.mxu0 0.0
        %3341 = vmatpush1.msra.mxu0 0.0
        %3342 = vmatprep.subr.mxu0 0.0
        %3343 = vmatpush1.msra.mxu0 0.0
        %3344 = vmatprep.subr.mxu0 0.0
        %3345 = vmatpush1.msra.mxu0 0.0
        %3346 = vmatprep.subr.mxu0 0.0
        %3347 = vmatpush1.msra.mxu0 0.0
        %3348 = vmatprep.subr.mxu0 0.0
        %3349 = vmatpush1.msra.mxu0 0.0
        %3350 = vmatprep.subr.mxu0 0.0
        %3351 = vmatpush1.msra.mxu0 0.0
        %3352 = vmatprep.mubr.f32.mxu0 0.0
        %v3353 = vand.u32 %v174, 4294901760
        %v3354 = vsub.f32 %v174, %v3353
        %3355 = vmatmul.mubr.f32.gmra.mrb[0].mxu0 %v3354
        %v3356 = vpop.f32.mrb[0].mxu0
        %v3357 = vadd.f32 %v3220, %v3356
        %v3358 = vpop.f32.mrb[0].mxu0
        %v3359 = vadd.f32 %v3222, %v3358
        %3360 = vdwg.mxu0
        %v3361 = vand.u32 %v182, 4294901760
        %3362 = vmatprep.subr.mxu0 %v3361
        %v3363 = vand.u32 %v181, 4294901760
        %3364 = vmatpush1.msra.mxu0 %v3363
        %v3365 = vand.u32 %v191, 4294901760
        %3366 = vmatprep.subr.mxu0 %v3365
        %v3367 = vand.u32 %v190, 4294901760
        %3368 = vmatpush1.msra.mxu0 %v3367
        %v3369 = vand.u32 %v200, 4294901760
        %3370 = vmatprep.subr.mxu0 %v3369
        %v3371 = vand.u32 %v199, 4294901760
        %3372 = vmatpush1.msra.mxu0 %v3371
        %v3373 = vand.u32 %v209, 4294901760
        %3374 = vmatprep.subr.mxu0 %v3373
        %v3375 = vand.u32 %v208, 4294901760
        %3376 = vmatpush1.msra.mxu0 %v3375
        %v3377 = vand.u32 %v218, 4294901760
        %3378 = vmatprep.subr.mxu0 %v3377
        %v3379 = vand.u32 %v217, 4294901760
        %3380 = vmatpush1.msra.mxu0 %v3379
        %v3381 = vand.u32 %v227, 4294901760
        %3382 = vmatprep.subr.mxu0 %v3381
        %v3383 = vand.u32 %v226, 4294901760
        %3384 = vmatpush1.msra.mxu0 %v3383
        %v3385 = vand.u32 %v236, 4294901760
        %3386 = vmatprep.subr.mxu0 %v3385
        %v3387 = vand.u32 %v235, 4294901760
        %3388 = vmatpush1.msra.mxu0 %v3387
        %v3389 = vand.u32 %v245, 4294901760
        %3390 = vmatprep.subr.mxu0 %v3389
        %v3391 = vand.u32 %v244, 4294901760
        %3392 = vmatpush1.msra.mxu0 %v3391
        %v3393 = vand.u32 %v254, 4294901760
        %3394 = vmatprep.subr.mxu0 %v3393
        %v3395 = vand.u32 %v253, 4294901760
        %3396 = vmatpush1.msra.mxu0 %v3395
        %v3397 = vand.u32 %v263, 4294901760
        %3398 = vmatprep.subr.mxu0 %v3397
        %v3399 = vand.u32 %v262, 4294901760
        %3400 = vmatpush1.msra.mxu0 %v3399
        %v3401 = vand.u32 %v272, 4294901760
        %3402 = vmatprep.subr.mxu0 %v3401
        %v3403 = vand.u32 %v271, 4294901760
        %3404 = vmatpush1.msra.mxu0 %v3403
        %v3405 = vand.u32 %v281, 4294901760
        %3406 = vmatprep.subr.mxu0 %v3405
        %v3407 = vand.u32 %v280, 4294901760
        %3408 = vmatpush1.msra.mxu0 %v3407
        %v3409 = vand.u32 %v290, 4294901760
        %3410 = vmatprep.subr.mxu0 %v3409
        %v3411 = vand.u32 %v289, 4294901760
        %3412 = vmatpush1.msra.mxu0 %v3411
        %v3413 = vand.u32 %v299, 4294901760
        %3414 = vmatprep.subr.mxu0 %v3413
        %v3415 = vand.u32 %v298, 4294901760
        %3416 = vmatpush1.msra.mxu0 %v3415
        %v3417 = vand.u32 %v308, 4294901760
        %3418 = vmatprep.subr.mxu0 %v3417
        %v3419 = vand.u32 %v307, 4294901760
        %3420 = vmatpush1.msra.mxu0 %v3419
        %v3421 = vand.u32 %v317, 4294901760
        %3422 = vmatprep.subr.mxu0 %v3421
        %v3423 = vand.u32 %v316, 4294901760
        %3424 = vmatpush1.msra.mxu0 %v3423
        %3425 = vmatprep.subr.mxu0 0.0
        %3426 = vmatpush1.msra.mxu0 0.0
        %3427 = vmatprep.subr.mxu0 0.0
        %3428 = vmatpush1.msra.mxu0 0.0
        %3429 = vmatprep.subr.mxu0 0.0
        %3430 = vmatpush1.msra.mxu0 0.0
        %3431 = vmatprep.subr.mxu0 0.0
        %3432 = vmatpush1.msra.mxu0 0.0
        %3433 = vmatprep.subr.mxu0 0.0
        %3434 = vmatpush1.msra.mxu0 0.0
        %3435 = vmatprep.subr.mxu0 0.0
        %3436 = vmatpush1.msra.mxu0 0.0
        %3437 = vmatprep.subr.mxu0 0.0
        %3438 = vmatpush1.msra.mxu0 0.0
        %3439 = vmatprep.subr.mxu0 0.0
        %3440 = vmatpush1.msra.mxu0 0.0
        %3441 = vmatprep.subr.mxu0 0.0
        %3442 = vmatpush1.msra.mxu0 0.0
        %3443 = vmatprep.subr.mxu0 0.0
        %3444 = vmatpush1.msra.mxu0 0.0
        %3445 = vmatprep.subr.mxu0 0.0
        %3446 = vmatpush1.msra.mxu0 0.0
        %3447 = vmatprep.subr.mxu0 0.0
        %3448 = vmatpush1.msra.mxu0 0.0
        %3449 = vmatprep.subr.mxu0 0.0
        %3450 = vmatpush1.msra.mxu0 0.0
        %3451 = vmatprep.subr.mxu0 0.0
        %3452 = vmatpush1.msra.mxu0 0.0
        %3453 = vmatprep.subr.mxu0 0.0
        %3454 = vmatpush1.msra.mxu0 0.0
        %3455 = vmatprep.subr.mxu0 0.0
        %3456 = vmatpush1.msra.mxu0 0.0
        %3457 = vmatprep.mubr.f32.mxu0 0.0
        %v3458 = vand.u32 %v174, 4294901760
        %v3459 = vsub.f32 %v174, %v3458
        %v3460 = vand.u32 %v3459, 4294901760
        %3461 = vmatmul.mubr.f32.gmra.mrb[0].mxu0 %v3460
        %v3462 = vpop.f32.mrb[0].mxu0
        %v3463 = vadd.f32 %v3357, %v3462
        %v3464 = vpop.f32.mrb[0].mxu0
        %v3465 = vadd.f32 %v3359, %v3464
        %3466 = vdwg.mxu0
        %v3467 = vand.u32 %v182, 4294901760
        %v3468 = vsub.f32 %v182, %v3467
        %v3469 = vand.u32 %v3468, 4294901760
        %3470 = vmatprep.subr.mxu0 %v3469
        %v3471 = vand.u32 %v181, 4294901760
        %v3472 = vsub.f32 %v181, %v3471
        %v3473 = vand.u32 %v3472, 4294901760
        %3474 = vmatpush1.msra.mxu0 %v3473
        %v3475 = vand.u32 %v191, 4294901760
        %v3476 = vsub.f32 %v191, %v3475
        %v3477 = vand.u32 %v3476, 4294901760
        %3478 = vmatprep.subr.mxu0 %v3477
        %v3479 = vand.u32 %v190, 4294901760
        %v3480 = vsub.f32 %v190, %v3479
        %v3481 = vand.u32 %v3480, 4294901760
        %3482 = vmatpush1.msra.mxu0 %v3481
        %v3483 = vand.u32 %v200, 4294901760
        %v3484 = vsub.f32 %v200, %v3483
        %v3485 = vand.u32 %v3484, 4294901760
        %3486 = vmatprep.subr.mxu0 %v3485
        %v3487 = vand.u32 %v199, 4294901760
        %v3488 = vsub.f32 %v199, %v3487
        %v3489 = vand.u32 %v3488, 4294901760
        %3490 = vmatpush1.msra.mxu0 %v3489
        %v3491 = vand.u32 %v209, 4294901760
        %v3492 = vsub.f32 %v209, %v3491
        %v3493 = vand.u32 %v3492, 4294901760
        %3494 = vmatprep.subr.mxu0 %v3493
        %v3495 = vand.u32 %v208, 4294901760
        %v3496 = vsub.f32 %v208, %v3495
        %v3497 = vand.u32 %v3496, 4294901760
        %3498 = vmatpush1.msra.mxu0 %v3497
        %v3499 = vand.u32 %v218, 4294901760
        %v3500 = vsub.f32 %v218, %v3499
        %v3501 = vand.u32 %v3500, 4294901760
        %3502 = vmatprep.subr.mxu0 %v3501
        %v3503 = vand.u32 %v217, 4294901760
        %v3504 = vsub.f32 %v217, %v3503
        %v3505 = vand.u32 %v3504, 4294901760
        %3506 = vmatpush1.msra.mxu0 %v3505
        %v3507 = vand.u32 %v227, 4294901760
        %v3508 = vsub.f32 %v227, %v3507
        %v3509 = vand.u32 %v3508, 4294901760
        %3510 = vmatprep.subr.mxu0 %v3509
        %v3511 = vand.u32 %v226, 4294901760
        %v3512 = vsub.f32 %v226, %v3511
        %v3513 = vand.u32 %v3512, 4294901760
        %3514 = vmatpush1.msra.mxu0 %v3513
        %v3515 = vand.u32 %v236, 4294901760
        %v3516 = vsub.f32 %v236, %v3515
        %v3517 = vand.u32 %v3516, 4294901760
        %3518 = vmatprep.subr.mxu0 %v3517
        %v3519 = vand.u32 %v235, 4294901760
        %v3520 = vsub.f32 %v235, %v3519
        %v3521 = vand.u32 %v3520, 4294901760
        %3522 = vmatpush1.msra.mxu0 %v3521
        %v3523 = vand.u32 %v245, 4294901760
        %v3524 = vsub.f32 %v245, %v3523
        %v3525 = vand.u32 %v3524, 4294901760
        %3526 = vmatprep.subr.mxu0 %v3525
        %v3527 = vand.u32 %v244, 4294901760
        %v3528 = vsub.f32 %v244, %v3527
        %v3529 = vand.u32 %v3528, 4294901760
        %3530 = vmatpush1.msra.mxu0 %v3529
        %v3531 = vand.u32 %v254, 4294901760
        %v3532 = vsub.f32 %v254, %v3531
        %v3533 = vand.u32 %v3532, 4294901760
        %3534 = vmatprep.subr.mxu0 %v3533
        %v3535 = vand.u32 %v253, 4294901760
        %v3536 = vsub.f32 %v253, %v3535
        %v3537 = vand.u32 %v3536, 4294901760
        %3538 = vmatpush1.msra.mxu0 %v3537
        %v3539 = vand.u32 %v263, 4294901760
        %v3540 = vsub.f32 %v263, %v3539
        %v3541 = vand.u32 %v3540, 4294901760
        %3542 = vmatprep.subr.mxu0 %v3541
        %v3543 = vand.u32 %v262, 4294901760
        %v3544 = vsub.f32 %v262, %v3543
        %v3545 = vand.u32 %v3544, 4294901760
        %3546 = vmatpush1.msra.mxu0 %v3545
        %v3547 = vand.u32 %v272, 4294901760
        %v3548 = vsub.f32 %v272, %v3547
        %v3549 = vand.u32 %v3548, 4294901760
        %3550 = vmatprep.subr.mxu0 %v3549
        %v3551 = vand.u32 %v271, 4294901760
        %v3552 = vsub.f32 %v271, %v3551
        %v3553 = vand.u32 %v3552, 4294901760
        %3554 = vmatpush1.msra.mxu0 %v3553
        %v3555 = vand.u32 %v281, 4294901760
        %v3556 = vsub.f32 %v281, %v3555
        %v3557 = vand.u32 %v3556, 4294901760
        %3558 = vmatprep.subr.mxu0 %v3557
        %v3559 = vand.u32 %v280, 4294901760
        %v3560 = vsub.f32 %v280, %v3559
        %v3561 = vand.u32 %v3560, 4294901760
        %3562 = vmatpush1.msra.mxu0 %v3561
        %v3563 = vand.u32 %v290, 4294901760
        %v3564 = vsub.f32 %v290, %v3563
        %v3565 = vand.u32 %v3564, 4294901760
        %3566 = vmatprep.subr.mxu0 %v3565
        %v3567 = vand.u32 %v289, 4294901760
        %v3568 = vsub.f32 %v289, %v3567
        %v3569 = vand.u32 %v3568, 4294901760
        %3570 = vmatpush1.msra.mxu0 %v3569
        %v3571 = vand.u32 %v299, 4294901760
        %v3572 = vsub.f32 %v299, %v3571
        %v3573 = vand.u32 %v3572, 4294901760
        %3574 = vmatprep.subr.mxu0 %v3573
        %v3575 = vand.u32 %v298, 4294901760
        %v3576 = vsub.f32 %v298, %v3575
        %v3577 = vand.u32 %v3576, 4294901760
        %3578 = vmatpush1.msra.mxu0 %v3577
        %v3579 = vand.u32 %v308, 4294901760
        %v3580 = vsub.f32 %v308, %v3579
        %v3581 = vand.u32 %v3580, 4294901760
        %3582 = vmatprep.subr.mxu0 %v3581
        %v3583 = vand.u32 %v307, 4294901760
        %v3584 = vsub.f32 %v307, %v3583
        %v3585 = vand.u32 %v3584, 4294901760
        %3586 = vmatpush1.msra.mxu0 %v3585
        %v3587 = vand.u32 %v317, 4294901760
        %v3588 = vsub.f32 %v317, %v3587
        %v3589 = vand.u32 %v3588, 4294901760
        %3590 = vmatprep.subr.mxu0 %v3589
        %v3591 = vand.u32 %v316, 4294901760
        %v3592 = vsub.f32 %v316, %v3591
        %v3593 = vand.u32 %v3592, 4294901760
        %3594 = vmatpush1.msra.mxu0 %v3593
        %3595 = vmatprep.subr.mxu0 0.0
        %3596 = vmatpush1.msra.mxu0 0.0
        %3597 = vmatprep.subr.mxu0 0.0
        %3598 = vmatpush1.msra.mxu0 0.0
        %3599 = vmatprep.subr.mxu0 0.0
        %3600 = vmatpush1.msra.mxu0 0.0
        %3601 = vmatprep.subr.mxu0 0.0
        %3602 = vmatpush1.msra.mxu0 0.0
        %3603 = vmatprep.subr.mxu0 0.0
        %3604 = vmatpush1.msra.mxu0 0.0
        %3605 = vmatprep.subr.mxu0 0.0
        %3606 = vmatpush1.msra.mxu0 0.0
        %3607 = vmatprep.subr.mxu0 0.0
        %3608 = vmatpush1.msra.mxu0 0.0
        %3609 = vmatprep.subr.mxu0 0.0
        %3610 = vmatpush1.msra.mxu0 0.0
        %3611 = vmatprep.subr.mxu0 0.0
        %3612 = vmatpush1.msra.mxu0 0.0
        %3613 = vmatprep.subr.mxu0 0.0
        %3614 = vmatpush1.msra.mxu0 0.0
        %3615 = vmatprep.subr.mxu0 0.0
        %3616 = vmatpush1.msra.mxu0 0.0
        %3617 = vmatprep.subr.mxu0 0.0
        %3618 = vmatpush1.msra.mxu0 0.0
        %3619 = vmatprep.subr.mxu0 0.0
        %3620 = vmatpush1.msra.mxu0 0.0
        %3621 = vmatprep.subr.mxu0 0.0
        %3622 = vmatpush1.msra.mxu0 0.0
        %3623 = vmatprep.subr.mxu0 0.0
        %3624 = vmatpush1.msra.mxu0 0.0
        %3625 = vmatprep.subr.mxu0 0.0
        %3626 = vmatpush1.msra.mxu0 0.0
        %3627 = vmatprep.mubr.f32.mxu0 0.0
        %v3628 = vand.u32 %v174, 4294901760
        %3629 = vmatmul.mubr.f32.gmra.mrb[0].mxu0 %v3628
        %v3630 = vpop.f32.mrb[0].mxu0
        %v3631 = vadd.f32 %v3463, %v3630
        %v3632 = vpop.f32.mrb[0].mxu0
        %v3633 = vadd.f32 %v3465, %v3632
        %3634 = vdwg.mxu0
        %v3635 = vand.u32 %v182, 4294901760
        %3636 = vmatprep.subr.mxu0 %v3635
        %v3637 = vand.u32 %v181, 4294901760
        %3638 = vmatpush1.msra.mxu0 %v3637
        %v3639 = vand.u32 %v191, 4294901760
        %3640 = vmatprep.subr.mxu0 %v3639
        %v3641 = vand.u32 %v190, 4294901760
        %3642 = vmatpush1.msra.mxu0 %v3641
        %v3643 = vand.u32 %v200, 4294901760
        %3644 = vmatprep.subr.mxu0 %v3643
        %v3645 = vand.u32 %v199, 4294901760
        %3646 = vmatpush1.msra.mxu0 %v3645
        %v3647 = vand.u32 %v209, 4294901760
        %3648 = vmatprep.subr.mxu0 %v3647
        %v3649 = vand.u32 %v208, 4294901760
        %3650 = vmatpush1.msra.mxu0 %v3649
        %v3651 = vand.u32 %v218, 4294901760
        %3652 = vmatprep.subr.mxu0 %v3651
        %v3653 = vand.u32 %v217, 4294901760
        %3654 = vmatpush1.msra.mxu0 %v3653
        %v3655 = vand.u32 %v227, 4294901760
        %3656 = vmatprep.subr.mxu0 %v3655
        %v3657 = vand.u32 %v226, 4294901760
        %3658 = vmatpush1.msra.mxu0 %v3657
        %v3659 = vand.u32 %v236, 4294901760
        %3660 = vmatprep.subr.mxu0 %v3659
        %v3661 = vand.u32 %v235, 4294901760
        %3662 = vmatpush1.msra.mxu0 %v3661
        %v3663 = vand.u32 %v245, 4294901760
        %3664 = vmatprep.subr.mxu0 %v3663
        %v3665 = vand.u32 %v244, 4294901760
        %3666 = vmatpush1.msra.mxu0 %v3665
        %v3667 = vand.u32 %v254, 4294901760
        %3668 = vmatprep.subr.mxu0 %v3667
        %v3669 = vand.u32 %v253, 4294901760
        %3670 = vmatpush1.msra.mxu0 %v3669
        %v3671 = vand.u32 %v263, 4294901760
        %3672 = vmatprep.subr.mxu0 %v3671
        %v3673 = vand.u32 %v262, 4294901760
        %3674 = vmatpush1.msra.mxu0 %v3673
        %v3675 = vand.u32 %v272, 4294901760
        %3676 = vmatprep.subr.mxu0 %v3675
        %v3677 = vand.u32 %v271, 4294901760
        %3678 = vmatpush1.msra.mxu0 %v3677
        %v3679 = vand.u32 %v281, 4294901760
        %3680 = vmatprep.subr.mxu0 %v3679
        %v3681 = vand.u32 %v280, 4294901760
        %3682 = vmatpush1.msra.mxu0 %v3681
        %v3683 = vand.u32 %v290, 4294901760
        %3684 = vmatprep.subr.mxu0 %v3683
        %v3685 = vand.u32 %v289, 4294901760
        %3686 = vmatpush1.msra.mxu0 %v3685
        %v3687 = vand.u32 %v299, 4294901760
        %3688 = vmatprep.subr.mxu0 %v3687
        %v3689 = vand.u32 %v298, 4294901760
        %3690 = vmatpush1.msra.mxu0 %v3689
        %v3691 = vand.u32 %v308, 4294901760
        %3692 = vmatprep.subr.mxu0 %v3691
        %v3693 = vand.u32 %v307, 4294901760
        %3694 = vmatpush1.msra.mxu0 %v3693
        %v3695 = vand.u32 %v317, 4294901760
        %3696 = vmatprep.subr.mxu0 %v3695
        %v3697 = vand.u32 %v316, 4294901760
        %3698 = vmatpush1.msra.mxu0 %v3697
        %3699 = vmatprep.subr.mxu0 0.0
        %3700 = vmatpush1.msra.mxu0 0.0
        %3701 = vmatprep.subr.mxu0 0.0
        %3702 = vmatpush1.msra.mxu0 0.0
        %3703 = vmatprep.subr.mxu0 0.0
        %3704 = vmatpush1.msra.mxu0 0.0
        %3705 = vmatprep.subr.mxu0 0.0
        %3706 = vmatpush1.msra.mxu0 0.0
        %3707 = vmatprep.subr.mxu0 0.0
        %3708 = vmatpush1.msra.mxu0 0.0
        %3709 = vmatprep.subr.mxu0 0.0
        %3710 = vmatpush1.msra.mxu0 0.0
        %3711 = vmatprep.subr.mxu0 0.0
        %3712 = vmatpush1.msra.mxu0 0.0
        %3713 = vmatprep.subr.mxu0 0.0
        %3714 = vmatpush1.msra.mxu0 0.0
        %3715 = vmatprep.subr.mxu0 0.0
        %3716 = vmatpush1.msra.mxu0 0.0
        %3717 = vmatprep.subr.mxu0 0.0
        %3718 = vmatpush1.msra.mxu0 0.0
        %3719 = vmatprep.subr.mxu0 0.0
        %3720 = vmatpush1.msra.mxu0 0.0
        %3721 = vmatprep.subr.mxu0 0.0
        %3722 = vmatpush1.msra.mxu0 0.0
        %3723 = vmatprep.subr.mxu0 0.0
        %3724 = vmatpush1.msra.mxu0 0.0
        %3725 = vmatprep.subr.mxu0 0.0
        %3726 = vmatpush1.msra.mxu0 0.0
        %3727 = vmatprep.subr.mxu0 0.0
        %3728 = vmatpush1.msra.mxu0 0.0
        %3729 = vmatprep.subr.mxu0 0.0
        %3730 = vmatpush1.msra.mxu0 0.0
        %3731 = vmatprep.mubr.f32.mxu0 0.0
        %v3732 = vand.u32 %v174, 4294901760
        %3733 = vmatmul.mubr.f32.gmra.mrb[0].mxu0 %v3732
        %v3734 = vpop.f32.mrb[0].mxu0
        %v3735 = vadd.f32 %v3631, %v3734
        %v3736 = vpop.f32.mrb[0].mxu0
        %v3737 = vadd.f32 %v3633, %v3736
        %3738 = vdwg.mxu0
        %3739 = vmatprep.subr.mxu0 0.0
        %v3740 = vand.u32 %v183, 4294901760
        %3741 = vmatpush1.msra.mxu0 %v3740
        %3742 = vmatprep.subr.mxu0 0.0
        %v3743 = vand.u32 %v192, 4294901760
        %3744 = vmatpush1.msra.mxu0 %v3743
        %3745 = vmatprep.subr.mxu0 0.0
        %v3746 = vand.u32 %v201, 4294901760
        %3747 = vmatpush1.msra.mxu0 %v3746
        %3748 = vmatprep.subr.mxu0 0.0
        %v3749 = vand.u32 %v210, 4294901760
        %3750 = vmatpush1.msra.mxu0 %v3749
        %3751 = vmatprep.subr.mxu0 0.0
        %v3752 = vand.u32 %v219, 4294901760
        %3753 = vmatpush1.msra.mxu0 %v3752
        %3754 = vmatprep.subr.mxu0 0.0
        %v3755 = vand.u32 %v228, 4294901760
        %3756 = vmatpush1.msra.mxu0 %v3755
        %3757 = vmatprep.subr.mxu0 0.0
        %v3758 = vand.u32 %v237, 4294901760
        %3759 = vmatpush1.msra.mxu0 %v3758
        %3760 = vmatprep.subr.mxu0 0.0
        %v3761 = vand.u32 %v246, 4294901760
        %3762 = vmatpush1.msra.mxu0 %v3761
        %3763 = vmatprep.subr.mxu0 0.0
        %v3764 = vand.u32 %v255, 4294901760
        %3765 = vmatpush1.msra.mxu0 %v3764
        %3766 = vmatprep.subr.mxu0 0.0
        %v3767 = vand.u32 %v264, 4294901760
        %3768 = vmatpush1.msra.mxu0 %v3767
        %3769 = vmatprep.subr.mxu0 0.0
        %v3770 = vand.u32 %v273, 4294901760
        %3771 = vmatpush1.msra.mxu0 %v3770
        %3772 = vmatprep.subr.mxu0 0.0
        %v3773 = vand.u32 %v282, 4294901760
        %3774 = vmatpush1.msra.mxu0 %v3773
        %3775 = vmatprep.subr.mxu0 0.0
        %v3776 = vand.u32 %v291, 4294901760
        %3777 = vmatpush1.msra.mxu0 %v3776
        %3778 = vmatprep.subr.mxu0 0.0
        %v3779 = vand.u32 %v300, 4294901760
        %3780 = vmatpush1.msra.mxu0 %v3779
        %3781 = vmatprep.subr.mxu0 0.0
        %v3782 = vand.u32 %v309, 4294901760
        %3783 = vmatpush1.msra.mxu0 %v3782
        %3784 = vmatprep.subr.mxu0 0.0
        %v3785 = vand.u32 %v318, 4294901760
        %3786 = vmatpush1.msra.mxu0 %v3785
        %3787 = vmatprep.subr.mxu0 0.0
        %3788 = vmatpush1.msra.mxu0 0.0
        %3789 = vmatprep.subr.mxu0 0.0
        %3790 = vmatpush1.msra.mxu0 0.0
        %3791 = vmatprep.subr.mxu0 0.0
        %3792 = vmatpush1.msra.mxu0 0.0
        %3793 = vmatprep.subr.mxu0 0.0
        %3794 = vmatpush1.msra.mxu0 0.0
        %3795 = vmatprep.subr.mxu0 0.0
        %3796 = vmatpush1.msra.mxu0 0.0
        %3797 = vmatprep.subr.mxu0 0.0
        %3798 = vmatpush1.msra.mxu0 0.0
        %3799 = vmatprep.subr.mxu0 0.0
        %3800 = vmatpush1.msra.mxu0 0.0
        %3801 = vmatprep.subr.mxu0 0.0
        %3802 = vmatpush1.msra.mxu0 0.0
        %3803 = vmatprep.subr.mxu0 0.0
        %3804 = vmatpush1.msra.mxu0 0.0
        %3805 = vmatprep.subr.mxu0 0.0
        %3806 = vmatpush1.msra.mxu0 0.0
        %3807 = vmatprep.subr.mxu0 0.0
        %3808 = vmatpush1.msra.mxu0 0.0
        %3809 = vmatprep.subr.mxu0 0.0
        %3810 = vmatpush1.msra.mxu0 0.0
        %3811 = vmatprep.subr.mxu0 0.0
        %3812 = vmatpush1.msra.mxu0 0.0
        %3813 = vmatprep.subr.mxu0 0.0
        %3814 = vmatpush1.msra.mxu0 0.0
        %3815 = vmatprep.subr.mxu0 0.0
        %3816 = vmatpush1.msra.mxu0 0.0
        %3817 = vmatprep.subr.mxu0 0.0
        %3818 = vmatpush1.msra.mxu0 0.0
        %3819 = vmatprep.mubr.f32.mxu0 0.0
        %v3820 = vand.u32 %v174, 4294901760
        %v3821 = vsub.f32 %v174, %v3820
        %v3822 = vand.u32 %v3821, 4294901760
        %v3823 = vsub.f32 %v3821, %v3822
        %v3824 = vand.u32 %v3823, 4294901760
        %3825 = vmatmul.mubr.f32.gmra.mrb[0].mxu0 %v3824
        %v3826 = vpop.f32.mrb[0].mxu0
        %v3827 = vadd.f32 0.0, %v3826
        %v3828 = vpop.f32.mrb[0].mxu0
        %3829 = vdwg.mxu0
        %3830 = vmatprep.subr.mxu0 0.0
        %v3831 = vand.u32 %v183, 4294901760
        %v3832 = vsub.f32 %v183, %v3831
        %v3833 = vand.u32 %v3832, 4294901760
        %v3834 = vsub.f32 %v3832, %v3833
        %v3835 = vand.u32 %v3834, 4294901760
        %3836 = vmatpush1.msra.mxu0 %v3835
        %3837 = vmatprep.subr.mxu0 0.0
        %v3838 = vand.u32 %v192, 4294901760
        %v3839 = vsub.f32 %v192, %v3838
        %v3840 = vand.u32 %v3839, 4294901760
        %v3841 = vsub.f32 %v3839, %v3840
        %v3842 = vand.u32 %v3841, 4294901760
        %3843 = vmatpush1.msra.mxu0 %v3842
        %3844 = vmatprep.subr.mxu0 0.0
        %v3845 = vand.u32 %v201, 4294901760
        %v3846 = vsub.f32 %v201, %v3845
        %v3847 = vand.u32 %v3846, 4294901760
        %v3848 = vsub.f32 %v3846, %v3847
        %v3849 = vand.u32 %v3848, 4294901760
        %3850 = vmatpush1.msra.mxu0 %v3849
        %3851 = vmatprep.subr.mxu0 0.0
        %v3852 = vand.u32 %v210, 4294901760
        %v3853 = vsub.f32 %v210, %v3852
        %v3854 = vand.u32 %v3853, 4294901760
        %v3855 = vsub.f32 %v3853, %v3854
        %v3856 = vand.u32 %v3855, 4294901760
        %3857 = vmatpush1.msra.mxu0 %v3856
        %3858 = vmatprep.subr.mxu0 0.0
        %v3859 = vand.u32 %v219, 4294901760
        %v3860 = vsub.f32 %v219, %v3859
        %v3861 = vand.u32 %v3860, 4294901760
        %v3862 = vsub.f32 %v3860, %v3861
        %v3863 = vand.u32 %v3862, 4294901760
        %3864 = vmatpush1.msra.mxu0 %v3863
        %3865 = vmatprep.subr.mxu0 0.0
        %v3866 = vand.u32 %v228, 4294901760
        %v3867 = vsub.f32 %v228, %v3866
        %v3868 = vand.u32 %v3867, 4294901760
        %v3869 = vsub.f32 %v3867, %v3868
        %v3870 = vand.u32 %v3869, 4294901760
        %3871 = vmatpush1.msra.mxu0 %v3870
        %3872 = vmatprep.subr.mxu0 0.0
        %v3873 = vand.u32 %v237, 4294901760
        %v3874 = vsub.f32 %v237, %v3873
        %v3875 = vand.u32 %v3874, 4294901760
        %v3876 = vsub.f32 %v3874, %v3875
        %v3877 = vand.u32 %v3876, 4294901760
        %3878 = vmatpush1.msra.mxu0 %v3877
        %3879 = vmatprep.subr.mxu0 0.0
        %v3880 = vand.u32 %v246, 4294901760
        %v3881 = vsub.f32 %v246, %v3880
        %v3882 = vand.u32 %v3881, 4294901760
        %v3883 = vsub.f32 %v3881, %v3882
        %v3884 = vand.u32 %v3883, 4294901760
        %3885 = vmatpush1.msra.mxu0 %v3884
        %3886 = vmatprep.subr.mxu0 0.0
        %v3887 = vand.u32 %v255, 4294901760
        %v3888 = vsub.f32 %v255, %v3887
        %v3889 = vand.u32 %v3888, 4294901760
        %v3890 = vsub.f32 %v3888, %v3889
        %v3891 = vand.u32 %v3890, 4294901760
        %3892 = vmatpush1.msra.mxu0 %v3891
        %3893 = vmatprep.subr.mxu0 0.0
        %v3894 = vand.u32 %v264, 4294901760
        %v3895 = vsub.f32 %v264, %v3894
        %v3896 = vand.u32 %v3895, 4294901760
        %v3897 = vsub.f32 %v3895, %v3896
        %v3898 = vand.u32 %v3897, 4294901760
        %3899 = vmatpush1.msra.mxu0 %v3898
        %3900 = vmatprep.subr.mxu0 0.0
        %v3901 = vand.u32 %v273, 4294901760
        %v3902 = vsub.f32 %v273, %v3901
        %v3903 = vand.u32 %v3902, 4294901760
        %v3904 = vsub.f32 %v3902, %v3903
        %v3905 = vand.u32 %v3904, 4294901760
        %3906 = vmatpush1.msra.mxu0 %v3905
        %3907 = vmatprep.subr.mxu0 0.0
        %v3908 = vand.u32 %v282, 4294901760
        %v3909 = vsub.f32 %v282, %v3908
        %v3910 = vand.u32 %v3909, 4294901760
        %v3911 = vsub.f32 %v3909, %v3910
        %v3912 = vand.u32 %v3911, 4294901760
        %3913 = vmatpush1.msra.mxu0 %v3912
        %3914 = vmatprep.subr.mxu0 0.0
        %v3915 = vand.u32 %v291, 4294901760
        %v3916 = vsub.f32 %v291, %v3915
        %v3917 = vand.u32 %v3916, 4294901760
        %v3918 = vsub.f32 %v3916, %v3917
        %v3919 = vand.u32 %v3918, 4294901760
        %3920 = vmatpush1.msra.mxu0 %v3919
        %3921 = vmatprep.subr.mxu0 0.0
        %v3922 = vand.u32 %v300, 4294901760
        %v3923 = vsub.f32 %v300, %v3922
        %v3924 = vand.u32 %v3923, 4294901760
        %v3925 = vsub.f32 %v3923, %v3924
        %v3926 = vand.u32 %v3925, 4294901760
        %3927 = vmatpush1.msra.mxu0 %v3926
        %3928 = vmatprep.subr.mxu0 0.0
        %v3929 = vand.u32 %v309, 4294901760
        %v3930 = vsub.f32 %v309, %v3929
        %v3931 = vand.u32 %v3930, 4294901760
        %v3932 = vsub.f32 %v3930, %v3931
        %v3933 = vand.u32 %v3932, 4294901760
        %3934 = vmatpush1.msra.mxu0 %v3933
        %3935 = vmatprep.subr.mxu0 0.0
        %v3936 = vand.u32 %v318, 4294901760
        %v3937 = vsub.f32 %v318, %v3936
        %v3938 = vand.u32 %v3937, 4294901760
        %v3939 = vsub.f32 %v3937, %v3938
        %v3940 = vand.u32 %v3939, 4294901760
        %3941 = vmatpush1.msra.mxu0 %v3940
        %3942 = vmatprep.subr.mxu0 0.0
        %3943 = vmatpush1.msra.mxu0 0.0
        %3944 = vmatprep.subr.mxu0 0.0
        %3945 = vmatpush1.msra.mxu0 0.0
        %3946 = vmatprep.subr.mxu0 0.0
        %3947 = vmatpush1.msra.mxu0 0.0
        %3948 = vmatprep.subr.mxu0 0.0
        %3949 = vmatpush1.msra.mxu0 0.0
        %3950 = vmatprep.subr.mxu0 0.0
        %3951 = vmatpush1.msra.mxu0 0.0
        %3952 = vmatprep.subr.mxu0 0.0
        %3953 = vmatpush1.msra.mxu0 0.0
        %3954 = vmatprep.subr.mxu0 0.0
        %3955 = vmatpush1.msra.mxu0 0.0
        %3956 = vmatprep.subr.mxu0 0.0
        %3957 = vmatpush1.msra.mxu0 0.0
        %3958 = vmatprep.subr.mxu0 0.0
        %3959 = vmatpush1.msra.mxu0 0.0
        %3960 = vmatprep.subr.mxu0 0.0
        %3961 = vmatpush1.msra.mxu0 0.0
        %3962 = vmatprep.subr.mxu0 0.0
        %3963 = vmatpush1.msra.mxu0 0.0
        %3964 = vmatprep.subr.mxu0 0.0
        %3965 = vmatpush1.msra.mxu0 0.0
        %3966 = vmatprep.subr.mxu0 0.0
        %3967 = vmatpush1.msra.mxu0 0.0
        %3968 = vmatprep.subr.mxu0 0.0
        %3969 = vmatpush1.msra.mxu0 0.0
        %3970 = vmatprep.subr.mxu0 0.0
        %3971 = vmatpush1.msra.mxu0 0.0
        %3972 = vmatprep.subr.mxu0 0.0
        %3973 = vmatpush1.msra.mxu0 0.0
        %3974 = vmatprep.mubr.f32.mxu0 0.0
        %v3975 = vand.u32 %v174, 4294901760
        %3976 = vmatmul.mubr.f32.gmra.mrb[0].mxu0 %v3975
        %v3977 = vpop.f32.mrb[0].mxu0
        %v3978 = vadd.f32 %v3827, %v3977
        %v3979 = vpop.f32.mrb[0].mxu0
        %3980 = vdwg.mxu0
        %3981 = vmatprep.subr.mxu0 0.0
        %v3982 = vand.u32 %v183, 4294901760
        %v3983 = vsub.f32 %v183, %v3982
        %3984 = vmatpush1.msra.mxu0 %v3983
        %3985 = vmatprep.subr.mxu0 0.0
        %v3986 = vand.u32 %v192, 4294901760
        %v3987 = vsub.f32 %v192, %v3986
        %3988 = vmatpush1.msra.mxu0 %v3987
        %3989 = vmatprep.subr.mxu0 0.0
        %v3990 = vand.u32 %v201, 4294901760
        %v3991 = vsub.f32 %v201, %v3990
        %3992 = vmatpush1.msra.mxu0 %v3991
        %3993 = vmatprep.subr.mxu0 0.0
        %v3994 = vand.u32 %v210, 4294901760
        %v3995 = vsub.f32 %v210, %v3994
        %3996 = vmatpush1.msra.mxu0 %v3995
        %3997 = vmatprep.subr.mxu0 0.0
        %v3998 = vand.u32 %v219, 4294901760
        %v3999 = vsub.f32 %v219, %v3998
        %4000 = vmatpush1.msra.mxu0 %v3999
        %4001 = vmatprep.subr.mxu0 0.0
        %v4002 = vand.u32 %v228, 4294901760
        %v4003 = vsub.f32 %v228, %v4002
        %4004 = vmatpush1.msra.mxu0 %v4003
        %4005 = vmatprep.subr.mxu0 0.0
        %v4006 = vand.u32 %v237, 4294901760
        %v4007 = vsub.f32 %v237, %v4006
        %4008 = vmatpush1.msra.mxu0 %v4007
        %4009 = vmatprep.subr.mxu0 0.0
        %v4010 = vand.u32 %v246, 4294901760
        %v4011 = vsub.f32 %v246, %v4010
        %4012 = vmatpush1.msra.mxu0 %v4011
        %4013 = vmatprep.subr.mxu0 0.0
        %v4014 = vand.u32 %v255, 4294901760
        %v4015 = vsub.f32 %v255, %v4014
        %4016 = vmatpush1.msra.mxu0 %v4015
        %4017 = vmatprep.subr.mxu0 0.0
        %v4018 = vand.u32 %v264, 4294901760
        %v4019 = vsub.f32 %v264, %v4018
        %4020 = vmatpush1.msra.mxu0 %v4019
        %4021 = vmatprep.subr.mxu0 0.0
        %v4022 = vand.u32 %v273, 4294901760
        %v4023 = vsub.f32 %v273, %v4022
        %4024 = vmatpush1.msra.mxu0 %v4023
        %4025 = vmatprep.subr.mxu0 0.0
        %v4026 = vand.u32 %v282, 4294901760
        %v4027 = vsub.f32 %v282, %v4026
        %4028 = vmatpush1.msra.mxu0 %v4027
        %4029 = vmatprep.subr.mxu0 0.0
        %v4030 = vand.u32 %v291, 4294901760
        %v4031 = vsub.f32 %v291, %v4030
        %4032 = vmatpush1.msra.mxu0 %v4031
        %4033 = vmatprep.subr.mxu0 0.0
        %v4034 = vand.u32 %v300, 4294901760
        %v4035 = vsub.f32 %v300, %v4034
        %4036 = vmatpush1.msra.mxu0 %v4035
        %4037 = vmatprep.subr.mxu0 0.0
        %v4038 = vand.u32 %v309, 4294901760
        %v4039 = vsub.f32 %v309, %v4038
        %4040 = vmatpush1.msra.mxu0 %v4039
        %4041 = vmatprep.subr.mxu0 0.0
        %v4042 = vand.u32 %v318, 4294901760
        %v4043 = vsub.f32 %v318, %v4042
        %4044 = vmatpush1.msra.mxu0 %v4043
        %4045 = vmatprep.subr.mxu0 0.0
        %4046 = vmatpush1.msra.mxu0 0.0
        %4047 = vmatprep.subr.mxu0 0.0
        %4048 = vmatpush1.msra.mxu0 0.0
        %4049 = vmatprep.subr.mxu0 0.0
        %4050 = vmatpush1.msra.mxu0 0.0
        %4051 = vmatprep.subr.mxu0 0.0
        %4052 = vmatpush1.msra.mxu0 0.0
        %4053 = vmatprep.subr.mxu0 0.0
        %4054 = vmatpush1.msra.mxu0 0.0
        %4055 = vmatprep.subr.mxu0 0.0
        %4056 = vmatpush1.msra.mxu0 0.0
        %4057 = vmatprep.subr.mxu0 0.0
        %4058 = vmatpush1.msra.mxu0 0.0
        %4059 = vmatprep.subr.mxu0 0.0
        %4060 = vmatpush1.msra.mxu0 0.0
        %4061 = vmatprep.subr.mxu0 0.0
        %4062 = vmatpush1.msra.mxu0 0.0
        %4063 = vmatprep.subr.mxu0 0.0
        %4064 = vmatpush1.msra.mxu0 0.0
        %4065 = vmatprep.subr.mxu0 0.0
        %4066 = vmatpush1.msra.mxu0 0.0
        %4067 = vmatprep.subr.mxu0 0.0
        %4068 = vmatpush1.msra.mxu0 0.0
        %4069 = vmatprep.subr.mxu0 0.0
        %4070 = vmatpush1.msra.mxu0 0.0
        %4071 = vmatprep.subr.mxu0 0.0
        %4072 = vmatpush1.msra.mxu0 0.0
        %4073 = vmatprep.subr.mxu0 0.0
        %4074 = vmatpush1.msra.mxu0 0.0
        %4075 = vmatprep.subr.mxu0 0.0
        %4076 = vmatpush1.msra.mxu0 0.0
        %4077 = vmatprep.mubr.f32.mxu0 0.0
        %v4078 = vand.u32 %v174, 4294901760
        %v4079 = vsub.f32 %v174, %v4078
        %4080 = vmatmul.mubr.f32.gmra.mrb[0].mxu0 %v4079
        %v4081 = vpop.f32.mrb[0].mxu0
        %v4082 = vadd.f32 %v3978, %v4081
        %v4083 = vpop.f32.mrb[0].mxu0
        %4084 = vdwg.mxu0
        %4085 = vmatprep.subr.mxu0 0.0
        %v4086 = vand.u32 %v183, 4294901760
        %4087 = vmatpush1.msra.mxu0 %v4086
        %4088 = vmatprep.subr.mxu0 0.0
        %v4089 = vand.u32 %v192, 4294901760
        %4090 = vmatpush1.msra.mxu0 %v4089
        %4091 = vmatprep.subr.mxu0 0.0
        %v4092 = vand.u32 %v201, 4294901760
        %4093 = vmatpush1.msra.mxu0 %v4092
        %4094 = vmatprep.subr.mxu0 0.0
        %v4095 = vand.u32 %v210, 4294901760
        %4096 = vmatpush1.msra.mxu0 %v4095
        %4097 = vmatprep.subr.mxu0 0.0
        %v4098 = vand.u32 %v219, 4294901760
        %4099 = vmatpush1.msra.mxu0 %v4098
        %4100 = vmatprep.subr.mxu0 0.0
        %v4101 = vand.u32 %v228, 4294901760
        %4102 = vmatpush1.msra.mxu0 %v4101
        %4103 = vmatprep.subr.mxu0 0.0
        %v4104 = vand.u32 %v237, 4294901760
        %4105 = vmatpush1.msra.mxu0 %v4104
        %4106 = vmatprep.subr.mxu0 0.0
        %v4107 = vand.u32 %v246, 4294901760
        %4108 = vmatpush1.msra.mxu0 %v4107
        %4109 = vmatprep.subr.mxu0 0.0
        %v4110 = vand.u32 %v255, 4294901760
        %4111 = vmatpush1.msra.mxu0 %v4110
        %4112 = vmatprep.subr.mxu0 0.0
        %v4113 = vand.u32 %v264, 4294901760
        %4114 = vmatpush1.msra.mxu0 %v4113
        %4115 = vmatprep.subr.mxu0 0.0
        %v4116 = vand.u32 %v273, 4294901760
        %4117 = vmatpush1.msra.mxu0 %v4116
        %4118 = vmatprep.subr.mxu0 0.0
        %v4119 = vand.u32 %v282, 4294901760
        %4120 = vmatpush1.msra.mxu0 %v4119
        %4121 = vmatprep.subr.mxu0 0.0
        %v4122 = vand.u32 %v291, 4294901760
        %4123 = vmatpush1.msra.mxu0 %v4122
        %4124 = vmatprep.subr.mxu0 0.0
        %v4125 = vand.u32 %v300, 4294901760
        %4126 = vmatpush1.msra.mxu0 %v4125
        %4127 = vmatprep.subr.mxu0 0.0
        %v4128 = vand.u32 %v309, 4294901760
        %4129 = vmatpush1.msra.mxu0 %v4128
        %4130 = vmatprep.subr.mxu0 0.0
        %v4131 = vand.u32 %v318, 4294901760
        %4132 = vmatpush1.msra.mxu0 %v4131
        %4133 = vmatprep.subr.mxu0 0.0
        %4134 = vmatpush1.msra.mxu0 0.0
        %4135 = vmatprep.subr.mxu0 0.0
        %4136 = vmatpush1.msra.mxu0 0.0
        %4137 = vmatprep.subr.mxu0 0.0
        %4138 = vmatpush1.msra.mxu0 0.0
        %4139 = vmatprep.subr.mxu0 0.0
        %4140 = vmatpush1.msra.mxu0 0.0
        %4141 = vmatprep.subr.mxu0 0.0
        %4142 = vmatpush1.msra.mxu0 0.0
        %4143 = vmatprep.subr.mxu0 0.0
        %4144 = vmatpush1.msra.mxu0 0.0
        %4145 = vmatprep.subr.mxu0 0.0
        %4146 = vmatpush1.msra.mxu0 0.0
        %4147 = vmatprep.subr.mxu0 0.0
        %4148 = vmatpush1.msra.mxu0 0.0
        %4149 = vmatprep.subr.mxu0 0.0
        %4150 = vmatpush1.msra.mxu0 0.0
        %4151 = vmatprep.subr.mxu0 0.0
        %4152 = vmatpush1.msra.mxu0 0.0
        %4153 = vmatprep.subr.mxu0 0.0
        %4154 = vmatpush1.msra.mxu0 0.0
        %4155 = vmatprep.subr.mxu0 0.0
        %4156 = vmatpush1.msra.mxu0 0.0
        %4157 = vmatprep.subr.mxu0 0.0
        %4158 = vmatpush1.msra.mxu0 0.0
        %4159 = vmatprep.subr.mxu0 0.0
        %4160 = vmatpush1.msra.mxu0 0.0
        %4161 = vmatprep.subr.mxu0 0.0
        %4162 = vmatpush1.msra.mxu0 0.0
        %4163 = vmatprep.subr.mxu0 0.0
        %4164 = vmatpush1.msra.mxu0 0.0
        %4165 = vmatprep.mubr.f32.mxu0 0.0
        %v4166 = vand.u32 %v174, 4294901760
        %v4167 = vsub.f32 %v174, %v4166
        %v4168 = vand.u32 %v4167, 4294901760
        %4169 = vmatmul.mubr.f32.gmra.mrb[0].mxu0 %v4168
        %v4170 = vpop.f32.mrb[0].mxu0
        %v4171 = vadd.f32 %v4082, %v4170
        %v4172 = vpop.f32.mrb[0].mxu0
        %4173 = vdwg.mxu0
        %4174 = vmatprep.subr.mxu0 0.0
        %v4175 = vand.u32 %v183, 4294901760
        %v4176 = vsub.f32 %v183, %v4175
        %v4177 = vand.u32 %v4176, 4294901760
        %4178 = vmatpush1.msra.mxu0 %v4177
        %4179 = vmatprep.subr.mxu0 0.0
        %v4180 = vand.u32 %v192, 4294901760
        %v4181 = vsub.f32 %v192, %v4180
        %v4182 = vand.u32 %v4181, 4294901760
        %4183 = vmatpush1.msra.mxu0 %v4182
        %4184 = vmatprep.subr.mxu0 0.0
        %v4185 = vand.u32 %v201, 4294901760
        %v4186 = vsub.f32 %v201, %v4185
        %v4187 = vand.u32 %v4186, 4294901760
        %4188 = vmatpush1.msra.mxu0 %v4187
        %4189 = vmatprep.subr.mxu0 0.0
        %v4190 = vand.u32 %v210, 4294901760
        %v4191 = vsub.f32 %v210, %v4190
        %v4192 = vand.u32 %v4191, 4294901760
        %4193 = vmatpush1.msra.mxu0 %v4192
        %4194 = vmatprep.subr.mxu0 0.0
        %v4195 = vand.u32 %v219, 4294901760
        %v4196 = vsub.f32 %v219, %v4195
        %v4197 = vand.u32 %v4196, 4294901760
        %4198 = vmatpush1.msra.mxu0 %v4197
        %4199 = vmatprep.subr.mxu0 0.0
        %v4200 = vand.u32 %v228, 4294901760
        %v4201 = vsub.f32 %v228, %v4200
        %v4202 = vand.u32 %v4201, 4294901760
        %4203 = vmatpush1.msra.mxu0 %v4202
        %4204 = vmatprep.subr.mxu0 0.0
        %v4205 = vand.u32 %v237, 4294901760
        %v4206 = vsub.f32 %v237, %v4205
        %v4207 = vand.u32 %v4206, 4294901760
        %4208 = vmatpush1.msra.mxu0 %v4207
        %4209 = vmatprep.subr.mxu0 0.0
        %v4210 = vand.u32 %v246, 4294901760
        %v4211 = vsub.f32 %v246, %v4210
        %v4212 = vand.u32 %v4211, 4294901760
        %4213 = vmatpush1.msra.mxu0 %v4212
        %4214 = vmatprep.subr.mxu0 0.0
        %v4215 = vand.u32 %v255, 4294901760
        %v4216 = vsub.f32 %v255, %v4215
        %v4217 = vand.u32 %v4216, 4294901760
        %4218 = vmatpush1.msra.mxu0 %v4217
        %4219 = vmatprep.subr.mxu0 0.0
        %v4220 = vand.u32 %v264, 4294901760
        %v4221 = vsub.f32 %v264, %v4220
        %v4222 = vand.u32 %v4221, 4294901760
        %4223 = vmatpush1.msra.mxu0 %v4222
        %4224 = vmatprep.subr.mxu0 0.0
        %v4225 = vand.u32 %v273, 4294901760
        %v4226 = vsub.f32 %v273, %v4225
        %v4227 = vand.u32 %v4226, 4294901760
        %4228 = vmatpush1.msra.mxu0 %v4227
        %4229 = vmatprep.subr.mxu0 0.0
        %v4230 = vand.u32 %v282, 4294901760
        %v4231 = vsub.f32 %v282, %v4230
        %v4232 = vand.u32 %v4231, 4294901760
        %4233 = vmatpush1.msra.mxu0 %v4232
        %4234 = vmatprep.subr.mxu0 0.0
        %v4235 = vand.u32 %v291, 4294901760
        %v4236 = vsub.f32 %v291, %v4235
        %v4237 = vand.u32 %v4236, 4294901760
        %4238 = vmatpush1.msra.mxu0 %v4237
        %4239 = vmatprep.subr.mxu0 0.0
        %v4240 = vand.u32 %v300, 4294901760
        %v4241 = vsub.f32 %v300, %v4240
        %v4242 = vand.u32 %v4241, 4294901760
        %4243 = vmatpush1.msra.mxu0 %v4242
        %4244 = vmatprep.subr.mxu0 0.0
        %v4245 = vand.u32 %v309, 4294901760
        %v4246 = vsub.f32 %v309, %v4245
        %v4247 = vand.u32 %v4246, 4294901760
        %4248 = vmatpush1.msra.mxu0 %v4247
        %4249 = vmatprep.subr.mxu0 0.0
        %v4250 = vand.u32 %v318, 4294901760
        %v4251 = vsub.f32 %v318, %v4250
        %v4252 = vand.u32 %v4251, 4294901760
        %4253 = vmatpush1.msra.mxu0 %v4252
        %4254 = vmatprep.subr.mxu0 0.0
        %4255 = vmatpush1.msra.mxu0 0.0
        %4256 = vmatprep.subr.mxu0 0.0
        %4257 = vmatpush1.msra.mxu0 0.0
        %4258 = vmatprep.subr.mxu0 0.0
        %4259 = vmatpush1.msra.mxu0 0.0
        %4260 = vmatprep.subr.mxu0 0.0
        %4261 = vmatpush1.msra.mxu0 0.0
        %4262 = vmatprep.subr.mxu0 0.0
        %4263 = vmatpush1.msra.mxu0 0.0
        %4264 = vmatprep.subr.mxu0 0.0
        %4265 = vmatpush1.msra.mxu0 0.0
        %4266 = vmatprep.subr.mxu0 0.0
        %4267 = vmatpush1.msra.mxu0 0.0
        %4268 = vmatprep.subr.mxu0 0.0
        %4269 = vmatpush1.msra.mxu0 0.0
        %4270 = vmatprep.subr.mxu0 0.0
        %4271 = vmatpush1.msra.mxu0 0.0
        %4272 = vmatprep.subr.mxu0 0.0
        %4273 = vmatpush1.msra.mxu0 0.0
        %4274 = vmatprep.subr.mxu0 0.0
        %4275 = vmatpush1.msra.mxu0 0.0
        %4276 = vmatprep.subr.mxu0 0.0
        %4277 = vmatpush1.msra.mxu0 0.0
        %4278 = vmatprep.subr.mxu0 0.0
        %4279 = vmatpush1.msra.mxu0 0.0
        %4280 = vmatprep.subr.mxu0 0.0
        %4281 = vmatpush1.msra.mxu0 0.0
        %4282 = vmatprep.subr.mxu0 0.0
        %4283 = vmatpush1.msra.mxu0 0.0
        %4284 = vmatprep.subr.mxu0 0.0
        %4285 = vmatpush1.msra.mxu0 0.0
        %4286 = vmatprep.mubr.f32.mxu0 0.0
        %v4287 = vand.u32 %v174, 4294901760
        %4288 = vmatmul.mubr.f32.gmra.mrb[0].mxu0 %v4287
        %v4289 = vpop.f32.mrb[0].mxu0
        %v4290 = vadd.f32 %v4171, %v4289
        %v4291 = vpop.f32.mrb[0].mxu0
        %4292 = vdwg.mxu0
        %4293 = vmatprep.subr.mxu0 0.0
        %v4294 = vand.u32 %v183, 4294901760
        %4295 = vmatpush1.msra.mxu0 %v4294
        %4296 = vmatprep.subr.mxu0 0.0
        %v4297 = vand.u32 %v192, 4294901760
        %4298 = vmatpush1.msra.mxu0 %v4297
        %4299 = vmatprep.subr.mxu0 0.0
        %v4300 = vand.u32 %v201, 4294901760
        %4301 = vmatpush1.msra.mxu0 %v4300
        %4302 = vmatprep.subr.mxu0 0.0
        %v4303 = vand.u32 %v210, 4294901760
        %4304 = vmatpush1.msra.mxu0 %v4303
        %4305 = vmatprep.subr.mxu0 0.0
        %v4306 = vand.u32 %v219, 4294901760
        %4307 = vmatpush1.msra.mxu0 %v4306
        %4308 = vmatprep.subr.mxu0 0.0
        %v4309 = vand.u32 %v228, 4294901760
        %4310 = vmatpush1.msra.mxu0 %v4309
        %4311 = vmatprep.subr.mxu0 0.0
        %v4312 = vand.u32 %v237, 4294901760
        %4313 = vmatpush1.msra.mxu0 %v4312
        %4314 = vmatprep.subr.mxu0 0.0
        %v4315 = vand.u32 %v246, 4294901760
        %4316 = vmatpush1.msra.mxu0 %v4315
        %4317 = vmatprep.subr.mxu0 0.0
        %v4318 = vand.u32 %v255, 4294901760
        %4319 = vmatpush1.msra.mxu0 %v4318
        %4320 = vmatprep.subr.mxu0 0.0
        %v4321 = vand.u32 %v264, 4294901760
        %4322 = vmatpush1.msra.mxu0 %v4321
        %4323 = vmatprep.subr.mxu0 0.0
        %v4324 = vand.u32 %v273, 4294901760
        %4325 = vmatpush1.msra.mxu0 %v4324
        %4326 = vmatprep.subr.mxu0 0.0
        %v4327 = vand.u32 %v282, 4294901760
        %4328 = vmatpush1.msra.mxu0 %v4327
        %4329 = vmatprep.subr.mxu0 0.0
        %v4330 = vand.u32 %v291, 4294901760
        %4331 = vmatpush1.msra.mxu0 %v4330
        %4332 = vmatprep.subr.mxu0 0.0
        %v4333 = vand.u32 %v300, 4294901760
        %4334 = vmatpush1.msra.mxu0 %v4333
        %4335 = vmatprep.subr.mxu0 0.0
        %v4336 = vand.u32 %v309, 4294901760
        %4337 = vmatpush1.msra.mxu0 %v4336
        %4338 = vmatprep.subr.mxu0 0.0
        %v4339 = vand.u32 %v318, 4294901760
        %4340 = vmatpush1.msra.mxu0 %v4339
        %4341 = vmatprep.subr.mxu0 0.0
        %4342 = vmatpush1.msra.mxu0 0.0
        %4343 = vmatprep.subr.mxu0 0.0
        %4344 = vmatpush1.msra.mxu0 0.0
        %4345 = vmatprep.subr.mxu0 0.0
        %4346 = vmatpush1.msra.mxu0 0.0
        %4347 = vmatprep.subr.mxu0 0.0
        %4348 = vmatpush1.msra.mxu0 0.0
        %4349 = vmatprep.subr.mxu0 0.0
        %4350 = vmatpush1.msra.mxu0 0.0
        %4351 = vmatprep.subr.mxu0 0.0
        %4352 = vmatpush1.msra.mxu0 0.0
        %4353 = vmatprep.subr.mxu0 0.0
        %4354 = vmatpush1.msra.mxu0 0.0
        %4355 = vmatprep.subr.mxu0 0.0
        %4356 = vmatpush1.msra.mxu0 0.0
        %4357 = vmatprep.subr.mxu0 0.0
        %4358 = vmatpush1.msra.mxu0 0.0
        %4359 = vmatprep.subr.mxu0 0.0
        %4360 = vmatpush1.msra.mxu0 0.0
        %4361 = vmatprep.subr.mxu0 0.0
        %4362 = vmatpush1.msra.mxu0 0.0
        %4363 = vmatprep.subr.mxu0 0.0
        %4364 = vmatpush1.msra.mxu0 0.0
        %4365 = vmatprep.subr.mxu0 0.0
        %4366 = vmatpush1.msra.mxu0 0.0
        %4367 = vmatprep.subr.mxu0 0.0
        %4368 = vmatpush1.msra.mxu0 0.0
        %4369 = vmatprep.subr.mxu0 0.0
        %4370 = vmatpush1.msra.mxu0 0.0
        %4371 = vmatprep.subr.mxu0 0.0
        %4372 = vmatpush1.msra.mxu0 0.0
        %4373 = vmatprep.mubr.f32.mxu0 0.0
        %v4374 = vand.u32 %v174, 4294901760
        %4375 = vmatmul.mubr.f32.gmra.mrb[0].mxu0 %v4374
        %v4376 = vpop.f32.mrb[0].mxu0
        %v4377 = vadd.f32 %v4290, %v4376
        %v4378 = vpop.f32.mrb[0].mxu0
        %4379 = vdwg.mxu0
        %4380 = vst [vmem:[%s173] sm:$0xff] %v1170
        %4381 = vst [vmem:[%s173 + $0x8] sm:$0xff] %v1172
        %4382 = vst [vmem:[%s173 + $0x10] sm:$0xff] %v2025
        %4383 = vst [vmem:[%s173 + $0x18] sm:$0xff] %v2027
        %4384 = vst [vmem:[%s173 + $0x20] sm:$0xff] %v2880
        %4385 = vst [vmem:[%s173 + $0x28] sm:$0xff] %v2882
        %4386 = vst [vmem:[%s173 + $0x30] sm:$0xff] %v3735
        %4387 = vst [vmem:[%s173 + $0x38] sm:$0xff] %v3737
        %4388 = vst [vmem:[%s173 + $0x40] sm:$0xff] %v4377
        %s4389 = sand.u32 %s75, 1
        %s4390 = scalar_lea.sflag [#allocation4], %s4389
        %s4391 = sand.u32 %s75, 1
        %s4392 = smul.addr %s4391, 72
        %s4393 = scalar_lea.vmem [#allocation7], %s4392
        // Predicated region
        $region37: #{tpu_custom_call.1} parent=27 // pred_check
          %p4394 = pneg %p85
        $region38: #{tpu_custom_call.1} parent=27 // pred_check_branch
          %4396 = sbr.rel (%p4394) target = $region40
        $region39: #{tpu_custom_call.1} parent=27 // pred_region
          %s4398 = ssub.s32 1152, 1152
          %4399 = vsyncadd %s4390, %s4398
          %s4400 = smul.addr %s20, 9
          %s4401 = smul.addr %s4400, 128
          %s4402 = scalar_lea.hbm %s2, %s4401
          %s4404 = sshll.u32 %s4393, 4
          %s4405 = int_to_ptr.vmem [resolvable:$true] %s4404
          %4407 = dma.vmem_to_hbm [thread:$0]  %s4405, 1152, %s4402, %s4390
        $region40: #{tpu_custom_call.1} parent=27 // pred_fallthru
          _
      $region28: #{tpu_custom_call.1} parent=5 // pred_fallthru
        _
      %p4408 = scmp.le.s32.totalorder 2, %s15
      // Predicated region
      $region41: #{tpu_custom_call.1} parent=5 // pred_check
        %p4409 = pneg %p4408
      $region42: #{tpu_custom_call.1} parent=5 // pred_check_branch
        %4411 = sbr.rel (%p4409) target = $region44
      $region43: #{tpu_custom_call.1} parent=5 // pred_region
        %s4412 = ssub.s32 %s15, 2
        // Predicated region
        $region45: #{tpu_custom_call.1} parent=43 // pred_check
          %p4413 = pneg %p91
        $region46: #{tpu_custom_call.1} parent=43 // pred_check_branch
          %4415 = sbr.rel (%p4413) target = $region48
        $region47: #{tpu_custom_call.1} parent=43 // pred_region
          %s4416 = sand.u32 %s76, 1
          %s4417 = scalar_lea.sflag [#allocation4], %s4416
          %s4418 = sand.u32 %s76, 1
          %s4419 = smul.addr %s4418, 72
          %s4420 = scalar_lea.vmem [#allocation7], %s4419
          %4421 = dma.done %s4417, 1152
        $region48: #{tpu_custom_call.1} parent=43 // pred_fallthru
          _
      $region44: #{tpu_custom_call.1} parent=5 // pred_fallthru
        _
    $region6: #{tpu_custom_call.1} parent=1 // loop_footer
      %s19 = sadd.s32 1, %s15
    $region7: #{tpu_custom_call.1} parent=1 // loop_footer_branch
      %14 = sbr.rel target = $region3
    $region8: #{tpu_custom_call.1} parent=1 // loop_exit
      _
    %4422 = vsyncpa [#allocation3], 1
    %s4423 = scalar_lea.sflag [#allocation3], 1
    %4424 = vsyncpa %s4423, 1
    %4425 = vsyncpa [#allocation6], 1
    %4426 = vsyncpa [#allocation4], 1
    %s4427 = scalar_lea.sflag [#allocation4], 1
    %4428 = vsyncpa %s4427, 1

</llo_original>
